<compile_context>
chip_gen: v6e
topology: v6e:2x2x1
jax: 0.10.0
libtpu: 0.0.40
codegen_flags: <defaults>
</compile_context>

<pallas_src>
import functools

import jax
import jax.numpy as jnp
from jax.experimental import pallas as pl
from jax.experimental.pallas import tpu as pltpu


# ----------------------------- Pallas kernel -------------------------------

def _chatbot_fwd_kernel(
    emb_ref,        # (Bb, S, H)  word+pos+token-type embeddings for this block
    maskb_ref,      # (Bb, 1, S)  additive mask bias: (1-mask) * -10000
    emb_ln_ref,     # (2, H)      [gamma; beta] for embedding LayerNorm
    wqkv_ref,       # (L, H, 3H)  (1/sqrt(d) already folded into the Q columns)
    bqkv_ref,       # (L, 1, 3H)
    wo_ref,         # (L, H, H)
    bo_ref,         # (L, 1, H)
    ln1_ref,        # (L, 2, H)
    w1_ref,         # (L, H, F)
    b1_ref,         # (L, 1, F)
    w2_ref,         # (L, F, H)
    b2_ref,         # (L, 1, H)
    ln2_ref,        # (L, 2, H)
    dec_w1_ref,     # (H, H)
    dec_b1_ref,     # (1, H)
    dec_w2_ref,     # (H, V)
    dec_b2_ref,     # (1, V)
    logits_ref,     # (Bb, S, V)  output
    *, num_layers, num_heads,
):
    Bb, S, H = emb_ref.shape
    V = logits_ref.shape[-1]
    nH = num_heads
    d = H // nH
    R = Bb * S                       # all sequences flattened into matmul rows

    def layernorm(h, gb):
        g = gb[0:1, :]
        b = gb[1:2, :]
        mean = jnp.mean(h, axis=-1, keepdims=True)
        # single-pass variance: mean(x^2) - mean(x)^2  (one lane-reduce fewer)
        var = jnp.mean(h * h, axis=-1, keepdims=True) - mean * mean
        return (h - mean) * jax.lax.rsqrt(var + 1e-12) * g + b

    # Hoist the additive key-mask broadcast once for all layers and heads.
    # Score batches are ordered (b, h) -> flat index b*nH + h.
    mask_bias = jnp.broadcast_to(
        maskb_ref[...].reshape(Bb, 1, 1, S), (Bb, nH, S, S)
    ).reshape(Bb * nH, S, S)

    x = layernorm(emb_ref[...].reshape(R, H), emb_ln_ref[...])        # (R, H)

    def split_heads(mat, base):
        # (R, 3H) column block -> head-major (Bb*nH, S, d); static lane slices
        # stacked along a new leading axis (no mixed minor/major transpose).
        parts = [mat[:, base + h * d: base + (h + 1) * d].reshape(Bb, S, d)
                 for h in range(nH)]
        return jnp.stack(parts, axis=1).reshape(Bb * nH, S, d)

    for l in range(num_layers):
        # --- self-attention: one fused QKV matmul, head-batched einsums ---
        qkv = jnp.dot(x, wqkv_ref[l], preferred_element_type=jnp.float32) + bqkv_ref[l]  # (R, 3H)
        q = split_heads(qkv, 0)
        k = split_heads(qkv, H)
        v = split_heads(qkv, 2 * H)

        # 1/sqrt(d) is folded into the Q columns of wqkv at init time.
        s = jnp.einsum('bqd,bkd->bqk', q, k,
                       preferred_element_type=jnp.float32)            # (Bb*nH, S, S)
        s = s + mask_bias
        # No row-max subtraction: scores are O(1) with 0.02-scale weights and the
        # -10000 mask bias only drives exp() to 0, so no overflow/NaN is possible.
        p = jnp.exp(s)
        p = p * pl.reciprocal(jnp.sum(p, axis=-1, keepdims=True), approx=True)
        ctx = jnp.einsum('bqk,bkd->bqd', p, v,
                         preferred_element_type=jnp.float32)           # (Bb*nH, S, d)

        # merge heads back into lanes; ONE (R,H)@(H,H) output projection.
        ctx4 = ctx.reshape(Bb, nH, S, d)
        ctx_rows = jnp.concatenate([ctx4[:, h] for h in range(nH)],
                                   axis=-1).reshape(R, H)
        attn_out = jnp.dot(ctx_rows, wo_ref[l],
                           preferred_element_type=jnp.float32) + bo_ref[l]
        x = layernorm(x + attn_out, ln1_ref[l])

        # --- feed-forward ---
        ff = jnp.dot(x, w1_ref[l], preferred_element_type=jnp.float32) + b1_ref[l]
        # TODO(synk): HF BERT uses erf-GELU; tanh-approx GELU used here (EUP-friendly).
        ff = 0.5 * ff * (1.0 + jnp.tanh(0.7978845608028654 * (ff + 0.044715 * ff * ff * ff)))
        ff = jnp.dot(ff, w2_ref[l], preferred_element_type=jnp.float32) + b2_ref[l]
        x = layernorm(x + ff, ln2_ref[l])

    # --- decoder head: Linear -> ReLU -> Linear (the nn.Sequential) ---
    h1 = jnp.dot(x, dec_w1_ref[...], preferred_element_type=jnp.float32) + dec_b1_ref[...]
    h1 = jnp.maximum(h1, 0.0)
    logits = jnp.dot(h1, dec_w2_ref[...], preferred_element_type=jnp.float32) + dec_b2_ref[...]
    logits_ref[...] = logits.reshape(Bb, S, V)


# ----------------------------- model definition -----------------------------

CFG = dict(
    vocab_size=128,     # stands in for tokenizer.vocab_size (lane-dense: 128)
    hidden=32,          # transformer.config.hidden_size
    num_heads=4,
    head_dim=8,
    ffn=64,
    num_layers=2,
    max_pos=16,
)


def init_params(key, cfg):
    H, F, V, L = cfg["hidden"], cfg["ffn"], cfg["vocab_size"], cfg["num_layers"]
    d = cfg["head_dim"]

    def nrm(k, shape, scale=0.02):
        return scale * jax.random.normal(k, shape, dtype=jnp.float32)

    keys = jax.random.split(key, 9)
    ln_id = jnp.stack([jnp.ones((H,), jnp.float32), jnp.zeros((H,), jnp.float32)])  # (2, H)

    wqkv = nrm(keys[3], (L, H, 3 * H))
    # fold the attention 1/sqrt(d) score scale into the Q columns (removes a VPU
    # multiply per layer inside the kernel); bqkv is zero so no fold needed there.
    wqkv = wqkv.at[:, :, :H].multiply(1.0 / float(d) ** 0.5)

    p = {
        "word_emb": nrm(keys[0], (V, H)),
        "pos_emb": nrm(keys[1], (cfg["max_pos"], H)),
        "tok_emb": nrm(keys[2], (2, H)),
        "emb_ln": ln_id,
        # per-layer weights stacked along a leading layer axis (static in-kernel loop)
        "wqkv": wqkv,
        "bqkv": jnp.zeros((L, 1, 3 * H), jnp.float32),
        "wo": nrm(keys[4], (L, H, H)),
        "bo": jnp.zeros((L, 1, H), jnp.float32),
        "ln1": jnp.tile(ln_id[None], (L, 1, 1)),
        "w1": nrm(keys[5], (L, H, F)),
        "b1": jnp.zeros((L, 1, F), jnp.float32),
        "w2": nrm(keys[6], (L, F, H)),
        "b2": jnp.zeros((L, 1, H), jnp.float32),
        "ln2": jnp.tile(ln_id[None], (L, 1, 1)),
        # decoder: Linear(H,H) -> ReLU -> Linear(H, vocab)
        "dec_w1": nrm(keys[7], (H, H)),
        "dec_b1": jnp.zeros((1, H), jnp.float32),
        "dec_w2": nrm(keys[8], (H, V)),
        "dec_b2": jnp.zeros((1, V), jnp.float32),
    }
    return p


def transformer_chatbot_forward(params, input_ids, attention_mask, cfg, batch_block=None):
    B, S = input_ids.shape
    H, nH = cfg["hidden"], cfg["num_heads"]
    V, L = cfg["vocab_size"], cfg["num_layers"]

    # One grid step over the whole batch amortizes per-step overhead on the
    # single-TensorCore v5e/v6e; on v7x with larger B set batch_block so the
    # grid (kept "parallel") shards blocks of sequences across both TCs.
    if batch_block is None:
        batch_block = B
    assert B % batch_block == 0

    # --- embedding gather stays in JAX glue (single XLA gather) ---
    word = params["word_emb"][input_ids]                       # (B, S, H)
    pos = params["pos_emb"][:S]                                # (S, H)
    tok = params["tok_emb"][0]                                 # (H,)  token_type_ids = 0
    emb = word + pos[None, :, :] + tok[None, None, :]          # (B, S, H)

    # precompute additive mask bias once (BERT-style, keys only)
    mask_bias = (1.0 - attention_mask.astype(jnp.float32)).reshape(B, 1, S) * (-10000.0)

    kernel = functools.partial(_chatbot_fwd_kernel, num_layers=L, num_heads=nH)

    def wspec(shape):
        zeros = (0,) * len(shape)
        return pl.BlockSpec(shape, lambda b, z=zeros: z)       # full-array, grid-invariant

    emb_spec = pl.BlockSpec((batch_block, S, H), lambda b: (b, 0, 0))
    mask_spec = pl.BlockSpec((batch_block, 1, S), lambda b: (b, 0, 0))
    out_spec = pl.BlockSpec((batch_block, S, V), lambda b: (b, 0, 0))

    logits = pl.pallas_call(
        kernel,
        out_shape=jax.ShapeDtypeStruct((B, S, V), jnp.float32),
        grid=(B // batch_block,),
        in_specs=[
            emb_spec,
            mask_spec,
            wspec(params["emb_ln"].shape),
            wspec(params["wqkv"].shape),
            wspec(params["bqkv"].shape),
            wspec(params["wo"].shape),
            wspec(params["bo"].shape),
            wspec(params["ln1"].shape),
            wspec(params["w1"].shape),
            wspec(params["b1"].shape),
            wspec(params["w2"].shape),
            wspec(params["b2"].shape),
            wspec(params["ln2"].shape),
            wspec(params["dec_w1"].shape),
            wspec(params["dec_b1"].shape),
            wspec(params["dec_w2"].shape),
            wspec(params["dec_b2"].shape),
        ],
        out_specs=out_spec,
        compiler_params=pltpu.CompilerParams(
            dimension_semantics=("parallel",),   # sequence blocks shard across v7x's 2 TCs
        ),
    )(
        emb, mask_bias, params["emb_ln"],
        params["wqkv"], params["bqkv"], params["wo"], params["bo"], params["ln1"],
        params["w1"], params["b1"], params["w2"], params["b2"], params["ln2"],
        params["dec_w1"], params["dec_b1"], params["dec_w2"], params["dec_b2"],
    )
    return logits


# --------------------------- pure-JAX reference ------------------------------

def reference_forward(params, input_ids, attention_mask, cfg):
    """Plain-JAX mirror of the kernel math (same folded scale / tanh-GELU)."""
    H, nH, d = cfg["hidden"], cfg["num_heads"], cfg["head_dim"]
    L = cfg["num_layers"]
    B, S = input_ids.shape
    hi = jax.lax.Precision.HIGHEST

    word = params["word_emb"][input_ids]
    pos = params["pos_emb"][:S]
    tok = params["tok_emb"][0]
    x = word + pos[None, :, :] + tok[None, None, :]
    maskb = (1.0 - attention_mask.astype(jnp.float32))[:, None, None, :] * (-10000.0)

    def ln(h, gb):
        g, b = gb[0], gb[1]
        mean = jnp.mean(h, -1, keepdims=True)
        var = jnp.mean(h * h, -1, keepdims=True) - mean * mean
        return (h - mean) * jax.lax.rsqrt(var + 1e-12) * g + b

    def heads(t):
        return t.reshape(B, S, nH, d).transpose(0, 2, 1, 3)

    x = ln(x, params["emb_ln"])
    for l in range(L):
        qkv = jnp.einsum("bsh,hk->bsk", x, params["wqkv"][l], precision=hi) + params["bqkv"][l]
        q, k, v = (heads(t) for t in jnp.split(qkv, 3, axis=-1))
        s = jnp.einsum("bhqd,bhkd->bhqk", q, k, precision=hi) + maskb
        p = jax.nn.softmax(s, axis=-1)
        ctx = jnp.einsum("bhqk,bhkd->bhqd", p, v, precision=hi)
        ctx = ctx.transpose(0, 2, 1, 3).reshape(B, S, H)
        attn = jnp.einsum("bsh,hk->bsk", ctx, params["wo"][l], precision=hi) + params["bo"][l]
        x = ln(x + attn, params["ln1"][l])
        ff = jnp.einsum("bsh,hf->bsf", x, params["w1"][l], precision=hi) + params["b1"][l]
        ff = 0.5 * ff * (1.0 + jnp.tanh(0.7978845608028654 * (ff + 0.044715 * ff * ff * ff)))
        ff = jnp.einsum("bsf,fh->bsh", ff, params["w2"][l], precision=hi) + params["b2"][l]
        x = ln(x + ff, params["ln2"][l])
    h1 = jnp.maximum(
        jnp.einsum("bsh,hk->bsk", x, params["dec_w1"], precision=hi) + params["dec_b1"], 0.0)
    return jnp.einsum("bsh,hv->bsv", h1, params["dec_w2"], precision=hi) + params["dec_b2"]


# ----------------------------------- main -----------------------------------

if __name__ == "__main__":
    key = jax.random.PRNGKey(0)
    k_par, k_ids = jax.random.split(key)

    params = init_params(k_par, CFG)

    B, S = 2, 8
    input_ids = jax.random.randint(k_ids, (B, S), 0, CFG["vocab_size"], dtype=jnp.int32)
    attention_mask = jnp.array(
        [[1, 1, 1, 1, 1, 1, 1, 1],
         [1, 1, 1, 1, 1, 0, 0, 0]], dtype=jnp.int32)

    fwd = jax.jit(functools.partial(transformer_chatbot_forward, cfg=CFG))
    logits = fwd(params, input_ids, attention_mask)
    jax.block_until_ready(logits)

    assert logits.shape == (B, S, CFG["vocab_size"])
    assert bool(jnp.all(jnp.isfinite(logits)))

    ref = reference_forward(params, input_ids, attention_mask, CFG)
    assert bool(jnp.allclose(logits, ref, atol=1e-2)), float(jnp.max(jnp.abs(logits - ref)))

    # TODO(synk): pretrained bert-base-uncased weights/tokenizer cannot be loaded here;
    # a deterministic synthetic BERT-style encoder is used instead.
    print("KERNEL_OK")
</pallas_src>

<mosaic_0001>
module attributes {stable_mosaic.version = 11 : i64} {
  func.func @_chatbot_fwd_kernel(%arg0: i32, %arg1: memref<2x8x32xf32, #tpu.memory_space<vmem>>, %arg2: memref<2x1x8xf32, #tpu.memory_space<vmem>>, %arg3: memref<2x32xf32, #tpu.memory_space<vmem>>, %arg4: memref<2x32x96xf32, #tpu.memory_space<vmem>>, %arg5: memref<2x1x96xf32, #tpu.memory_space<vmem>>, %arg6: memref<2x32x32xf32, #tpu.memory_space<vmem>>, %arg7: memref<2x1x32xf32, #tpu.memory_space<vmem>>, %arg8: memref<2x2x32xf32, #tpu.memory_space<vmem>>, %arg9: memref<2x32x64xf32, #tpu.memory_space<vmem>>, %arg10: memref<2x1x64xf32, #tpu.memory_space<vmem>>, %arg11: memref<2x64x32xf32, #tpu.memory_space<vmem>>, %arg12: memref<2x1x32xf32, #tpu.memory_space<vmem>>, %arg13: memref<2x2x32xf32, #tpu.memory_space<vmem>>, %arg14: memref<32x32xf32, #tpu.memory_space<vmem>>, %arg15: memref<1x32xf32, #tpu.memory_space<vmem>>, %arg16: memref<32x128xf32, #tpu.memory_space<vmem>>, %arg17: memref<1x128xf32, #tpu.memory_space<vmem>>, %arg18: memref<2x8x128xf32, #tpu.memory_space<vmem>>) attributes {dimension_semantics = [#tpu.dimension_semantics<parallel>], iteration_bounds = array<i64: 1>, scalar_prefetch = 0 : i64, scratch_operands = 0 : i64, tpu.core_type = #tpu.core_type<tc>, window_params = [{transform_indices = @transform_0, window_bounds = array<i64: 2, 8, 32>}, {transform_indices = @transform_1, window_bounds = array<i64: 2, 1, 8>}, {pipeline_mode = #tpu.pipeline_mode<synchronous>, transform_indices = @transform_2, window_bounds = array<i64: 2, 32>}, {pipeline_mode = #tpu.pipeline_mode<synchronous>, transform_indices = @transform_3, window_bounds = array<i64: 2, 32, 96>}, {pipeline_mode = #tpu.pipeline_mode<synchronous>, transform_indices = @transform_4, window_bounds = array<i64: 2, 1, 96>}, {pipeline_mode = #tpu.pipeline_mode<synchronous>, transform_indices = @transform_5, window_bounds = array<i64: 2, 32, 32>}, {pipeline_mode = #tpu.pipeline_mode<synchronous>, transform_indices = @transform_6, window_bounds = array<i64: 2, 1, 32>}, {pipeline_mode = #tpu.pipeline_mode<synchronous>, transform_indices = @transform_7, window_bounds = array<i64: 2, 2, 32>}, {pipeline_mode = #tpu.pipeline_mode<synchronous>, transform_indices = @transform_8, window_bounds = array<i64: 2, 32, 64>}, {pipeline_mode = #tpu.pipeline_mode<synchronous>, transform_indices = @transform_9, window_bounds = array<i64: 2, 1, 64>}, {pipeline_mode = #tpu.pipeline_mode<synchronous>, transform_indices = @transform_10, window_bounds = array<i64: 2, 64, 32>}, {pipeline_mode = #tpu.pipeline_mode<synchronous>, transform_indices = @transform_11, window_bounds = array<i64: 2, 1, 32>}, {pipeline_mode = #tpu.pipeline_mode<synchronous>, transform_indices = @transform_12, window_bounds = array<i64: 2, 2, 32>}, {pipeline_mode = #tpu.pipeline_mode<synchronous>, transform_indices = @transform_13, window_bounds = array<i64: 32, 32>}, {pipeline_mode = #tpu.pipeline_mode<synchronous>, transform_indices = @transform_14, window_bounds = array<i64: 1, 32>}, {pipeline_mode = #tpu.pipeline_mode<synchronous>, transform_indices = @transform_15, window_bounds = array<i64: 32, 128>}, {pipeline_mode = #tpu.pipeline_mode<synchronous>, transform_indices = @transform_16, window_bounds = array<i64: 1, 128>}, {transform_indices = @transform_17, window_bounds = array<i64: 2, 8, 128>}]} {
    %c0 = arith.constant 0 : index
    %c0_0 = arith.constant 0 : index
    %c0_1 = arith.constant 0 : index
    %0 = vector.load %arg2[%c0, %c0_0, %c0_1] : memref<2x1x8xf32, #tpu.memory_space<vmem>>, vector<2x1x8xf32>
    %1 = vector.shape_cast %0 : vector<2x1x8xf32> to vector<2x1x1x8xf32>
    %2 = vector.shape_cast %1 : vector<2x1x1x8xf32> to vector<2x1x1x8xf32>
    %3 = vector.broadcast %2 : vector<2x1x1x8xf32> to vector<2x4x8x8xf32>
    %4 = vector.shape_cast %3 : vector<2x4x8x8xf32> to vector<8x8x8xf32>
    %c0_2 = arith.constant 0 : index
    %c0_3 = arith.constant 0 : index
    %c0_4 = arith.constant 0 : index
    %5 = vector.load %arg1[%c0_2, %c0_3, %c0_4] : memref<2x8x32xf32, #tpu.memory_space<vmem>>, vector<2x8x32xf32>
    %6 = vector.shape_cast %5 : vector<2x8x32xf32> to vector<16x32xf32>
    %c0_5 = arith.constant 0 : index
    %c0_6 = arith.constant 0 : index
    %7 = vector.load %arg3[%c0_5, %c0_6] : memref<2x32xf32, #tpu.memory_space<vmem>>, vector<2x32xf32>
    %8 = vector.extract_strided_slice %7 {offsets = [0, 0], sizes = [1, 32], strides = [1, 1]} : vector<2x32xf32> to vector<1x32xf32>
    %9 = vector.extract_strided_slice %7 {offsets = [1, 0], sizes = [1, 32], strides = [1, 1]} : vector<2x32xf32> to vector<1x32xf32>
    %cst = arith.constant dense<0.000000e+00> : vector<16xf32>
    %10 = vector.multi_reduction <add>, %6, %cst [1] : vector<16x32xf32> to vector<16xf32>
    %11 = vector.shape_cast %10 : vector<16xf32> to vector<16x1xf32>
    %cst_7 = arith.constant 3.200000e+01 : f32
    %12 = vector.broadcast %cst_7 : f32 to vector<16x1xf32>
    %13 = arith.divf %11, %12 : vector<16x1xf32>
    %14 = arith.mulf %6, %6 : vector<16x32xf32>
    %cst_8 = arith.constant dense<0.000000e+00> : vector<16xf32>
    %15 = vector.multi_reduction <add>, %14, %cst_8 [1] : vector<16x32xf32> to vector<16xf32>
    %16 = vector.shape_cast %15 : vector<16xf32> to vector<16x1xf32>
    %cst_9 = arith.constant 3.200000e+01 : f32
    %17 = vector.broadcast %cst_9 : f32 to vector<16x1xf32>
    %18 = arith.divf %16, %17 : vector<16x1xf32>
    %19 = arith.mulf %13, %13 : vector<16x1xf32>
    %20 = arith.subf %18, %19 : vector<16x1xf32>
    %21 = vector.broadcast %13 : vector<16x1xf32> to vector<16x32xf32>
    %22 = arith.subf %6, %21 : vector<16x32xf32>
    %cst_10 = arith.constant 9.99999996E-13 : f32
    %23 = vector.broadcast %cst_10 : f32 to vector<16x1xf32>
    %24 = arith.addf %20, %23 : vector<16x1xf32>
    %25 = math.rsqrt %24 : vector<16x1xf32>
    %26 = vector.broadcast %25 : vector<16x1xf32> to vector<16x32xf32>
    %27 = arith.mulf %22, %26 : vector<16x32xf32>
    %28 = vector.broadcast %8 : vector<1x32xf32> to vector<16x32xf32>
    %29 = arith.mulf %27, %28 : vector<16x32xf32>
    %30 = vector.broadcast %9 : vector<1x32xf32> to vector<16x32xf32>
    %31 = arith.addf %29, %30 : vector<16x32xf32>
    %c0_11 = arith.constant 0 : index
    %c0_12 = arith.constant 0 : index
    %c0_13 = arith.constant 0 : index
    %32 = vector.load %arg4[%c0_11, %c0_12, %c0_13] : memref<2x32x96xf32, #tpu.memory_space<vmem>>, vector<1x32x96xf32>
    %33 = vector.shape_cast %32 : vector<1x32x96xf32> to vector<32x96xf32>
    %cst_14 = arith.constant dense<0.000000e+00> : vector<16x96xf32>
    %34 = tpu.matmul %31, %33, %cst_14 {dimension_numbers = #tpu.dot_dimension_numbers<[1], [0], [0], [1], [0, 0, 1, 1], [], []>} : vector<16x32xf32>, vector<32x96xf32>, vector<16x96xf32> -> vector<16x96xf32>
    %c0_15 = arith.constant 0 : index
    %c0_16 = arith.constant 0 : index
    %c0_17 = arith.constant 0 : index
    %35 = vector.load %arg5[%c0_15, %c0_16, %c0_17] : memref<2x1x96xf32, #tpu.memory_space<vmem>>, vector<1x1x96xf32>
    %36 = vector.shape_cast %35 : vector<1x1x96xf32> to vector<1x96xf32>
    %37 = vector.broadcast %36 : vector<1x96xf32> to vector<16x96xf32>
    %38 = arith.addf %34, %37 : vector<16x96xf32>
    %39 = vector.extract_strided_slice %38 {offsets = [0, 0], sizes = [16, 8], strides = [1, 1]} : vector<16x96xf32> to vector<16x8xf32>
    %40 = vector.shape_cast %39 : vector<16x8xf32> to vector<2x8x8xf32>
    %41 = vector.extract_strided_slice %38 {offsets = [0, 8], sizes = [16, 8], strides = [1, 1]} : vector<16x96xf32> to vector<16x8xf32>
    %42 = vector.shape_cast %41 : vector<16x8xf32> to vector<2x8x8xf32>
    %43 = vector.extract_strided_slice %38 {offsets = [0, 16], sizes = [16, 8], strides = [1, 1]} : vector<16x96xf32> to vector<16x8xf32>
    %44 = vector.shape_cast %43 : vector<16x8xf32> to vector<2x8x8xf32>
    %45 = vector.extract_strided_slice %38 {offsets = [0, 24], sizes = [16, 8], strides = [1, 1]} : vector<16x96xf32> to vector<16x8xf32>
    %46 = vector.shape_cast %45 : vector<16x8xf32> to vector<2x8x8xf32>
    %47 = vector.shape_cast %40 : vector<2x8x8xf32> to vector<2x1x8x8xf32>
    %48 = vector.shape_cast %42 : vector<2x8x8xf32> to vector<2x1x8x8xf32>
    %49 = vector.shape_cast %44 : vector<2x8x8xf32> to vector<2x1x8x8xf32>
    %50 = vector.shape_cast %46 : vector<2x8x8xf32> to vector<2x1x8x8xf32>
    %51 = tpu.concatenate %47, %48, %49, %50 in 1 : vector<2x1x8x8xf32>, vector<2x1x8x8xf32>, vector<2x1x8x8xf32>, vector<2x1x8x8xf32> -> vector<2x4x8x8xf32>
    %52 = vector.shape_cast %51 : vector<2x4x8x8xf32> to vector<8x8x8xf32>
    %53 = vector.extract_strided_slice %38 {offsets = [0, 32], sizes = [16, 8], strides = [1, 1]} : vector<16x96xf32> to vector<16x8xf32>
    %54 = vector.shape_cast %53 : vector<16x8xf32> to vector<2x8x8xf32>
    %55 = vector.extract_strided_slice %38 {offsets = [0, 40], sizes = [16, 8], strides = [1, 1]} : vector<16x96xf32> to vector<16x8xf32>
    %56 = vector.shape_cast %55 : vector<16x8xf32> to vector<2x8x8xf32>
    %57 = vector.extract_strided_slice %38 {offsets = [0, 48], sizes = [16, 8], strides = [1, 1]} : vector<16x96xf32> to vector<16x8xf32>
    %58 = vector.shape_cast %57 : vector<16x8xf32> to vector<2x8x8xf32>
    %59 = vector.extract_strided_slice %38 {offsets = [0, 56], sizes = [16, 8], strides = [1, 1]} : vector<16x96xf32> to vector<16x8xf32>
    %60 = vector.shape_cast %59 : vector<16x8xf32> to vector<2x8x8xf32>
    %61 = vector.shape_cast %54 : vector<2x8x8xf32> to vector<2x1x8x8xf32>
    %62 = vector.shape_cast %56 : vector<2x8x8xf32> to vector<2x1x8x8xf32>
    %63 = vector.shape_cast %58 : vector<2x8x8xf32> to vector<2x1x8x8xf32>
    %64 = vector.shape_cast %60 : vector<2x8x8xf32> to vector<2x1x8x8xf32>
    %65 = tpu.concatenate %61, %62, %63, %64 in 1 : vector<2x1x8x8xf32>, vector<2x1x8x8xf32>, vector<2x1x8x8xf32>, vector<2x1x8x8xf32> -> vector<2x4x8x8xf32>
    %66 = vector.shape_cast %65 : vector<2x4x8x8xf32> to vector<8x8x8xf32>
    %67 = vector.extract_strided_slice %38 {offsets = [0, 64], sizes = [16, 8], strides = [1, 1]} : vector<16x96xf32> to vector<16x8xf32>
    %68 = vector.shape_cast %67 : vector<16x8xf32> to vector<2x8x8xf32>
    %69 = vector.extract_strided_slice %38 {offsets = [0, 72], sizes = [16, 8], strides = [1, 1]} : vector<16x96xf32> to vector<16x8xf32>
    %70 = vector.shape_cast %69 : vector<16x8xf32> to vector<2x8x8xf32>
    %71 = vector.extract_strided_slice %38 {offsets = [0, 80], sizes = [16, 8], strides = [1, 1]} : vector<16x96xf32> to vector<16x8xf32>
    %72 = vector.shape_cast %71 : vector<16x8xf32> to vector<2x8x8xf32>
    %73 = vector.extract_strided_slice %38 {offsets = [0, 88], sizes = [16, 8], strides = [1, 1]} : vector<16x96xf32> to vector<16x8xf32>
    %74 = vector.shape_cast %73 : vector<16x8xf32> to vector<2x8x8xf32>
    %75 = vector.shape_cast %68 : vector<2x8x8xf32> to vector<2x1x8x8xf32>
    %76 = vector.shape_cast %70 : vector<2x8x8xf32> to vector<2x1x8x8xf32>
    %77 = vector.shape_cast %72 : vector<2x8x8xf32> to vector<2x1x8x8xf32>
    %78 = vector.shape_cast %74 : vector<2x8x8xf32> to vector<2x1x8x8xf32>
    %79 = tpu.concatenate %75, %76, %77, %78 in 1 : vector<2x1x8x8xf32>, vector<2x1x8x8xf32>, vector<2x1x8x8xf32>, vector<2x1x8x8xf32> -> vector<2x4x8x8xf32>
    %80 = vector.shape_cast %79 : vector<2x4x8x8xf32> to vector<8x8x8xf32>
    "tpu.trace_start"() <{level = 10 : i32, message = "bqd,bkd->bqk"}> : () -> ()
    %cst_18 = arith.constant dense<0.000000e+00> : vector<8x8x8xf32>
    %81 = tpu.matmul %52, %66, %cst_18 {dimension_numbers = #tpu.dot_dimension_numbers<[2], [2], [1], [1], [0, 0, 0, 1, 1, 1], [0], [0]>} : vector<8x8x8xf32>, vector<8x8x8xf32>, vector<8x8x8xf32> -> vector<8x8x8xf32>
    "tpu.trace_stop"() : () -> ()
    %82 = arith.addf %81, %4 : vector<8x8x8xf32>
    %83 = math.exp %82 : vector<8x8x8xf32>
    %cst_19 = arith.constant dense<0.000000e+00> : vector<8x8xf32>
    %84 = vector.multi_reduction <add>, %83, %cst_19 [2] : vector<8x8x8xf32> to vector<8x8xf32>
    %85 = vector.shape_cast %84 : vector<8x8xf32> to vector<8x8x1xf32>
    %86 = tpu.reciprocal %85 {approx = true} : vector<8x8x1xf32> -> vector<8x8x1xf32>
    %87 = vector.broadcast %86 : vector<8x8x1xf32> to vector<8x8x8xf32>
    %88 = arith.mulf %83, %87 : vector<8x8x8xf32>
    "tpu.trace_start"() <{level = 10 : i32, message = "bqk,bkd->bqd"}> : () -> ()
    %cst_20 = arith.constant dense<0.000000e+00> : vector<8x8x8xf32>
    %89 = tpu.matmul %88, %80, %cst_20 {dimension_numbers = #tpu.dot_dimension_numbers<[2], [1], [1], [2], [0, 0, 0, 1, 1, 2], [0], [0]>} : vector<8x8x8xf32>, vector<8x8x8xf32>, vector<8x8x8xf32> -> vector<8x8x8xf32>
    "tpu.trace_stop"() : () -> ()
    %90 = vector.shape_cast %89 : vector<8x8x8xf32> to vector<2x4x8x8xf32>
    %91 = vector.extract_strided_slice %90 {offsets = [0, 0, 0, 0], sizes = [2, 1, 8, 8], strides = [1, 1, 1, 1]} : vector<2x4x8x8xf32> to vector<2x1x8x8xf32>
    %92 = vector.shape_cast %91 : vector<2x1x8x8xf32> to vector<2x8x8xf32>
    %93 = vector.extract_strided_slice %90 {offsets = [0, 1, 0, 0], sizes = [2, 1, 8, 8], strides = [1, 1, 1, 1]} : vector<2x4x8x8xf32> to vector<2x1x8x8xf32>
    %94 = vector.shape_cast %93 : vector<2x1x8x8xf32> to vector<2x8x8xf32>
    %95 = vector.extract_strided_slice %90 {offsets = [0, 2, 0, 0], sizes = [2, 1, 8, 8], strides = [1, 1, 1, 1]} : vector<2x4x8x8xf32> to vector<2x1x8x8xf32>
    %96 = vector.shape_cast %95 : vector<2x1x8x8xf32> to vector<2x8x8xf32>
    %97 = vector.extract_strided_slice %90 {offsets = [0, 3, 0, 0], sizes = [2, 1, 8, 8], strides = [1, 1, 1, 1]} : vector<2x4x8x8xf32> to vector<2x1x8x8xf32>
    %98 = vector.shape_cast %97 : vector<2x1x8x8xf32> to vector<2x8x8xf32>
    %99 = tpu.concatenate %92, %94, %96, %98 in 2 : vector<2x8x8xf32>, vector<2x8x8xf32>, vector<2x8x8xf32>, vector<2x8x8xf32> -> vector<2x8x32xf32>
    %100 = vector.shape_cast %99 : vector<2x8x32xf32> to vector<16x32xf32>
    %c0_21 = arith.constant 0 : index
    %c0_22 = arith.constant 0 : index
    %c0_23 = arith.constant 0 : index
    %101 = vector.load %arg6[%c0_21, %c0_22, %c0_23] : memref<2x32x32xf32, #tpu.memory_space<vmem>>, vector<1x32x32xf32>
    %102 = vector.shape_cast %101 : vector<1x32x32xf32> to vector<32x32xf32>
    %cst_24 = arith.constant dense<0.000000e+00> : vector<16x32xf32>
    %103 = tpu.matmul %100, %102, %cst_24 {dimension_numbers = #tpu.dot_dimension_numbers<[1], [0], [0], [1], [0, 0, 1, 1], [], []>} : vector<16x32xf32>, vector<32x32xf32>, vector<16x32xf32> -> vector<16x32xf32>
    %c0_25 = arith.constant 0 : index
    %c0_26 = arith.constant 0 : index
    %c0_27 = arith.constant 0 : index
    %104 = vector.load %arg7[%c0_25, %c0_26, %c0_27] : memref<2x1x32xf32, #tpu.memory_space<vmem>>, vector<1x1x32xf32>
    %105 = vector.shape_cast %104 : vector<1x1x32xf32> to vector<1x32xf32>
    %106 = vector.broadcast %105 : vector<1x32xf32> to vector<16x32xf32>
    %107 = arith.addf %103, %106 : vector<16x32xf32>
    %108 = arith.addf %31, %107 : vector<16x32xf32>
    %c0_28 = arith.constant 0 : index
    %c0_29 = arith.constant 0 : index
    %c0_30 = arith.constant 0 : index
    %109 = vector.load %arg8[%c0_28, %c0_29, %c0_30] : memref<2x2x32xf32, #tpu.memory_space<vmem>>, vector<1x2x32xf32>
    %110 = vector.shape_cast %109 : vector<1x2x32xf32> to vector<2x32xf32>
    %111 = vector.extract_strided_slice %110 {offsets = [0, 0], sizes = [1, 32], strides = [1, 1]} : vector<2x32xf32> to vector<1x32xf32>
    %112 = vector.extract_strided_slice %110 {offsets = [1, 0], sizes = [1, 32], strides = [1, 1]} : vector<2x32xf32> to vector<1x32xf32>
    %cst_31 = arith.constant dense<0.000000e+00> : vector<16xf32>
    %113 = vector.multi_reduction <add>, %108, %cst_31 [1] : vector<16x32xf32> to vector<16xf32>
    %114 = vector.shape_cast %113 : vector<16xf32> to vector<16x1xf32>
    %cst_32 = arith.constant 3.200000e+01 : f32
    %115 = vector.broadcast %cst_32 : f32 to vector<16x1xf32>
    %116 = arith.divf %114, %115 : vector<16x1xf32>
    %117 = arith.mulf %108, %108 : vector<16x32xf32>
    %cst_33 = arith.constant dense<0.000000e+00> : vector<16xf32>
    %118 = vector.multi_reduction <add>, %117, %cst_33 [1] : vector<16x32xf32> to vector<16xf32>
    %119 = vector.shape_cast %118 : vector<16xf32> to vector<16x1xf32>
    %cst_34 = arith.constant 3.200000e+01 : f32
    %120 = vector.broadcast %cst_34 : f32 to vector<16x1xf32>
    %121 = arith.divf %119, %120 : vector<16x1xf32>
    %122 = arith.mulf %116, %116 : vector<16x1xf32>
    %123 = arith.subf %121, %122 : vector<16x1xf32>
    %124 = vector.broadcast %116 : vector<16x1xf32> to vector<16x32xf32>
    %125 = arith.subf %108, %124 : vector<16x32xf32>
    %cst_35 = arith.constant 9.99999996E-13 : f32
    %126 = vector.broadcast %cst_35 : f32 to vector<16x1xf32>
    %127 = arith.addf %123, %126 : vector<16x1xf32>
    %128 = math.rsqrt %127 : vector<16x1xf32>
    %129 = vector.broadcast %128 : vector<16x1xf32> to vector<16x32xf32>
    %130 = arith.mulf %125, %129 : vector<16x32xf32>
    %131 = vector.broadcast %111 : vector<1x32xf32> to vector<16x32xf32>
    %132 = arith.mulf %130, %131 : vector<16x32xf32>
    %133 = vector.broadcast %112 : vector<1x32xf32> to vector<16x32xf32>
    %134 = arith.addf %132, %133 : vector<16x32xf32>
    %c0_36 = arith.constant 0 : index
    %c0_37 = arith.constant 0 : index
    %c0_38 = arith.constant 0 : index
    %135 = vector.load %arg9[%c0_36, %c0_37, %c0_38] : memref<2x32x64xf32, #tpu.memory_space<vmem>>, vector<1x32x64xf32>
    %136 = vector.shape_cast %135 : vector<1x32x64xf32> to vector<32x64xf32>
    %cst_39 = arith.constant dense<0.000000e+00> : vector<16x64xf32>
    %137 = tpu.matmul %134, %136, %cst_39 {dimension_numbers = #tpu.dot_dimension_numbers<[1], [0], [0], [1], [0, 0, 1, 1], [], []>} : vector<16x32xf32>, vector<32x64xf32>, vector<16x64xf32> -> vector<16x64xf32>
    %c0_40 = arith.constant 0 : index
    %c0_41 = arith.constant 0 : index
    %c0_42 = arith.constant 0 : index
    %138 = vector.load %arg10[%c0_40, %c0_41, %c0_42] : memref<2x1x64xf32, #tpu.memory_space<vmem>>, vector<1x1x64xf32>
    %139 = vector.shape_cast %138 : vector<1x1x64xf32> to vector<1x64xf32>
    %140 = vector.broadcast %139 : vector<1x64xf32> to vector<16x64xf32>
    %141 = arith.addf %137, %140 : vector<16x64xf32>
    %cst_43 = arith.constant 5.000000e-01 : f32
    %142 = vector.broadcast %cst_43 : f32 to vector<16x64xf32>
    %143 = arith.mulf %142, %141 : vector<16x64xf32>
    %cst_44 = arith.constant 4.471500e-02 : f32
    %144 = vector.broadcast %cst_44 : f32 to vector<16x64xf32>
    %145 = arith.mulf %144, %141 : vector<16x64xf32>
    %146 = arith.mulf %145, %141 : vector<16x64xf32>
    %147 = arith.mulf %146, %141 : vector<16x64xf32>
    %148 = arith.addf %141, %147 : vector<16x64xf32>
    %cst_45 = arith.constant 0.797884583 : f32
    %149 = vector.broadcast %cst_45 : f32 to vector<16x64xf32>
    %150 = arith.mulf %149, %148 : vector<16x64xf32>
    %151 = math.tanh %150 : vector<16x64xf32>
    %cst_46 = arith.constant 1.000000e+00 : f32
    %152 = vector.broadcast %cst_46 : f32 to vector<16x64xf32>
    %153 = arith.addf %152, %151 : vector<16x64xf32>
    %154 = arith.mulf %143, %153 : vector<16x64xf32>
    %c0_47 = arith.constant 0 : index
    %c0_48 = arith.constant 0 : index
    %c0_49 = arith.constant 0 : index
    %155 = vector.load %arg11[%c0_47, %c0_48, %c0_49] : memref<2x64x32xf32, #tpu.memory_space<vmem>>, vector<1x64x32xf32>
    %156 = vector.shape_cast %155 : vector<1x64x32xf32> to vector<64x32xf32>
    %cst_50 = arith.constant dense<0.000000e+00> : vector<16x32xf32>
    %157 = tpu.matmul %154, %156, %cst_50 {dimension_numbers = #tpu.dot_dimension_numbers<[1], [0], [0], [1], [0, 0, 1, 1], [], []>} : vector<16x64xf32>, vector<64x32xf32>, vector<16x32xf32> -> vector<16x32xf32>
    %c0_51 = arith.constant 0 : index
    %c0_52 = arith.constant 0 : index
    %c0_53 = arith.constant 0 : index
    %158 = vector.load %arg12[%c0_51, %c0_52, %c0_53] : memref<2x1x32xf32, #tpu.memory_space<vmem>>, vector<1x1x32xf32>
    %159 = vector.shape_cast %158 : vector<1x1x32xf32> to vector<1x32xf32>
    %160 = vector.broadcast %159 : vector<1x32xf32> to vector<16x32xf32>
    %161 = arith.addf %157, %160 : vector<16x32xf32>
    %162 = arith.addf %134, %161 : vector<16x32xf32>
    %c0_54 = arith.constant 0 : index
    %c0_55 = arith.constant 0 : index
    %c0_56 = arith.constant 0 : index
    %163 = vector.load %arg13[%c0_54, %c0_55, %c0_56] : memref<2x2x32xf32, #tpu.memory_space<vmem>>, vector<1x2x32xf32>
    %164 = vector.shape_cast %163 : vector<1x2x32xf32> to vector<2x32xf32>
    %165 = vector.extract_strided_slice %164 {offsets = [0, 0], sizes = [1, 32], strides = [1, 1]} : vector<2x32xf32> to vector<1x32xf32>
    %166 = vector.extract_strided_slice %164 {offsets = [1, 0], sizes = [1, 32], strides = [1, 1]} : vector<2x32xf32> to vector<1x32xf32>
    %cst_57 = arith.constant dense<0.000000e+00> : vector<16xf32>
    %167 = vector.multi_reduction <add>, %162, %cst_57 [1] : vector<16x32xf32> to vector<16xf32>
    %168 = vector.shape_cast %167 : vector<16xf32> to vector<16x1xf32>
    %cst_58 = arith.constant 3.200000e+01 : f32
    %169 = vector.broadcast %cst_58 : f32 to vector<16x1xf32>
    %170 = arith.divf %168, %169 : vector<16x1xf32>
    %171 = arith.mulf %162, %162 : vector<16x32xf32>
    %cst_59 = arith.constant dense<0.000000e+00> : vector<16xf32>
    %172 = vector.multi_reduction <add>, %171, %cst_59 [1] : vector<16x32xf32> to vector<16xf32>
    %173 = vector.shape_cast %172 : vector<16xf32> to vector<16x1xf32>
    %cst_60 = arith.constant 3.200000e+01 : f32
    %174 = vector.broadcast %cst_60 : f32 to vector<16x1xf32>
    %175 = arith.divf %173, %174 : vector<16x1xf32>
    %176 = arith.mulf %170, %170 : vector<16x1xf32>
    %177 = arith.subf %175, %176 : vector<16x1xf32>
    %178 = vector.broadcast %170 : vector<16x1xf32> to vector<16x32xf32>
    %179 = arith.subf %162, %178 : vector<16x32xf32>
    %cst_61 = arith.constant 9.99999996E-13 : f32
    %180 = vector.broadcast %cst_61 : f32 to vector<16x1xf32>
    %181 = arith.addf %177, %180 : vector<16x1xf32>
    %182 = math.rsqrt %181 : vector<16x1xf32>
    %183 = vector.broadcast %182 : vector<16x1xf32> to vector<16x32xf32>
    %184 = arith.mulf %179, %183 : vector<16x32xf32>
    %185 = vector.broadcast %165 : vector<1x32xf32> to vector<16x32xf32>
    %186 = arith.mulf %184, %185 : vector<16x32xf32>
    %187 = vector.broadcast %166 : vector<1x32xf32> to vector<16x32xf32>
    %188 = arith.addf %186, %187 : vector<16x32xf32>
    %c1 = arith.constant 1 : index
    %c0_62 = arith.constant 0 : index
    %c0_63 = arith.constant 0 : index
    %189 = vector.load %arg4[%c1, %c0_62, %c0_63] : memref<2x32x96xf32, #tpu.memory_space<vmem>>, vector<1x32x96xf32>
    %190 = vector.shape_cast %189 : vector<1x32x96xf32> to vector<32x96xf32>
    %cst_64 = arith.constant dense<0.000000e+00> : vector<16x96xf32>
    %191 = tpu.matmul %188, %190, %cst_64 {dimension_numbers = #tpu.dot_dimension_numbers<[1], [0], [0], [1], [0, 0, 1, 1], [], []>} : vector<16x32xf32>, vector<32x96xf32>, vector<16x96xf32> -> vector<16x96xf32>
    %c1_65 = arith.constant 1 : index
    %c0_66 = arith.constant 0 : index
    %c0_67 = arith.constant 0 : index
    %192 = vector.load %arg5[%c1_65, %c0_66, %c0_67] : memref<2x1x96xf32, #tpu.memory_space<vmem>>, vector<1x1x96xf32>
    %193 = vector.shape_cast %192 : vector<1x1x96xf32> to vector<1x96xf32>
    %194 = vector.broadcast %193 : vector<1x96xf32> to vector<16x96xf32>
    %195 = arith.addf %191, %194 : vector<16x96xf32>
    %196 = vector.extract_strided_slice %195 {offsets = [0, 0], sizes = [16, 8], strides = [1, 1]} : vector<16x96xf32> to vector<16x8xf32>
    %197 = vector.shape_cast %196 : vector<16x8xf32> to vector<2x8x8xf32>
    %198 = vector.extract_strided_slice %195 {offsets = [0, 8], sizes = [16, 8], strides = [1, 1]} : vector<16x96xf32> to vector<16x8xf32>
    %199 = vector.shape_cast %198 : vector<16x8xf32> to vector<2x8x8xf32>
    %200 = vector.extract_strided_slice %195 {offsets = [0, 16], sizes = [16, 8], strides = [1, 1]} : vector<16x96xf32> to vector<16x8xf32>
    %201 = vector.shape_cast %200 : vector<16x8xf32> to vector<2x8x8xf32>
    %202 = vector.extract_strided_slice %195 {offsets = [0, 24], sizes = [16, 8], strides = [1, 1]} : vector<16x96xf32> to vector<16x8xf32>
    %203 = vector.shape_cast %202 : vector<16x8xf32> to vector<2x8x8xf32>
    %204 = vector.shape_cast %197 : vector<2x8x8xf32> to vector<2x1x8x8xf32>
    %205 = vector.shape_cast %199 : vector<2x8x8xf32> to vector<2x1x8x8xf32>
    %206 = vector.shape_cast %201 : vector<2x8x8xf32> to vector<2x1x8x8xf32>
    %207 = vector.shape_cast %203 : vector<2x8x8xf32> to vector<2x1x8x8xf32>
    %208 = tpu.concatenate %204, %205, %206, %207 in 1 : vector<2x1x8x8xf32>, vector<2x1x8x8xf32>, vector<2x1x8x8xf32>, vector<2x1x8x8xf32> -> vector<2x4x8x8xf32>
    %209 = vector.shape_cast %208 : vector<2x4x8x8xf32> to vector<8x8x8xf32>
    %210 = vector.extract_strided_slice %195 {offsets = [0, 32], sizes = [16, 8], strides = [1, 1]} : vector<16x96xf32> to vector<16x8xf32>
    %211 = vector.shape_cast %210 : vector<16x8xf32> to vector<2x8x8xf32>
    %212 = vector.extract_strided_slice %195 {offsets = [0, 40], sizes = [16, 8], strides = [1, 1]} : vector<16x96xf32> to vector<16x8xf32>
    %213 = vector.shape_cast %212 : vector<16x8xf32> to vector<2x8x8xf32>
    %214 = vector.extract_strided_slice %195 {offsets = [0, 48], sizes = [16, 8], strides = [1, 1]} : vector<16x96xf32> to vector<16x8xf32>
    %215 = vector.shape_cast %214 : vector<16x8xf32> to vector<2x8x8xf32>
    %216 = vector.extract_strided_slice %195 {offsets = [0, 56], sizes = [16, 8], strides = [1, 1]} : vector<16x96xf32> to vector<16x8xf32>
    %217 = vector.shape_cast %216 : vector<16x8xf32> to vector<2x8x8xf32>
    %218 = vector.shape_cast %211 : vector<2x8x8xf32> to vector<2x1x8x8xf32>
    %219 = vector.shape_cast %213 : vector<2x8x8xf32> to vector<2x1x8x8xf32>
    %220 = vector.shape_cast %215 : vector<2x8x8xf32> to vector<2x1x8x8xf32>
    %221 = vector.shape_cast %217 : vector<2x8x8xf32> to vector<2x1x8x8xf32>
    %222 = tpu.concatenate %218, %219, %220, %221 in 1 : vector<2x1x8x8xf32>, vector<2x1x8x8xf32>, vector<2x1x8x8xf32>, vector<2x1x8x8xf32> -> vector<2x4x8x8xf32>
    %223 = vector.shape_cast %222 : vector<2x4x8x8xf32> to vector<8x8x8xf32>
    %224 = vector.extract_strided_slice %195 {offsets = [0, 64], sizes = [16, 8], strides = [1, 1]} : vector<16x96xf32> to vector<16x8xf32>
    %225 = vector.shape_cast %224 : vector<16x8xf32> to vector<2x8x8xf32>
    %226 = vector.extract_strided_slice %195 {offsets = [0, 72], sizes = [16, 8], strides = [1, 1]} : vector<16x96xf32> to vector<16x8xf32>
    %227 = vector.shape_cast %226 : vector<16x8xf32> to vector<2x8x8xf32>
    %228 = vector.extract_strided_slice %195 {offsets = [0, 80], sizes = [16, 8], strides = [1, 1]} : vector<16x96xf32> to vector<16x8xf32>
    %229 = vector.shape_cast %228 : vector<16x8xf32> to vector<2x8x8xf32>
    %230 = vector.extract_strided_slice %195 {offsets = [0, 88], sizes = [16, 8], strides = [1, 1]} : vector<16x96xf32> to vector<16x8xf32>
    %231 = vector.shape_cast %230 : vector<16x8xf32> to vector<2x8x8xf32>
    %232 = vector.shape_cast %225 : vector<2x8x8xf32> to vector<2x1x8x8xf32>
    %233 = vector.shape_cast %227 : vector<2x8x8xf32> to vector<2x1x8x8xf32>
    %234 = vector.shape_cast %229 : vector<2x8x8xf32> to vector<2x1x8x8xf32>
    %235 = vector.shape_cast %231 : vector<2x8x8xf32> to vector<2x1x8x8xf32>
    %236 = tpu.concatenate %232, %233, %234, %235 in 1 : vector<2x1x8x8xf32>, vector<2x1x8x8xf32>, vector<2x1x8x8xf32>, vector<2x1x8x8xf32> -> vector<2x4x8x8xf32>
    %237 = vector.shape_cast %236 : vector<2x4x8x8xf32> to vector<8x8x8xf32>
    "tpu.trace_start"() <{level = 10 : i32, message = "bqd,bkd->bqk"}> : () -> ()
    %cst_68 = arith.constant dense<0.000000e+00> : vector<8x8x8xf32>
    %238 = tpu.matmul %209, %223, %cst_68 {dimension_numbers = #tpu.dot_dimension_numbers<[2], [2], [1], [1], [0, 0, 0, 1, 1, 1], [0], [0]>} : vector<8x8x8xf32>, vector<8x8x8xf32>, vector<8x8x8xf32> -> vector<8x8x8xf32>
    "tpu.trace_stop"() : () -> ()
    %239 = arith.addf %238, %4 : vector<8x8x8xf32>
    %240 = math.exp %239 : vector<8x8x8xf32>
    %cst_69 = arith.constant dense<0.000000e+00> : vector<8x8xf32>
    %241 = vector.multi_reduction <add>, %240, %cst_69 [2] : vector<8x8x8xf32> to vector<8x8xf32>
    %242 = vector.shape_cast %241 : vector<8x8xf32> to vector<8x8x1xf32>
    %243 = tpu.reciprocal %242 {approx = true} : vector<8x8x1xf32> -> vector<8x8x1xf32>
    %244 = vector.broadcast %243 : vector<8x8x1xf32> to vector<8x8x8xf32>
    %245 = arith.mulf %240, %244 : vector<8x8x8xf32>
    "tpu.trace_start"() <{level = 10 : i32, message = "bqk,bkd->bqd"}> : () -> ()
    %cst_70 = arith.constant dense<0.000000e+00> : vector<8x8x8xf32>
    %246 = tpu.matmul %245, %237, %cst_70 {dimension_numbers = #tpu.dot_dimension_numbers<[2], [1], [1], [2], [0, 0, 0, 1, 1, 2], [0], [0]>} : vector<8x8x8xf32>, vector<8x8x8xf32>, vector<8x8x8xf32> -> vector<8x8x8xf32>
    "tpu.trace_stop"() : () -> ()
    %247 = vector.shape_cast %246 : vector<8x8x8xf32> to vector<2x4x8x8xf32>
    %248 = vector.extract_strided_slice %247 {offsets = [0, 0, 0, 0], sizes = [2, 1, 8, 8], strides = [1, 1, 1, 1]} : vector<2x4x8x8xf32> to vector<2x1x8x8xf32>
    %249 = vector.shape_cast %248 : vector<2x1x8x8xf32> to vector<2x8x8xf32>
    %250 = vector.extract_strided_slice %247 {offsets = [0, 1, 0, 0], sizes = [2, 1, 8, 8], strides = [1, 1, 1, 1]} : vector<2x4x8x8xf32> to vector<2x1x8x8xf32>
    %251 = vector.shape_cast %250 : vector<2x1x8x8xf32> to vector<2x8x8xf32>
    %252 = vector.extract_strided_slice %247 {offsets = [0, 2, 0, 0], sizes = [2, 1, 8, 8], strides = [1, 1, 1, 1]} : vector<2x4x8x8xf32> to vector<2x1x8x8xf32>
    %253 = vector.shape_cast %252 : vector<2x1x8x8xf32> to vector<2x8x8xf32>
    %254 = vector.extract_strided_slice %247 {offsets = [0, 3, 0, 0], sizes = [2, 1, 8, 8], strides = [1, 1, 1, 1]} : vector<2x4x8x8xf32> to vector<2x1x8x8xf32>
    %255 = vector.shape_cast %254 : vector<2x1x8x8xf32> to vector<2x8x8xf32>
    %256 = tpu.concatenate %249, %251, %253, %255 in 2 : vector<2x8x8xf32>, vector<2x8x8xf32>, vector<2x8x8xf32>, vector<2x8x8xf32> -> vector<2x8x32xf32>
    %257 = vector.shape_cast %256 : vector<2x8x32xf32> to vector<16x32xf32>
    %c1_71 = arith.constant 1 : index
    %c0_72 = arith.constant 0 : index
    %c0_73 = arith.constant 0 : index
    %258 = vector.load %arg6[%c1_71, %c0_72, %c0_73] : memref<2x32x32xf32, #tpu.memory_space<vmem>>, vector<1x32x32xf32>
    %259 = vector.shape_cast %258 : vector<1x32x32xf32> to vector<32x32xf32>
    %cst_74 = arith.constant dense<0.000000e+00> : vector<16x32xf32>
    %260 = tpu.matmul %257, %259, %cst_74 {dimension_numbers = #tpu.dot_dimension_numbers<[1], [0], [0], [1], [0, 0, 1, 1], [], []>} : vector<16x32xf32>, vector<32x32xf32>, vector<16x32xf32> -> vector<16x32xf32>
    %c1_75 = arith.constant 1 : index
    %c0_76 = arith.constant 0 : index
    %c0_77 = arith.constant 0 : index
    %261 = vector.load %arg7[%c1_75, %c0_76, %c0_77] : memref<2x1x32xf32, #tpu.memory_space<vmem>>, vector<1x1x32xf32>
    %262 = vector.shape_cast %261 : vector<1x1x32xf32> to vector<1x32xf32>
    %263 = vector.broadcast %262 : vector<1x32xf32> to vector<16x32xf32>
    %264 = arith.addf %260, %263 : vector<16x32xf32>
    %265 = arith.addf %188, %264 : vector<16x32xf32>
    %c1_78 = arith.constant 1 : index
    %c0_79 = arith.constant 0 : index
    %c0_80 = arith.constant 0 : index
    %266 = vector.load %arg8[%c1_78, %c0_79, %c0_80] : memref<2x2x32xf32, #tpu.memory_space<vmem>>, vector<1x2x32xf32>
    %267 = vector.shape_cast %266 : vector<1x2x32xf32> to vector<2x32xf32>
    %268 = vector.extract_strided_slice %267 {offsets = [0, 0], sizes = [1, 32], strides = [1, 1]} : vector<2x32xf32> to vector<1x32xf32>
    %269 = vector.extract_strided_slice %267 {offsets = [1, 0], sizes = [1, 32], strides = [1, 1]} : vector<2x32xf32> to vector<1x32xf32>
    %cst_81 = arith.constant dense<0.000000e+00> : vector<16xf32>
    %270 = vector.multi_reduction <add>, %265, %cst_81 [1] : vector<16x32xf32> to vector<16xf32>
    %271 = vector.shape_cast %270 : vector<16xf32> to vector<16x1xf32>
    %cst_82 = arith.constant 3.200000e+01 : f32
    %272 = vector.broadcast %cst_82 : f32 to vector<16x1xf32>
    %273 = arith.divf %271, %272 : vector<16x1xf32>
    %274 = arith.mulf %265, %265 : vector<16x32xf32>
    %cst_83 = arith.constant dense<0.000000e+00> : vector<16xf32>
    %275 = vector.multi_reduction <add>, %274, %cst_83 [1] : vector<16x32xf32> to vector<16xf32>
    %276 = vector.shape_cast %275 : vector<16xf32> to vector<16x1xf32>
    %cst_84 = arith.constant 3.200000e+01 : f32
    %277 = vector.broadcast %cst_84 : f32 to vector<16x1xf32>
    %278 = arith.divf %276, %277 : vector<16x1xf32>
    %279 = arith.mulf %273, %273 : vector<16x1xf32>
    %280 = arith.subf %278, %279 : vector<16x1xf32>
    %281 = vector.broadcast %273 : vector<16x1xf32> to vector<16x32xf32>
    %282 = arith.subf %265, %281 : vector<16x32xf32>
    %cst_85 = arith.constant 9.99999996E-13 : f32
    %283 = vector.broadcast %cst_85 : f32 to vector<16x1xf32>
    %284 = arith.addf %280, %283 : vector<16x1xf32>
    %285 = math.rsqrt %284 : vector<16x1xf32>
    %286 = vector.broadcast %285 : vector<16x1xf32> to vector<16x32xf32>
    %287 = arith.mulf %282, %286 : vector<16x32xf32>
    %288 = vector.broadcast %268 : vector<1x32xf32> to vector<16x32xf32>
    %289 = arith.mulf %287, %288 : vector<16x32xf32>
    %290 = vector.broadcast %269 : vector<1x32xf32> to vector<16x32xf32>
    %291 = arith.addf %289, %290 : vector<16x32xf32>
    %c1_86 = arith.constant 1 : index
    %c0_87 = arith.constant 0 : index
    %c0_88 = arith.constant 0 : index
    %292 = vector.load %arg9[%c1_86, %c0_87, %c0_88] : memref<2x32x64xf32, #tpu.memory_space<vmem>>, vector<1x32x64xf32>
    %293 = vector.shape_cast %292 : vector<1x32x64xf32> to vector<32x64xf32>
    %cst_89 = arith.constant dense<0.000000e+00> : vector<16x64xf32>
    %294 = tpu.matmul %291, %293, %cst_89 {dimension_numbers = #tpu.dot_dimension_numbers<[1], [0], [0], [1], [0, 0, 1, 1], [], []>} : vector<16x32xf32>, vector<32x64xf32>, vector<16x64xf32> -> vector<16x64xf32>
    %c1_90 = arith.constant 1 : index
    %c0_91 = arith.constant 0 : index
    %c0_92 = arith.constant 0 : index
    %295 = vector.load %arg10[%c1_90, %c0_91, %c0_92] : memref<2x1x64xf32, #tpu.memory_space<vmem>>, vector<1x1x64xf32>
    %296 = vector.shape_cast %295 : vector<1x1x64xf32> to vector<1x64xf32>
    %297 = vector.broadcast %296 : vector<1x64xf32> to vector<16x64xf32>
    %298 = arith.addf %294, %297 : vector<16x64xf32>
    %cst_93 = arith.constant 5.000000e-01 : f32
    %299 = vector.broadcast %cst_93 : f32 to vector<16x64xf32>
    %300 = arith.mulf %299, %298 : vector<16x64xf32>
    %cst_94 = arith.constant 4.471500e-02 : f32
    %301 = vector.broadcast %cst_94 : f32 to vector<16x64xf32>
    %302 = arith.mulf %301, %298 : vector<16x64xf32>
    %303 = arith.mulf %302, %298 : vector<16x64xf32>
    %304 = arith.mulf %303, %298 : vector<16x64xf32>
    %305 = arith.addf %298, %304 : vector<16x64xf32>
    %cst_95 = arith.constant 0.797884583 : f32
    %306 = vector.broadcast %cst_95 : f32 to vector<16x64xf32>
    %307 = arith.mulf %306, %305 : vector<16x64xf32>
    %308 = math.tanh %307 : vector<16x64xf32>
    %cst_96 = arith.constant 1.000000e+00 : f32
    %309 = vector.broadcast %cst_96 : f32 to vector<16x64xf32>
    %310 = arith.addf %309, %308 : vector<16x64xf32>
    %311 = arith.mulf %300, %310 : vector<16x64xf32>
    %c1_97 = arith.constant 1 : index
    %c0_98 = arith.constant 0 : index
    %c0_99 = arith.constant 0 : index
    %312 = vector.load %arg11[%c1_97, %c0_98, %c0_99] : memref<2x64x32xf32, #tpu.memory_space<vmem>>, vector<1x64x32xf32>
    %313 = vector.shape_cast %312 : vector<1x64x32xf32> to vector<64x32xf32>
    %cst_100 = arith.constant dense<0.000000e+00> : vector<16x32xf32>
    %314 = tpu.matmul %311, %313, %cst_100 {dimension_numbers = #tpu.dot_dimension_numbers<[1], [0], [0], [1], [0, 0, 1, 1], [], []>} : vector<16x64xf32>, vector<64x32xf32>, vector<16x32xf32> -> vector<16x32xf32>
    %c1_101 = arith.constant 1 : index
    %c0_102 = arith.constant 0 : index
    %c0_103 = arith.constant 0 : index
    %315 = vector.load %arg12[%c1_101, %c0_102, %c0_103] : memref<2x1x32xf32, #tpu.memory_space<vmem>>, vector<1x1x32xf32>
    %316 = vector.shape_cast %315 : vector<1x1x32xf32> to vector<1x32xf32>
    %317 = vector.broadcast %316 : vector<1x32xf32> to vector<16x32xf32>
    %318 = arith.addf %314, %317 : vector<16x32xf32>
    %319 = arith.addf %291, %318 : vector<16x32xf32>
    %c1_104 = arith.constant 1 : index
    %c0_105 = arith.constant 0 : index
    %c0_106 = arith.constant 0 : index
    %320 = vector.load %arg13[%c1_104, %c0_105, %c0_106] : memref<2x2x32xf32, #tpu.memory_space<vmem>>, vector<1x2x32xf32>
    %321 = vector.shape_cast %320 : vector<1x2x32xf32> to vector<2x32xf32>
    %322 = vector.extract_strided_slice %321 {offsets = [0, 0], sizes = [1, 32], strides = [1, 1]} : vector<2x32xf32> to vector<1x32xf32>
    %323 = vector.extract_strided_slice %321 {offsets = [1, 0], sizes = [1, 32], strides = [1, 1]} : vector<2x32xf32> to vector<1x32xf32>
    %cst_107 = arith.constant dense<0.000000e+00> : vector<16xf32>
    %324 = vector.multi_reduction <add>, %319, %cst_107 [1] : vector<16x32xf32> to vector<16xf32>
    %325 = vector.shape_cast %324 : vector<16xf32> to vector<16x1xf32>
    %cst_108 = arith.constant 3.200000e+01 : f32
    %326 = vector.broadcast %cst_108 : f32 to vector<16x1xf32>
    %327 = arith.divf %325, %326 : vector<16x1xf32>
    %328 = arith.mulf %319, %319 : vector<16x32xf32>
    %cst_109 = arith.constant dense<0.000000e+00> : vector<16xf32>
    %329 = vector.multi_reduction <add>, %328, %cst_109 [1] : vector<16x32xf32> to vector<16xf32>
    %330 = vector.shape_cast %329 : vector<16xf32> to vector<16x1xf32>
    %cst_110 = arith.constant 3.200000e+01 : f32
    %331 = vector.broadcast %cst_110 : f32 to vector<16x1xf32>
    %332 = arith.divf %330, %331 : vector<16x1xf32>
    %333 = arith.mulf %327, %327 : vector<16x1xf32>
    %334 = arith.subf %332, %333 : vector<16x1xf32>
    %335 = vector.broadcast %327 : vector<16x1xf32> to vector<16x32xf32>
    %336 = arith.subf %319, %335 : vector<16x32xf32>
    %cst_111 = arith.constant 9.99999996E-13 : f32
    %337 = vector.broadcast %cst_111 : f32 to vector<16x1xf32>
    %338 = arith.addf %334, %337 : vector<16x1xf32>
    %339 = math.rsqrt %338 : vector<16x1xf32>
    %340 = vector.broadcast %339 : vector<16x1xf32> to vector<16x32xf32>
    %341 = arith.mulf %336, %340 : vector<16x32xf32>
    %342 = vector.broadcast %322 : vector<1x32xf32> to vector<16x32xf32>
    %343 = arith.mulf %341, %342 : vector<16x32xf32>
    %344 = vector.broadcast %323 : vector<1x32xf32> to vector<16x32xf32>
    %345 = arith.addf %343, %344 : vector<16x32xf32>
    %c0_112 = arith.constant 0 : index
    %c0_113 = arith.constant 0 : index
    %346 = vector.load %arg14[%c0_112, %c0_113] : memref<32x32xf32, #tpu.memory_space<vmem>>, vector<32x32xf32>
    %cst_114 = arith.constant dense<0.000000e+00> : vector<16x32xf32>
    %347 = tpu.matmul %345, %346, %cst_114 {dimension_numbers = #tpu.dot_dimension_numbers<[1], [0], [0], [1], [0, 0, 1, 1], [], []>} : vector<16x32xf32>, vector<32x32xf32>, vector<16x32xf32> -> vector<16x32xf32>
    %c0_115 = arith.constant 0 : index
    %c0_116 = arith.constant 0 : index
    %348 = vector.load %arg15[%c0_115, %c0_116] : memref<1x32xf32, #tpu.memory_space<vmem>>, vector<1x32xf32>
    %349 = vector.broadcast %348 : vector<1x32xf32> to vector<16x32xf32>
    %350 = arith.addf %347, %349 : vector<16x32xf32>
    %cst_117 = arith.constant 0.000000e+00 : f32
    %351 = vector.broadcast %cst_117 : f32 to vector<16x32xf32>
    %352 = arith.maximumf %350, %351 : vector<16x32xf32>
    %c0_118 = arith.constant 0 : index
    %c0_119 = arith.constant 0 : index
    %353 = vector.load %arg16[%c0_118, %c0_119] : memref<32x128xf32, #tpu.memory_space<vmem>>, vector<32x128xf32>
    %cst_120 = arith.constant dense<0.000000e+00> : vector<16x128xf32>
    %354 = tpu.matmul %352, %353, %cst_120 {dimension_numbers = #tpu.dot_dimension_numbers<[1], [0], [0], [1], [0, 0, 1, 1], [], []>} : vector<16x32xf32>, vector<32x128xf32>, vector<16x128xf32> -> vector<16x128xf32>
    %c0_121 = arith.constant 0 : index
    %c0_122 = arith.constant 0 : index
    %355 = vector.load %arg17[%c0_121, %c0_122] : memref<1x128xf32, #tpu.memory_space<vmem>>, vector<1x128xf32>
    %356 = vector.broadcast %355 : vector<1x128xf32> to vector<16x128xf32>
    %357 = arith.addf %354, %356 : vector<16x128xf32>
    %358 = vector.shape_cast %357 : vector<16x128xf32> to vector<2x8x128xf32>
    %c0_123 = arith.constant 0 : index
    %c0_124 = arith.constant 0 : index
    %c0_125 = arith.constant 0 : index
    %359 = vector.load %arg18[%c0_123, %c0_124, %c0_125] : memref<2x8x128xf32, #tpu.memory_space<vmem>>, vector<2x8x128xf32>
    tpu.vector_store %arg18[%c0_123, %c0_124, %c0_125], %358 {strides = array<i32>} : memref<2x8x128xf32, #tpu.memory_space<vmem>>, vector<2x8x128xf32>,
    return
  }
  func.func @transform_0(%arg0: i32) -> (i32, i32, i32) {
    %c0_i32 = arith.constant 0 : i32
    %c0_i32_0 = arith.constant 0 : i32
    %c0_i32_1 = arith.constant 0 : i32
    return %arg0, %c0_i32, %c0_i32_0 : i32, i32, i32
  }
  func.func @transform_1(%arg0: i32) -> (i32, i32, i32) {
    %c0_i32 = arith.constant 0 : i32
    %c0_i32_0 = arith.constant 0 : i32
    %c0_i32_1 = arith.constant 0 : i32
    return %arg0, %c0_i32, %c0_i32_0 : i32, i32, i32
  }
  func.func @transform_2(%arg0: i32) -> (i32, i32) {
    %c0_i32 = arith.constant 0 : i32
    %c0_i32_0 = arith.constant 0 : i32
    %c0_i32_1 = arith.constant 0 : i32
    return %c0_i32, %c0_i32_0 : i32, i32
  }
  func.func @transform_3(%arg0: i32) -> (i32, i32, i32) {
    %c0_i32 = arith.constant 0 : i32
    %c0_i32_0 = arith.constant 0 : i32
    %c0_i32_1 = arith.constant 0 : i32
    %c0_i32_2 = arith.constant 0 : i32
    return %c0_i32, %c0_i32_0, %c0_i32_1 : i32, i32, i32
  }
  func.func @transform_4(%arg0: i32) -> (i32, i32, i32) {
    %c0_i32 = arith.constant 0 : i32
    %c0_i32_0 = arith.constant 0 : i32
    %c0_i32_1 = arith.constant 0 : i32
    %c0_i32_2 = arith.constant 0 : i32
    return %c0_i32, %c0_i32_0, %c0_i32_1 : i32, i32, i32
  }
  func.func @transform_5(%arg0: i32) -> (i32, i32, i32) {
    %c0_i32 = arith.constant 0 : i32
    %c0_i32_0 = arith.constant 0 : i32
    %c0_i32_1 = arith.constant 0 : i32
    %c0_i32_2 = arith.constant 0 : i32
    return %c0_i32, %c0_i32_0, %c0_i32_1 : i32, i32, i32
  }
  func.func @transform_6(%arg0: i32) -> (i32, i32, i32) {
    %c0_i32 = arith.constant 0 : i32
    %c0_i32_0 = arith.constant 0 : i32
    %c0_i32_1 = arith.constant 0 : i32
    %c0_i32_2 = arith.constant 0 : i32
    return %c0_i32, %c0_i32_0, %c0_i32_1 : i32, i32, i32
  }
  func.func @transform_7(%arg0: i32) -> (i32, i32, i32) {
    %c0_i32 = arith.constant 0 : i32
    %c0_i32_0 = arith.constant 0 : i32
    %c0_i32_1 = arith.constant 0 : i32
    %c0_i32_2 = arith.constant 0 : i32
    return %c0_i32, %c0_i32_0, %c0_i32_1 : i32, i32, i32
  }
  func.func @transform_8(%arg0: i32) -> (i32, i32, i32) {
    %c0_i32 = arith.constant 0 : i32
    %c0_i32_0 = arith.constant 0 : i32
    %c0_i32_1 = arith.constant 0 : i32
    %c0_i32_2 = arith.constant 0 : i32
    return %c0_i32, %c0_i32_0, %c0_i32_1 : i32, i32, i32
  }
  func.func @transform_9(%arg0: i32) -> (i32, i32, i32) {
    %c0_i32 = arith.constant 0 : i32
    %c0_i32_0 = arith.constant 0 : i32
    %c0_i32_1 = arith.constant 0 : i32
    %c0_i32_2 = arith.constant 0 : i32
    return %c0_i32, %c0_i32_0, %c0_i32_1 : i32, i32, i32
  }
  func.func @transform_10(%arg0: i32) -> (i32, i32, i32) {
    %c0_i32 = arith.constant 0 : i32
    %c0_i32_0 = arith.constant 0 : i32
    %c0_i32_1 = arith.constant 0 : i32
    %c0_i32_2 = arith.constant 0 : i32
    return %c0_i32, %c0_i32_0, %c0_i32_1 : i32, i32, i32
  }
  func.func @transform_11(%arg0: i32) -> (i32, i32, i32) {
    %c0_i32 = arith.constant 0 : i32
    %c0_i32_0 = arith.constant 0 : i32
    %c0_i32_1 = arith.constant 0 : i32
    %c0_i32_2 = arith.constant 0 : i32
    return %c0_i32, %c0_i32_0, %c0_i32_1 : i32, i32, i32
  }
  func.func @transform_12(%arg0: i32) -> (i32, i32, i32) {
    %c0_i32 = arith.constant 0 : i32
    %c0_i32_0 = arith.constant 0 : i32
    %c0_i32_1 = arith.constant 0 : i32
    %c0_i32_2 = arith.constant 0 : i32
    return %c0_i32, %c0_i32_0, %c0_i32_1 : i32, i32, i32
  }
  func.func @transform_13(%arg0: i32) -> (i32, i32) {
    %c0_i32 = arith.constant 0 : i32
    %c0_i32_0 = arith.constant 0 : i32
    %c0_i32_1 = arith.constant 0 : i32
    return %c0_i32, %c0_i32_0 : i32, i32
  }
  func.func @transform_14(%arg0: i32) -> (i32, i32) {
    %c0_i32 = arith.constant 0 : i32
    %c0_i32_0 = arith.constant 0 : i32
    %c0_i32_1 = arith.constant 0 : i32
    return %c0_i32, %c0_i32_0 : i32, i32
  }
  func.func @transform_15(%arg0: i32) -> (i32, i32) {
    %c0_i32 = arith.constant 0 : i32
    %c0_i32_0 = arith.constant 0 : i32
    %c0_i32_1 = arith.constant 0 : i32
    return %c0_i32, %c0_i32_0 : i32, i32
  }
  func.func @transform_16(%arg0: i32) -> (i32, i32) {
    %c0_i32 = arith.constant 0 : i32
    %c0_i32_0 = arith.constant 0 : i32
    %c0_i32_1 = arith.constant 0 : i32
    return %c0_i32, %c0_i32_0 : i32, i32
  }
  func.func @transform_17(%arg0: i32) -> (i32, i32, i32) {
    %c0_i32 = arith.constant 0 : i32
    %c0_i32_0 = arith.constant 0 : i32
    %c0_i32_1 = arith.constant 0 : i32
    return %arg0, %c0_i32, %c0_i32_0 : i32, i32, i32
  }
}

</mosaic_0001>

<llo_original>
// kernel: transformer_chatbot_forward.1
$region0: #{transformer_chatbot_forward.1}
  #allocation0 [shape = 'u32[]', space=smem, size = 0x4, offset = 0x4, fixed_abs, tag = 'smem constant byte address 0x4 - core index']
  #allocation1 [shape = 'u32[144,128]{1,0:T(1,128)}', space=vmem, size = 0x12000, scoped, tag = 'internal scratch']
  %s0 = inlined_call_operand.vmem [shape: f32[2,8,32], index: 0, kind: input, shape index: {}]
  %s1 = inlined_call_operand.vmem [shape: f32[2,1,8], index: 1, kind: input, shape index: {}]
  %s2 = inlined_call_operand.vmem [shape: f32[2,32], index: 2, kind: input, shape index: {}]
  %s3 = inlined_call_operand.vmem [shape: f32[2,32,96], index: 3, kind: input, shape index: {}]
  %s4 = inlined_call_operand.vmem [shape: f32[2,1,96], index: 4, kind: input, shape index: {}]
  %s5 = inlined_call_operand.vmem [shape: f32[2,32,32], index: 5, kind: input, shape index: {}]
  %s6 = inlined_call_operand.vmem [shape: f32[2,1,32], index: 6, kind: input, shape index: {}]
  %s7 = inlined_call_operand.vmem [shape: f32[2,2,32], index: 7, kind: input, shape index: {}]
  %s8 = inlined_call_operand.vmem [shape: f32[2,32,64], index: 8, kind: input, shape index: {}]
  %s9 = inlined_call_operand.vmem [shape: f32[2,1,64], index: 9, kind: input, shape index: {}]
  %s10 = inlined_call_operand.vmem [shape: f32[2,64,32], index: 10, kind: input, shape index: {}]
  %s11 = inlined_call_operand.vmem [shape: f32[2,1,32], index: 11, kind: input, shape index: {}]
  %s12 = inlined_call_operand.vmem [shape: f32[2,2,32], index: 12, kind: input, shape index: {}]
  %s13 = inlined_call_operand.vmem [shape: f32[32,32], index: 13, kind: input, shape index: {}]
  %s14 = inlined_call_operand.vmem [shape: f32[1,32], index: 14, kind: input, shape index: {}]
  %s15 = inlined_call_operand.vmem [shape: f32[32,128], index: 15, kind: input, shape index: {}]
  %s16 = inlined_call_operand.vmem [shape: f32[1,128], index: 16, kind: input, shape index: {}]
  %s17 = inlined_call_operand.hbm [shape: f32[2,8,128], index: 17, kind: output, shape index: {}]
  %s18 = sld [smem:[#allocation0]]
  $region78: #{transformer_chatbot_forward.1} parent=0
    _
  %s20 = ssub.s32 1, %s18
  %s21 = scalar_select 0, %s20, %s18
  $region1: #{transformer_chatbot_forward.1} parent=0
    #allocation2 [shape = 'u8[8192]{0}', space=vmem, size = 0x2000, scoped, tag = 'output window, operand 0, single buffered']
    #allocation3 [shape = 's32[1]{0}', space=sflag, size = 0x4, scoped, tag = 'scoped memory for transformer_chatbot_forward.1']
    %22 = vsyncpa [#allocation3], 0
    // Predicated region
    $region2: #{transformer_chatbot_forward.1} parent=1 // pred_check
      _
    $region3: #{transformer_chatbot_forward.1} parent=1 // pred_check_branch
      %24 = sbr.rel (0) target = $region5
    $region4: #{transformer_chatbot_forward.1} parent=1 // pred_region
      _
    $region5: #{transformer_chatbot_forward.1} parent=1 // pred_fallthru
      _
    // Predicated region
    $region6: #{transformer_chatbot_forward.1} parent=1 // pred_check
      _
    $region7: #{transformer_chatbot_forward.1} parent=1 // pred_check_branch
      %26 = sbr.rel (0) target = $region9
    $region8: #{transformer_chatbot_forward.1} parent=1 // pred_region
      _
    $region9: #{transformer_chatbot_forward.1} parent=1 // pred_fallthru
      _
    // Predicated region
    $region10: #{transformer_chatbot_forward.1} parent=1 // pred_check
      _
    $region11: #{transformer_chatbot_forward.1} parent=1 // pred_check_branch
      %28 = sbr.rel (0) target = $region13
    $region12: #{transformer_chatbot_forward.1} parent=1 // pred_region
      _
    $region13: #{transformer_chatbot_forward.1} parent=1 // pred_fallthru
      _
    // Predicated region
    $region14: #{transformer_chatbot_forward.1} parent=1 // pred_check
      _
    $region15: #{transformer_chatbot_forward.1} parent=1 // pred_check_branch
      %30 = sbr.rel (0) target = $region17
    $region16: #{transformer_chatbot_forward.1} parent=1 // pred_region
      _
    $region17: #{transformer_chatbot_forward.1} parent=1 // pred_fallthru
      _
    // Predicated region
    $region18: #{transformer_chatbot_forward.1} parent=1 // pred_check
      _
    $region19: #{transformer_chatbot_forward.1} parent=1 // pred_check_branch
      %32 = sbr.rel (0) target = $region21
    $region20: #{transformer_chatbot_forward.1} parent=1 // pred_region
      _
    $region21: #{transformer_chatbot_forward.1} parent=1 // pred_fallthru
      _
    // Predicated region
    $region22: #{transformer_chatbot_forward.1} parent=1 // pred_check
      _
    $region23: #{transformer_chatbot_forward.1} parent=1 // pred_check_branch
      %34 = sbr.rel (0) target = $region25
    $region24: #{transformer_chatbot_forward.1} parent=1 // pred_region
      _
    $region25: #{transformer_chatbot_forward.1} parent=1 // pred_fallthru
      _
    // Predicated region
    $region26: #{transformer_chatbot_forward.1} parent=1 // pred_check
      _
    $region27: #{transformer_chatbot_forward.1} parent=1 // pred_check_branch
      %36 = sbr.rel (0) target = $region29
    $region28: #{transformer_chatbot_forward.1} parent=1 // pred_region
      _
    $region29: #{transformer_chatbot_forward.1} parent=1 // pred_fallthru
      _
    // Predicated region
    $region30: #{transformer_chatbot_forward.1} parent=1 // pred_check
      _
    $region31: #{transformer_chatbot_forward.1} parent=1 // pred_check_branch
      %38 = sbr.rel (0) target = $region33
    $region32: #{transformer_chatbot_forward.1} parent=1 // pred_region
      _
    $region33: #{transformer_chatbot_forward.1} parent=1 // pred_fallthru
      _
    // Predicated region
    $region34: #{transformer_chatbot_forward.1} parent=1 // pred_check
      _
    $region35: #{transformer_chatbot_forward.1} parent=1 // pred_check_branch
      %40 = sbr.rel (0) target = $region37
    $region36: #{transformer_chatbot_forward.1} parent=1 // pred_region
      _
    $region37: #{transformer_chatbot_forward.1} parent=1 // pred_fallthru
      _
    // Predicated region
    $region38: #{transformer_chatbot_forward.1} parent=1 // pred_check
      _
    $region39: #{transformer_chatbot_forward.1} parent=1 // pred_check_branch
      %42 = sbr.rel (0) target = $region41
    $region40: #{transformer_chatbot_forward.1} parent=1 // pred_region
      _
    $region41: #{transformer_chatbot_forward.1} parent=1 // pred_fallthru
      _
    // Predicated region
    $region42: #{transformer_chatbot_forward.1} parent=1 // pred_check
      _
    $region43: #{transformer_chatbot_forward.1} parent=1 // pred_check_branch
      %44 = sbr.rel (0) target = $region45
    $region44: #{transformer_chatbot_forward.1} parent=1 // pred_region
      _
    $region45: #{transformer_chatbot_forward.1} parent=1 // pred_fallthru
      _
    // Predicated region
    $region46: #{transformer_chatbot_forward.1} parent=1 // pred_check
      _
    $region47: #{transformer_chatbot_forward.1} parent=1 // pred_check_branch
      %46 = sbr.rel (0) target = $region49
    $region48: #{transformer_chatbot_forward.1} parent=1 // pred_region
      _
    $region49: #{transformer_chatbot_forward.1} parent=1 // pred_fallthru
      _
    // Predicated region
    $region50: #{transformer_chatbot_forward.1} parent=1 // pred_check
      _
    $region51: #{transformer_chatbot_forward.1} parent=1 // pred_check_branch
      %48 = sbr.rel (0) target = $region53
    $region52: #{transformer_chatbot_forward.1} parent=1 // pred_region
      _
    $region53: #{transformer_chatbot_forward.1} parent=1 // pred_fallthru
      _
    // Predicated region
    $region54: #{transformer_chatbot_forward.1} parent=1 // pred_check
      _
    $region55: #{transformer_chatbot_forward.1} parent=1 // pred_check_branch
      %50 = sbr.rel (0) target = $region57
    $region56: #{transformer_chatbot_forward.1} parent=1 // pred_region
      _
    $region57: #{transformer_chatbot_forward.1} parent=1 // pred_fallthru
      _
    // Predicated region
    $region58: #{transformer_chatbot_forward.1} parent=1 // pred_check
      _
    $region59: #{transformer_chatbot_forward.1} parent=1 // pred_check_branch
      %52 = sbr.rel (0) target = $region61
    $region60: #{transformer_chatbot_forward.1} parent=1 // pred_region
      _
    $region61: #{transformer_chatbot_forward.1} parent=1 // pred_fallthru
      _
    // Predicated region
    $region62: #{transformer_chatbot_forward.1} parent=1 // pred_check
      _
    $region63: #{transformer_chatbot_forward.1} parent=1 // pred_check_branch
      %54 = sbr.rel (0) target = $region65
    $region64: #{transformer_chatbot_forward.1} parent=1 // pred_region
      _
    $region65: #{transformer_chatbot_forward.1} parent=1 // pred_fallthru
      _
    // Predicated region
    $region66: #{transformer_chatbot_forward.1} parent=1 // pred_check
      _
    $region67: #{transformer_chatbot_forward.1} parent=1 // pred_check_branch
      %56 = sbr.rel (0) target = $region69
    $region68: #{transformer_chatbot_forward.1} parent=1 // pred_region
      _
    $region69: #{transformer_chatbot_forward.1} parent=1 // pred_fallthru
      _
    %v57 = vld [vmem:[%s1] sm:$0x1]
    %v58 = vld [vmem:[%s1 + $0x1] sm:$0x1]
    %v61 = vlaneseq
    %v62 = vshrl.u32 %v61, 7
    %v63 = vsub.s32 0, %v62
    %v64 = vrot.slane %v57, %v63
    %v65 = vlaneseq
    %v66 = vshrl.u32 %v65, 7
    %v67 = vsub.s32 0, %v66
    %v68 = vrot.slane %v58, %v67
    %v71 = vld [vmem:[%s0] sm:$0xff]
    %v72 = vld [vmem:[%s0 + $0x8] sm:$0xff]
    %v73 = vld [vmem:[%s2] sm:$0x3]
    %vm74 = vcmask 261120
    %v75 = vsel %vm74, %v71, 0.0
    %76 = vadd.xlane.f32.xlu0 %v75
    %v77 = vpop.xlane.xlu0 %76
    %v78 = vsel %vm74, %v72, 0.0
    %79 = vadd.xlane.f32.xlu0 %v78
    %v80 = vpop.xlane.xlu0 %79
    %v81 = vrcp.pop 32.0
    %v82 = vmul.f32 %v77, %v81
    %v83 = vmul.f32 %v80, %v81
    %v84 = vmul.f32 %v71, %v71
    %v85 = vmul.f32 %v72, %v72
    %v86 = vsel %vm74, %v84, 0.0
    %87 = vadd.xlane.f32.xlu0 %v86
    %v88 = vpop.xlane.xlu0 %87
    %v89 = vsel %vm74, %v85, 0.0
    %90 = vadd.xlane.f32.xlu0 %v89
    %v91 = vpop.xlane.xlu0 %90
    %v92 = vmul.f32 %v88, %v81
    %v93 = vmul.f32 %v91, %v81
    %v94 = vmul.f32 %v82, %v82
    %v95 = vmul.f32 %v83, %v83
    %v96 = vsub.f32 %v92, %v94
    %v97 = vsub.f32 %v93, %v95
    %v98 = vsub.f32 %v71, %v82
    %v99 = vsub.f32 %v72, %v83
    %v100 = vadd.f32 %v96, 1e-12
    %v101 = vadd.f32 %v97, 1e-12
    %v102 = vrsqrt.pop %v100
    %v103 = vrsqrt.pop %v101
    %v104 = vmul.f32 %v98, %v102
    %v105 = vmul.f32 %v99, %v103
    %v106 = vlaneseq
    %v107 = vshrl.u32 %v106, 7
    %v108 = vsub.s32 0, %v107
    %v109 = vrot.slane %v73, %v108
    %v110 = vmul.f32 %v104, %v109
    %v111 = vmul.f32 %v105, %v109
    %v112 = vlaneseq
    %v113 = vshrl.u32 %v112, 7
    %v114 = vsub.s32 1, %v113
    %v115 = vrot.slane %v73, %v114
    %v116 = vadd.f32 %v110, %v115
    %v117 = vadd.f32 %v111, %v115
    %v118 = vld [vmem:[%s3] sm:$0xff]
    %v119 = vld [vmem:[%s3 + $0x8] sm:$0xff]
    %v120 = vld [vmem:[%s3 + $0x10] sm:$0xff]
    %v121 = vld [vmem:[%s3 + $0x18] sm:$0xff]
    %v122 = vld [vmem:[%s4] sm:$0x1]
    %v124 = vlaneseq
    %v125 = vshrl.u32 %v124, 7
    %v126 = vsub.s32 0, %v125
    %v127 = vrot.slane %v122, %v126
    %v130 = vsel %vm74, %v116, 0
    %v133 = vsel %vm74, %v117, 0
    %135 = vmatprep.subr.mxu0 0.0
    %136 = vmatpush1.msra.mxu0 0.0
    %137 = vmatprep.subr.mxu0 0.0
    %138 = vmatpush1.msra.mxu0 0.0
    %139 = vmatprep.subr.mxu0 0.0
    %140 = vmatpush1.msra.mxu0 0.0
    %141 = vmatprep.subr.mxu0 0.0
    %142 = vmatpush1.msra.mxu0 0.0
    %143 = vmatprep.subr.mxu0 0.0
    %144 = vmatpush1.msra.mxu0 0.0
    %145 = vmatprep.subr.mxu0 0.0
    %146 = vmatpush1.msra.mxu0 0.0
    %147 = vmatprep.subr.mxu0 0.0
    %148 = vmatpush1.msra.mxu0 0.0
    %149 = vmatprep.subr.mxu0 0.0
    %150 = vmatpush1.msra.mxu0 0.0
    %151 = vmatprep.subr.mxu0 0.0
    %152 = vmatpush1.msra.mxu0 0.0
    %153 = vmatprep.subr.mxu0 0.0
    %154 = vmatpush1.msra.mxu0 0.0
    %155 = vmatprep.subr.mxu0 0.0
    %156 = vmatpush1.msra.mxu0 0.0
    %157 = vmatprep.subr.mxu0 0.0
    %158 = vmatpush1.msra.mxu0 0.0
    %159 = vmatprep.subr.mxu0 0.0
    %160 = vmatpush1.msra.mxu0 %v121
    %161 = vmatprep.subr.mxu0 0.0
    %162 = vmatpush1.msra.mxu0 %v120
    %163 = vmatprep.subr.mxu0 0.0
    %164 = vmatpush1.msra.mxu0 %v119
    %165 = vmatprep.subr.mxu0 0.0
    %166 = vmatpush1.msra.mxu0 %v118
    %167 = vmatprep.subr.mxu0 0.0
    %168 = vmatpush2.msra.mxu0 0.0
    %169 = vmatprep.subr.mxu0 0.0
    %170 = vmatpush2.msra.mxu0 0.0
    %171 = vmatprep.subr.mxu0 0.0
    %172 = vmatpush2.msra.mxu0 0.0
    %173 = vmatprep.subr.mxu0 0.0
    %174 = vmatpush2.msra.mxu0 0.0
    %175 = vmatprep.subr.mxu0 0.0
    %176 = vmatpush2.msra.mxu0 0.0
    %177 = vmatprep.subr.mxu0 0.0
    %178 = vmatpush2.msra.mxu0 0.0
    %179 = vmatprep.subr.mxu0 0.0
    %180 = vmatpush2.msra.mxu0 0.0
    %181 = vmatprep.subr.mxu0 0.0
    %182 = vmatpush2.msra.mxu0 0.0
    %183 = vmatprep.subr.mxu0 0.0
    %184 = vmatpush2.msra.mxu0 0.0
    %185 = vmatprep.subr.mxu0 0.0
    %186 = vmatpush2.msra.mxu0 0.0
    %187 = vmatprep.subr.mxu0 0.0
    %188 = vmatpush2.msra.mxu0 0.0
    %189 = vmatprep.subr.mxu0 0.0
    %190 = vmatpush2.msra.mxu0 0.0
    %191 = vmatprep.subr.mxu0 0.0
    %192 = vmatpush2.msra.mxu0 0.0
    %193 = vmatprep.subr.mxu0 0.0
    %194 = vmatpush2.msra.mxu0 0.0
    %195 = vmatprep.subr.mxu0 0.0
    %196 = vmatpush2.msra.mxu0 0.0
    %197 = vmatprep.subr.mxu0 0.0
    %198 = vmatpush2.msra.mxu0 0.0
    %199 = vmatprep.mubr.f32.mxu0 0.0
    %200 = vmatmul.mubr.f32.gmra.mxu0 %v130
    %v201 = vpop.f32.mrf.mxu0
    %v202 = vadd.f32 %v127, %v201
    %v203 = vpop.f32.mrf.mxu0
    %204 = vmatprep.mubr.f32.mxu0 0.0
    %205 = vmatmul.mubr.f32.gmra.mxu0 %v133
    %v206 = vpop.f32.mrf.mxu0
    %v207 = vadd.f32 %v127, %v206
    %v208 = vpop.f32.mrf.mxu0
    %209 = vdwg.mxu0
    %212 = vrot.lane.b32.xlu0 %v202, 120
    %v213 = vpop.permute.xlu0 %212
    %214 = vrot.lane.b32.xlu0 %v207, 120
    %v215 = vpop.permute.xlu0 %214
    %216 = vrot.lane.b32.xlu0 %v202, 112
    %v217 = vpop.permute.xlu0 %216
    %218 = vrot.lane.b32.xlu0 %v207, 112
    %v219 = vpop.permute.xlu0 %218
    %220 = vrot.lane.b32.xlu0 %v202, 104
    %v221 = vpop.permute.xlu0 %220
    %222 = vrot.lane.b32.xlu0 %v207, 104
    %v223 = vpop.permute.xlu0 %222
    %224 = vrot.lane.b32.xlu0 %v202, 96
    %v225 = vpop.permute.xlu0 %224
    %vm226 = vcmask 64512
    %v227 = vsel %vm226, %v202, 0
    %v229 = vsel %vm226, %v225, 0
    %231 = vmatprep.subr.mxu0 0.0
    %232 = vmatpush1.xpose.msra.mxu0 0.0
    %233 = vmatprep.subr.mxu0 0.0
    %234 = vmatpush1.xpose.msra.mxu0 0.0
    %235 = vmatprep.subr.mxu0 0.0
    %236 = vmatpush1.xpose.msra.mxu0 0.0
    %237 = vmatprep.subr.mxu0 0.0
    %238 = vmatpush1.xpose.msra.mxu0 0.0
    %239 = vmatprep.subr.mxu0 0.0
    %240 = vmatpush1.xpose.msra.mxu0 0.0
    %241 = vmatprep.subr.mxu0 0.0
    %242 = vmatpush1.xpose.msra.mxu0 0.0
    %243 = vmatprep.subr.mxu0 0.0
    %244 = vmatpush1.xpose.msra.mxu0 0.0
    %245 = vmatprep.subr.mxu0 0.0
    %246 = vmatpush1.xpose.msra.mxu0 0.0
    %247 = vmatprep.subr.mxu0 0.0
    %248 = vmatpush1.xpose.msra.mxu0 0.0
    %249 = vmatprep.subr.mxu0 0.0
    %250 = vmatpush1.xpose.msra.mxu0 0.0
    %251 = vmatprep.subr.mxu0 0.0
    %252 = vmatpush1.xpose.msra.mxu0 0.0
    %253 = vmatprep.subr.mxu0 0.0
    %254 = vmatpush1.xpose.msra.mxu0 0.0
    %255 = vmatprep.subr.mxu0 0.0
    %256 = vmatpush1.xpose.msra.mxu0 0.0
    %257 = vmatprep.subr.mxu0 0.0
    %258 = vmatpush1.xpose.msra.mxu0 0.0
    %259 = vmatprep.subr.mxu0 0.0
    %260 = vmatpush1.xpose.msra.mxu0 0.0
    %261 = vmatprep.subr.mxu0 0.0
    %262 = vmatpush1.xpose.msra.mxu0 %v229
    %263 = vmatprep.subr.mxu0 0.0
    %264 = vmatpush2.xpose.msra.mxu0 0.0
    %265 = vmatprep.subr.mxu0 0.0
    %266 = vmatpush2.xpose.msra.mxu0 0.0
    %267 = vmatprep.subr.mxu0 0.0
    %268 = vmatpush2.xpose.msra.mxu0 0.0
    %269 = vmatprep.subr.mxu0 0.0
    %270 = vmatpush2.xpose.msra.mxu0 0.0
    %271 = vmatprep.subr.mxu0 0.0
    %272 = vmatpush2.xpose.msra.mxu0 0.0
    %273 = vmatprep.subr.mxu0 0.0
    %274 = vmatpush2.xpose.msra.mxu0 0.0
    %275 = vmatprep.subr.mxu0 0.0
    %276 = vmatpush2.xpose.msra.mxu0 0.0
    %277 = vmatprep.subr.mxu0 0.0
    %278 = vmatpush2.xpose.msra.mxu0 0.0
    %279 = vmatprep.subr.mxu0 0.0
    %280 = vmatpush2.xpose.msra.mxu0 0.0
    %281 = vmatprep.subr.mxu0 0.0
    %282 = vmatpush2.xpose.msra.mxu0 0.0
    %283 = vmatprep.subr.mxu0 0.0
    %284 = vmatpush2.xpose.msra.mxu0 0.0
    %285 = vmatprep.subr.mxu0 0.0
    %286 = vmatpush2.xpose.msra.mxu0 0.0
    %287 = vmatprep.subr.mxu0 0.0
    %288 = vmatpush2.xpose.msra.mxu0 0.0
    %289 = vmatprep.subr.mxu0 0.0
    %290 = vmatpush2.xpose.msra.mxu0 0.0
    %291 = vmatprep.subr.mxu0 0.0
    %292 = vmatpush2.xpose.msra.mxu0 0.0
    %293 = vmatprep.subr.mxu0 0.0
    %294 = vmatpush2.xpose.msra.mxu0 0.0
    %295 = vmatprep.mubr.f32.mxu0 0.0
    %296 = vmatmul.mubr.f32.gmra.mxu0 %v227
    %v297 = vpop.f32.mrf.mxu0
    %v298 = vadd.f32 %v64, %v297
    %v299 = vpop.f32.mrf.mxu0
    %300 = vdwg.mxu0
    %301 = vrot.lane.b32.xlu0 %v213, 96
    %v302 = vpop.permute.xlu0 %301
    %v303 = vsel %vm226, %v213, 0
    %v305 = vsel %vm226, %v302, 0
    %307 = vmatprep.subr.mxu0 0.0
    %308 = vmatpush1.xpose.msra.mxu0 0.0
    %309 = vmatprep.subr.mxu0 0.0
    %310 = vmatpush1.xpose.msra.mxu0 0.0
    %311 = vmatprep.subr.mxu0 0.0
    %312 = vmatpush1.xpose.msra.mxu0 0.0
    %313 = vmatprep.subr.mxu0 0.0
    %314 = vmatpush1.xpose.msra.mxu0 0.0
    %315 = vmatprep.subr.mxu0 0.0
    %316 = vmatpush1.xpose.msra.mxu0 0.0
    %317 = vmatprep.subr.mxu0 0.0
    %318 = vmatpush1.xpose.msra.mxu0 0.0
    %319 = vmatprep.subr.mxu0 0.0
    %320 = vmatpush1.xpose.msra.mxu0 0.0
    %321 = vmatprep.subr.mxu0 0.0
    %322 = vmatpush1.xpose.msra.mxu0 0.0
    %323 = vmatprep.subr.mxu0 0.0
    %324 = vmatpush1.xpose.msra.mxu0 0.0
    %325 = vmatprep.subr.mxu0 0.0
    %326 = vmatpush1.xpose.msra.mxu0 0.0
    %327 = vmatprep.subr.mxu0 0.0
    %328 = vmatpush1.xpose.msra.mxu0 0.0
    %329 = vmatprep.subr.mxu0 0.0
    %330 = vmatpush1.xpose.msra.mxu0 0.0
    %331 = vmatprep.subr.mxu0 0.0
    %332 = vmatpush1.xpose.msra.mxu0 0.0
    %333 = vmatprep.subr.mxu0 0.0
    %334 = vmatpush1.xpose.msra.mxu0 0.0
    %335 = vmatprep.subr.mxu0 0.0
    %336 = vmatpush1.xpose.msra.mxu0 0.0
    %337 = vmatprep.subr.mxu0 0.0
    %338 = vmatpush1.xpose.msra.mxu0 %v305
    %339 = vmatprep.subr.mxu0 0.0
    %340 = vmatpush2.xpose.msra.mxu0 0.0
    %341 = vmatprep.subr.mxu0 0.0
    %342 = vmatpush2.xpose.msra.mxu0 0.0
    %343 = vmatprep.subr.mxu0 0.0
    %344 = vmatpush2.xpose.msra.mxu0 0.0
    %345 = vmatprep.subr.mxu0 0.0
    %346 = vmatpush2.xpose.msra.mxu0 0.0
    %347 = vmatprep.subr.mxu0 0.0
    %348 = vmatpush2.xpose.msra.mxu0 0.0
    %349 = vmatprep.subr.mxu0 0.0
    %350 = vmatpush2.xpose.msra.mxu0 0.0
    %351 = vmatprep.subr.mxu0 0.0
    %352 = vmatpush2.xpose.msra.mxu0 0.0
    %353 = vmatprep.subr.mxu0 0.0
    %354 = vmatpush2.xpose.msra.mxu0 0.0
    %355 = vmatprep.subr.mxu0 0.0
    %356 = vmatpush2.xpose.msra.mxu0 0.0
    %357 = vmatprep.subr.mxu0 0.0
    %358 = vmatpush2.xpose.msra.mxu0 0.0
    %359 = vmatprep.subr.mxu0 0.0
    %360 = vmatpush2.xpose.msra.mxu0 0.0
    %361 = vmatprep.subr.mxu0 0.0
    %362 = vmatpush2.xpose.msra.mxu0 0.0
    %363 = vmatprep.subr.mxu0 0.0
    %364 = vmatpush2.xpose.msra.mxu0 0.0
    %365 = vmatprep.subr.mxu0 0.0
    %366 = vmatpush2.xpose.msra.mxu0 0.0
    %367 = vmatprep.subr.mxu0 0.0
    %368 = vmatpush2.xpose.msra.mxu0 0.0
    %369 = vmatprep.subr.mxu0 0.0
    %370 = vmatpush2.xpose.msra.mxu0 0.0
    %371 = vmatprep.mubr.f32.mxu0 0.0
    %372 = vmatmul.mubr.f32.gmra.mxu0 %v303
    %v373 = vpop.f32.mrf.mxu0
    %v374 = vadd.f32 %v64, %v373
    %v375 = vpop.f32.mrf.mxu0
    %376 = vdwg.mxu0
    %377 = vrot.lane.b32.xlu0 %v217, 96
    %v378 = vpop.permute.xlu0 %377
    %v379 = vsel %vm226, %v217, 0
    %v381 = vsel %vm226, %v378, 0
    %383 = vmatprep.subr.mxu0 0.0
    %384 = vmatpush1.xpose.msra.mxu0 0.0
    %385 = vmatprep.subr.mxu0 0.0
    %386 = vmatpush1.xpose.msra.mxu0 0.0
    %387 = vmatprep.subr.mxu0 0.0
    %388 = vmatpush1.xpose.msra.mxu0 0.0
    %389 = vmatprep.subr.mxu0 0.0
    %390 = vmatpush1.xpose.msra.mxu0 0.0
    %391 = vmatprep.subr.mxu0 0.0
    %392 = vmatpush1.xpose.msra.mxu0 0.0
    %393 = vmatprep.subr.mxu0 0.0
    %394 = vmatpush1.xpose.msra.mxu0 0.0
    %395 = vmatprep.subr.mxu0 0.0
    %396 = vmatpush1.xpose.msra.mxu0 0.0
    %397 = vmatprep.subr.mxu0 0.0
    %398 = vmatpush1.xpose.msra.mxu0 0.0
    %399 = vmatprep.subr.mxu0 0.0
    %400 = vmatpush1.xpose.msra.mxu0 0.0
    %401 = vmatprep.subr.mxu0 0.0
    %402 = vmatpush1.xpose.msra.mxu0 0.0
    %403 = vmatprep.subr.mxu0 0.0
    %404 = vmatpush1.xpose.msra.mxu0 0.0
    %405 = vmatprep.subr.mxu0 0.0
    %406 = vmatpush1.xpose.msra.mxu0 0.0
    %407 = vmatprep.subr.mxu0 0.0
    %408 = vmatpush1.xpose.msra.mxu0 0.0
    %409 = vmatprep.subr.mxu0 0.0
    %410 = vmatpush1.xpose.msra.mxu0 0.0
    %411 = vmatprep.subr.mxu0 0.0
    %412 = vmatpush1.xpose.msra.mxu0 0.0
    %413 = vmatprep.subr.mxu0 0.0
    %414 = vmatpush1.xpose.msra.mxu0 %v381
    %415 = vmatprep.subr.mxu0 0.0
    %416 = vmatpush2.xpose.msra.mxu0 0.0
    %417 = vmatprep.subr.mxu0 0.0
    %418 = vmatpush2.xpose.msra.mxu0 0.0
    %419 = vmatprep.subr.mxu0 0.0
    %420 = vmatpush2.xpose.msra.mxu0 0.0
    %421 = vmatprep.subr.mxu0 0.0
    %422 = vmatpush2.xpose.msra.mxu0 0.0
    %423 = vmatprep.subr.mxu0 0.0
    %424 = vmatpush2.xpose.msra.mxu0 0.0
    %425 = vmatprep.subr.mxu0 0.0
    %426 = vmatpush2.xpose.msra.mxu0 0.0
    %427 = vmatprep.subr.mxu0 0.0
    %428 = vmatpush2.xpose.msra.mxu0 0.0
    %429 = vmatprep.subr.mxu0 0.0
    %430 = vmatpush2.xpose.msra.mxu0 0.0
    %431 = vmatprep.subr.mxu0 0.0
    %432 = vmatpush2.xpose.msra.mxu0 0.0
    %433 = vmatprep.subr.mxu0 0.0
    %434 = vmatpush2.xpose.msra.mxu0 0.0
    %435 = vmatprep.subr.mxu0 0.0
    %436 = vmatpush2.xpose.msra.mxu0 0.0
    %437 = vmatprep.subr.mxu0 0.0
    %438 = vmatpush2.xpose.msra.mxu0 0.0
    %439 = vmatprep.subr.mxu0 0.0
    %440 = vmatpush2.xpose.msra.mxu0 0.0
    %441 = vmatprep.subr.mxu0 0.0
    %442 = vmatpush2.xpose.msra.mxu0 0.0
    %443 = vmatprep.subr.mxu0 0.0
    %444 = vmatpush2.xpose.msra.mxu0 0.0
    %445 = vmatprep.subr.mxu0 0.0
    %446 = vmatpush2.xpose.msra.mxu0 0.0
    %447 = vmatprep.mubr.f32.mxu0 0.0
    %448 = vmatmul.mubr.f32.gmra.mxu0 %v379
    %v449 = vpop.f32.mrf.mxu0
    %v450 = vadd.f32 %v64, %v449
    %v451 = vpop.f32.mrf.mxu0
    %452 = vdwg.mxu0
    %453 = vrot.lane.b32.xlu0 %v221, 96
    %v454 = vpop.permute.xlu0 %453
    %v455 = vsel %vm226, %v221, 0
    %v457 = vsel %vm226, %v454, 0
    %459 = vmatprep.subr.mxu0 0.0
    %460 = vmatpush1.xpose.msra.mxu0 0.0
    %461 = vmatprep.subr.mxu0 0.0
    %462 = vmatpush1.xpose.msra.mxu0 0.0
    %463 = vmatprep.subr.mxu0 0.0
    %464 = vmatpush1.xpose.msra.mxu0 0.0
    %465 = vmatprep.subr.mxu0 0.0
    %466 = vmatpush1.xpose.msra.mxu0 0.0
    %467 = vmatprep.subr.mxu0 0.0
    %468 = vmatpush1.xpose.msra.mxu0 0.0
    %469 = vmatprep.subr.mxu0 0.0
    %470 = vmatpush1.xpose.msra.mxu0 0.0
    %471 = vmatprep.subr.mxu0 0.0
    %472 = vmatpush1.xpose.msra.mxu0 0.0
    %473 = vmatprep.subr.mxu0 0.0
    %474 = vmatpush1.xpose.msra.mxu0 0.0
    %475 = vmatprep.subr.mxu0 0.0
    %476 = vmatpush1.xpose.msra.mxu0 0.0
    %477 = vmatprep.subr.mxu0 0.0
    %478 = vmatpush1.xpose.msra.mxu0 0.0
    %479 = vmatprep.subr.mxu0 0.0
    %480 = vmatpush1.xpose.msra.mxu0 0.0
    %481 = vmatprep.subr.mxu0 0.0
    %482 = vmatpush1.xpose.msra.mxu0 0.0
    %483 = vmatprep.subr.mxu0 0.0
    %484 = vmatpush1.xpose.msra.mxu0 0.0
    %485 = vmatprep.subr.mxu0 0.0
    %486 = vmatpush1.xpose.msra.mxu0 0.0
    %487 = vmatprep.subr.mxu0 0.0
    %488 = vmatpush1.xpose.msra.mxu0 0.0
    %489 = vmatprep.subr.mxu0 0.0
    %490 = vmatpush1.xpose.msra.mxu0 %v457
    %491 = vmatprep.subr.mxu0 0.0
    %492 = vmatpush2.xpose.msra.mxu0 0.0
    %493 = vmatprep.subr.mxu0 0.0
    %494 = vmatpush2.xpose.msra.mxu0 0.0
    %495 = vmatprep.subr.mxu0 0.0
    %496 = vmatpush2.xpose.msra.mxu0 0.0
    %497 = vmatprep.subr.mxu0 0.0
    %498 = vmatpush2.xpose.msra.mxu0 0.0
    %499 = vmatprep.subr.mxu0 0.0
    %500 = vmatpush2.xpose.msra.mxu0 0.0
    %501 = vmatprep.subr.mxu0 0.0
    %502 = vmatpush2.xpose.msra.mxu0 0.0
    %503 = vmatprep.subr.mxu0 0.0
    %504 = vmatpush2.xpose.msra.mxu0 0.0
    %505 = vmatprep.subr.mxu0 0.0
    %506 = vmatpush2.xpose.msra.mxu0 0.0
    %507 = vmatprep.subr.mxu0 0.0
    %508 = vmatpush2.xpose.msra.mxu0 0.0
    %509 = vmatprep.subr.mxu0 0.0
    %510 = vmatpush2.xpose.msra.mxu0 0.0
    %511 = vmatprep.subr.mxu0 0.0
    %512 = vmatpush2.xpose.msra.mxu0 0.0
    %513 = vmatprep.subr.mxu0 0.0
    %514 = vmatpush2.xpose.msra.mxu0 0.0
    %515 = vmatprep.subr.mxu0 0.0
    %516 = vmatpush2.xpose.msra.mxu0 0.0
    %517 = vmatprep.subr.mxu0 0.0
    %518 = vmatpush2.xpose.msra.mxu0 0.0
    %519 = vmatprep.subr.mxu0 0.0
    %520 = vmatpush2.xpose.msra.mxu0 0.0
    %521 = vmatprep.subr.mxu0 0.0
    %522 = vmatpush2.xpose.msra.mxu0 0.0
    %523 = vmatprep.mubr.f32.mxu0 0.0
    %524 = vmatmul.mubr.f32.gmra.mxu0 %v455
    %v525 = vpop.f32.mrf.mxu0
    %v526 = vadd.f32 %v64, %v525
    %v527 = vpop.f32.mrf.mxu0
    %528 = vdwg.mxu0
    %529 = vrot.lane.b32.xlu0 %v207, 96
    %v530 = vpop.permute.xlu0 %529
    %v531 = vsel %vm226, %v207, 0
    %v533 = vsel %vm226, %v530, 0
    %535 = vmatprep.subr.mxu0 0.0
    %536 = vmatpush1.xpose.msra.mxu0 0.0
    %537 = vmatprep.subr.mxu0 0.0
    %538 = vmatpush1.xpose.msra.mxu0 0.0
    %539 = vmatprep.subr.mxu0 0.0
    %540 = vmatpush1.xpose.msra.mxu0 0.0
    %541 = vmatprep.subr.mxu0 0.0
    %542 = vmatpush1.xpose.msra.mxu0 0.0
    %543 = vmatprep.subr.mxu0 0.0
    %544 = vmatpush1.xpose.msra.mxu0 0.0
    %545 = vmatprep.subr.mxu0 0.0
    %546 = vmatpush1.xpose.msra.mxu0 0.0
    %547 = vmatprep.subr.mxu0 0.0
    %548 = vmatpush1.xpose.msra.mxu0 0.0
    %549 = vmatprep.subr.mxu0 0.0
    %550 = vmatpush1.xpose.msra.mxu0 0.0
    %551 = vmatprep.subr.mxu0 0.0
    %552 = vmatpush1.xpose.msra.mxu0 0.0
    %553 = vmatprep.subr.mxu0 0.0
    %554 = vmatpush1.xpose.msra.mxu0 0.0
    %555 = vmatprep.subr.mxu0 0.0
    %556 = vmatpush1.xpose.msra.mxu0 0.0
    %557 = vmatprep.subr.mxu0 0.0
    %558 = vmatpush1.xpose.msra.mxu0 0.0
    %559 = vmatprep.subr.mxu0 0.0
    %560 = vmatpush1.xpose.msra.mxu0 0.0
    %561 = vmatprep.subr.mxu0 0.0
    %562 = vmatpush1.xpose.msra.mxu0 0.0
    %563 = vmatprep.subr.mxu0 0.0
    %564 = vmatpush1.xpose.msra.mxu0 0.0
    %565 = vmatprep.subr.mxu0 0.0
    %566 = vmatpush1.xpose.msra.mxu0 %v533
    %567 = vmatprep.subr.mxu0 0.0
    %568 = vmatpush2.xpose.msra.mxu0 0.0
    %569 = vmatprep.subr.mxu0 0.0
    %570 = vmatpush2.xpose.msra.mxu0 0.0
    %571 = vmatprep.subr.mxu0 0.0
    %572 = vmatpush2.xpose.msra.mxu0 0.0
    %573 = vmatprep.subr.mxu0 0.0
    %574 = vmatpush2.xpose.msra.mxu0 0.0
    %575 = vmatprep.subr.mxu0 0.0
    %576 = vmatpush2.xpose.msra.mxu0 0.0
    %577 = vmatprep.subr.mxu0 0.0
    %578 = vmatpush2.xpose.msra.mxu0 0.0
    %579 = vmatprep.subr.mxu0 0.0
    %580 = vmatpush2.xpose.msra.mxu0 0.0
    %581 = vmatprep.subr.mxu0 0.0
    %582 = vmatpush2.xpose.msra.mxu0 0.0
    %583 = vmatprep.subr.mxu0 0.0
    %584 = vmatpush2.xpose.msra.mxu0 0.0
    %585 = vmatprep.subr.mxu0 0.0
    %586 = vmatpush2.xpose.msra.mxu0 0.0
    %587 = vmatprep.subr.mxu0 0.0
    %588 = vmatpush2.xpose.msra.mxu0 0.0
    %589 = vmatprep.subr.mxu0 0.0
    %590 = vmatpush2.xpose.msra.mxu0 0.0
    %591 = vmatprep.subr.mxu0 0.0
    %592 = vmatpush2.xpose.msra.mxu0 0.0
    %593 = vmatprep.subr.mxu0 0.0
    %594 = vmatpush2.xpose.msra.mxu0 0.0
    %595 = vmatprep.subr.mxu0 0.0
    %596 = vmatpush2.xpose.msra.mxu0 0.0
    %597 = vmatprep.subr.mxu0 0.0
    %598 = vmatpush2.xpose.msra.mxu0 0.0
    %599 = vmatprep.mubr.f32.mxu0 0.0
    %600 = vmatmul.mubr.f32.gmra.mxu0 %v531
    %v601 = vpop.f32.mrf.mxu0
    %v602 = vadd.f32 %v68, %v601
    %v603 = vpop.f32.mrf.mxu0
    %604 = vdwg.mxu0
    %605 = vrot.lane.b32.xlu0 %v215, 96
    %v606 = vpop.permute.xlu0 %605
    %v607 = vsel %vm226, %v215, 0
    %v609 = vsel %vm226, %v606, 0
    %611 = vmatprep.subr.mxu0 0.0
    %612 = vmatpush1.xpose.msra.mxu0 0.0
    %613 = vmatprep.subr.mxu0 0.0
    %614 = vmatpush1.xpose.msra.mxu0 0.0
    %615 = vmatprep.subr.mxu0 0.0
    %616 = vmatpush1.xpose.msra.mxu0 0.0
    %617 = vmatprep.subr.mxu0 0.0
    %618 = vmatpush1.xpose.msra.mxu0 0.0
    %619 = vmatprep.subr.mxu0 0.0
    %620 = vmatpush1.xpose.msra.mxu0 0.0
    %621 = vmatprep.subr.mxu0 0.0
    %622 = vmatpush1.xpose.msra.mxu0 0.0
    %623 = vmatprep.subr.mxu0 0.0
    %624 = vmatpush1.xpose.msra.mxu0 0.0
    %625 = vmatprep.subr.mxu0 0.0
    %626 = vmatpush1.xpose.msra.mxu0 0.0
    %627 = vmatprep.subr.mxu0 0.0
    %628 = vmatpush1.xpose.msra.mxu0 0.0
    %629 = vmatprep.subr.mxu0 0.0
    %630 = vmatpush1.xpose.msra.mxu0 0.0
    %631 = vmatprep.subr.mxu0 0.0
    %632 = vmatpush1.xpose.msra.mxu0 0.0
    %633 = vmatprep.subr.mxu0 0.0
    %634 = vmatpush1.xpose.msra.mxu0 0.0
    %635 = vmatprep.subr.mxu0 0.0
    %636 = vmatpush1.xpose.msra.mxu0 0.0
    %637 = vmatprep.subr.mxu0 0.0
    %638 = vmatpush1.xpose.msra.mxu0 0.0
    %639 = vmatprep.subr.mxu0 0.0
    %640 = vmatpush1.xpose.msra.mxu0 0.0
    %641 = vmatprep.subr.mxu0 0.0
    %642 = vmatpush1.xpose.msra.mxu0 %v609
    %643 = vmatprep.subr.mxu0 0.0
    %644 = vmatpush2.xpose.msra.mxu0 0.0
    %645 = vmatprep.subr.mxu0 0.0
    %646 = vmatpush2.xpose.msra.mxu0 0.0
    %647 = vmatprep.subr.mxu0 0.0
    %648 = vmatpush2.xpose.msra.mxu0 0.0
    %649 = vmatprep.subr.mxu0 0.0
    %650 = vmatpush2.xpose.msra.mxu0 0.0
    %651 = vmatprep.subr.mxu0 0.0
    %652 = vmatpush2.xpose.msra.mxu0 0.0
    %653 = vmatprep.subr.mxu0 0.0
    %654 = vmatpush2.xpose.msra.mxu0 0.0
    %655 = vmatprep.subr.mxu0 0.0
    %656 = vmatpush2.xpose.msra.mxu0 0.0
    %657 = vmatprep.subr.mxu0 0.0
    %658 = vmatpush2.xpose.msra.mxu0 0.0
    %659 = vmatprep.subr.mxu0 0.0
    %660 = vmatpush2.xpose.msra.mxu0 0.0
    %661 = vmatprep.subr.mxu0 0.0
    %662 = vmatpush2.xpose.msra.mxu0 0.0
    %663 = vmatprep.subr.mxu0 0.0
    %664 = vmatpush2.xpose.msra.mxu0 0.0
    %665 = vmatprep.subr.mxu0 0.0
    %666 = vmatpush2.xpose.msra.mxu0 0.0
    %667 = vmatprep.subr.mxu0 0.0
    %668 = vmatpush2.xpose.msra.mxu0 0.0
    %669 = vmatprep.subr.mxu0 0.0
    %670 = vmatpush2.xpose.msra.mxu0 0.0
    %671 = vmatprep.subr.mxu0 0.0
    %672 = vmatpush2.xpose.msra.mxu0 0.0
    %673 = vmatprep.subr.mxu0 0.0
    %674 = vmatpush2.xpose.msra.mxu0 0.0
    %675 = vmatprep.mubr.f32.mxu0 0.0
    %676 = vmatmul.mubr.f32.gmra.mxu0 %v607
    %v677 = vpop.f32.mrf.mxu0
    %v678 = vadd.f32 %v68, %v677
    %v679 = vpop.f32.mrf.mxu0
    %680 = vdwg.mxu0
    %681 = vrot.lane.b32.xlu0 %v219, 96
    %v682 = vpop.permute.xlu0 %681
    %v683 = vsel %vm226, %v219, 0
    %v685 = vsel %vm226, %v682, 0
    %687 = vmatprep.subr.mxu0 0.0
    %688 = vmatpush1.xpose.msra.mxu0 0.0
    %689 = vmatprep.subr.mxu0 0.0
    %690 = vmatpush1.xpose.msra.mxu0 0.0
    %691 = vmatprep.subr.mxu0 0.0
    %692 = vmatpush1.xpose.msra.mxu0 0.0
    %693 = vmatprep.subr.mxu0 0.0
    %694 = vmatpush1.xpose.msra.mxu0 0.0
    %695 = vmatprep.subr.mxu0 0.0
    %696 = vmatpush1.xpose.msra.mxu0 0.0
    %697 = vmatprep.subr.mxu0 0.0
    %698 = vmatpush1.xpose.msra.mxu0 0.0
    %699 = vmatprep.subr.mxu0 0.0
    %700 = vmatpush1.xpose.msra.mxu0 0.0
    %701 = vmatprep.subr.mxu0 0.0
    %702 = vmatpush1.xpose.msra.mxu0 0.0
    %703 = vmatprep.subr.mxu0 0.0
    %704 = vmatpush1.xpose.msra.mxu0 0.0
    %705 = vmatprep.subr.mxu0 0.0
    %706 = vmatpush1.xpose.msra.mxu0 0.0
    %707 = vmatprep.subr.mxu0 0.0
    %708 = vmatpush1.xpose.msra.mxu0 0.0
    %709 = vmatprep.subr.mxu0 0.0
    %710 = vmatpush1.xpose.msra.mxu0 0.0
    %711 = vmatprep.subr.mxu0 0.0
    %712 = vmatpush1.xpose.msra.mxu0 0.0
    %713 = vmatprep.subr.mxu0 0.0
    %714 = vmatpush1.xpose.msra.mxu0 0.0
    %715 = vmatprep.subr.mxu0 0.0
    %716 = vmatpush1.xpose.msra.mxu0 0.0
    %717 = vmatprep.subr.mxu0 0.0
    %718 = vmatpush1.xpose.msra.mxu0 %v685
    %719 = vmatprep.subr.mxu0 0.0
    %720 = vmatpush2.xpose.msra.mxu0 0.0
    %721 = vmatprep.subr.mxu0 0.0
    %722 = vmatpush2.xpose.msra.mxu0 0.0
    %723 = vmatprep.subr.mxu0 0.0
    %724 = vmatpush2.xpose.msra.mxu0 0.0
    %725 = vmatprep.subr.mxu0 0.0
    %726 = vmatpush2.xpose.msra.mxu0 0.0
    %727 = vmatprep.subr.mxu0 0.0
    %728 = vmatpush2.xpose.msra.mxu0 0.0
    %729 = vmatprep.subr.mxu0 0.0
    %730 = vmatpush2.xpose.msra.mxu0 0.0
    %731 = vmatprep.subr.mxu0 0.0
    %732 = vmatpush2.xpose.msra.mxu0 0.0
    %733 = vmatprep.subr.mxu0 0.0
    %734 = vmatpush2.xpose.msra.mxu0 0.0
    %735 = vmatprep.subr.mxu0 0.0
    %736 = vmatpush2.xpose.msra.mxu0 0.0
    %737 = vmatprep.subr.mxu0 0.0
    %738 = vmatpush2.xpose.msra.mxu0 0.0
    %739 = vmatprep.subr.mxu0 0.0
    %740 = vmatpush2.xpose.msra.mxu0 0.0
    %741 = vmatprep.subr.mxu0 0.0
    %742 = vmatpush2.xpose.msra.mxu0 0.0
    %743 = vmatprep.subr.mxu0 0.0
    %744 = vmatpush2.xpose.msra.mxu0 0.0
    %745 = vmatprep.subr.mxu0 0.0
    %746 = vmatpush2.xpose.msra.mxu0 0.0
    %747 = vmatprep.subr.mxu0 0.0
    %748 = vmatpush2.xpose.msra.mxu0 0.0
    %749 = vmatprep.subr.mxu0 0.0
    %750 = vmatpush2.xpose.msra.mxu0 0.0
    %751 = vmatprep.mubr.f32.mxu0 0.0
    %752 = vmatmul.mubr.f32.gmra.mxu0 %v683
    %v753 = vpop.f32.mrf.mxu0
    %v754 = vadd.f32 %v68, %v753
    %v755 = vpop.f32.mrf.mxu0
    %756 = vdwg.mxu0
    %757 = vrot.lane.b32.xlu0 %v223, 96
    %v758 = vpop.permute.xlu0 %757
    %v759 = vsel %vm226, %v223, 0
    %v761 = vsel %vm226, %v758, 0
    %763 = vmatprep.subr.mxu0 0.0
    %764 = vmatpush1.xpose.msra.mxu0 0.0
    %765 = vmatprep.subr.mxu0 0.0
    %766 = vmatpush1.xpose.msra.mxu0 0.0
    %767 = vmatprep.subr.mxu0 0.0
    %768 = vmatpush1.xpose.msra.mxu0 0.0
    %769 = vmatprep.subr.mxu0 0.0
    %770 = vmatpush1.xpose.msra.mxu0 0.0
    %771 = vmatprep.subr.mxu0 0.0
    %772 = vmatpush1.xpose.msra.mxu0 0.0
    %773 = vmatprep.subr.mxu0 0.0
    %774 = vmatpush1.xpose.msra.mxu0 0.0
    %775 = vmatprep.subr.mxu0 0.0
    %776 = vmatpush1.xpose.msra.mxu0 0.0
    %777 = vmatprep.subr.mxu0 0.0
    %778 = vmatpush1.xpose.msra.mxu0 0.0
    %779 = vmatprep.subr.mxu0 0.0
    %780 = vmatpush1.xpose.msra.mxu0 0.0
    %781 = vmatprep.subr.mxu0 0.0
    %782 = vmatpush1.xpose.msra.mxu0 0.0
    %783 = vmatprep.subr.mxu0 0.0
    %784 = vmatpush1.xpose.msra.mxu0 0.0
    %785 = vmatprep.subr.mxu0 0.0
    %786 = vmatpush1.xpose.msra.mxu0 0.0
    %787 = vmatprep.subr.mxu0 0.0
    %788 = vmatpush1.xpose.msra.mxu0 0.0
    %789 = vmatprep.subr.mxu0 0.0
    %790 = vmatpush1.xpose.msra.mxu0 0.0
    %791 = vmatprep.subr.mxu0 0.0
    %792 = vmatpush1.xpose.msra.mxu0 0.0
    %793 = vmatprep.subr.mxu0 0.0
    %794 = vmatpush1.xpose.msra.mxu0 %v761
    %795 = vmatprep.subr.mxu0 0.0
    %796 = vmatpush2.xpose.msra.mxu0 0.0
    %797 = vmatprep.subr.mxu0 0.0
    %798 = vmatpush2.xpose.msra.mxu0 0.0
    %799 = vmatprep.subr.mxu0 0.0
    %800 = vmatpush2.xpose.msra.mxu0 0.0
    %801 = vmatprep.subr.mxu0 0.0
    %802 = vmatpush2.xpose.msra.mxu0 0.0
    %803 = vmatprep.subr.mxu0 0.0
    %804 = vmatpush2.xpose.msra.mxu0 0.0
    %805 = vmatprep.subr.mxu0 0.0
    %806 = vmatpush2.xpose.msra.mxu0 0.0
    %807 = vmatprep.subr.mxu0 0.0
    %808 = vmatpush2.xpose.msra.mxu0 0.0
    %809 = vmatprep.subr.mxu0 0.0
    %810 = vmatpush2.xpose.msra.mxu0 0.0
    %811 = vmatprep.subr.mxu0 0.0
    %812 = vmatpush2.xpose.msra.mxu0 0.0
    %813 = vmatprep.subr.mxu0 0.0
    %814 = vmatpush2.xpose.msra.mxu0 0.0
    %815 = vmatprep.subr.mxu0 0.0
    %816 = vmatpush2.xpose.msra.mxu0 0.0
    %817 = vmatprep.subr.mxu0 0.0
    %818 = vmatpush2.xpose.msra.mxu0 0.0
    %819 = vmatprep.subr.mxu0 0.0
    %820 = vmatpush2.xpose.msra.mxu0 0.0
    %821 = vmatprep.subr.mxu0 0.0
    %822 = vmatpush2.xpose.msra.mxu0 0.0
    %823 = vmatprep.subr.mxu0 0.0
    %824 = vmatpush2.xpose.msra.mxu0 0.0
    %825 = vmatprep.subr.mxu0 0.0
    %826 = vmatpush2.xpose.msra.mxu0 0.0
    %827 = vmatprep.mubr.f32.mxu0 0.0
    %828 = vmatmul.mubr.f32.gmra.mxu0 %v759
    %v829 = vpop.f32.mrf.mxu0
    %v830 = vadd.f32 %v68, %v829
    %v831 = vpop.f32.mrf.mxu0
    %832 = vdwg.mxu0
    %v833 = vmul.f32 %v298, 1.442695
    %v834 = vpow.pop %v833
    %v835 = vmul.f32 %v374, 1.442695
    %v836 = vpow.pop %v835
    %v837 = vmul.f32 %v450, 1.442695
    %v838 = vpow.pop %v837
    %v839 = vmul.f32 %v526, 1.442695
    %v840 = vpow.pop %v839
    %v841 = vmul.f32 %v602, 1.442695
    %v842 = vpow.pop %v841
    %v843 = vmul.f32 %v678, 1.442695
    %v844 = vpow.pop %v843
    %v845 = vmul.f32 %v754, 1.442695
    %v846 = vpow.pop %v845
    %v847 = vmul.f32 %v830, 1.442695
    %v848 = vpow.pop %v847
    %v849 = vsel %vm226, %v834, 0.0
    %850 = vadd.xlane.f32.xlu0 %v849
    %v851 = vpop.xlane.xlu0 %850
    %v852 = vsel %vm226, %v836, 0.0
    %853 = vadd.xlane.f32.xlu0 %v852
    %v854 = vpop.xlane.xlu0 %853
    %v855 = vsel %vm226, %v838, 0.0
    %856 = vadd.xlane.f32.xlu0 %v855
    %v857 = vpop.xlane.xlu0 %856
    %v858 = vsel %vm226, %v840, 0.0
    %859 = vadd.xlane.f32.xlu0 %v858
    %v860 = vpop.xlane.xlu0 %859
    %v861 = vsel %vm226, %v842, 0.0
    %862 = vadd.xlane.f32.xlu0 %v861
    %v863 = vpop.xlane.xlu0 %862
    %v864 = vsel %vm226, %v844, 0.0
    %865 = vadd.xlane.f32.xlu0 %v864
    %v866 = vpop.xlane.xlu0 %865
    %v867 = vsel %vm226, %v846, 0.0
    %868 = vadd.xlane.f32.xlu0 %v867
    %v869 = vpop.xlane.xlu0 %868
    %v870 = vsel %vm226, %v848, 0.0
    %871 = vadd.xlane.f32.xlu0 %v870
    %v872 = vpop.xlane.xlu0 %871
    %v873 = vrcp.pop %v851
    %v874 = vrcp.pop %v854
    %v875 = vrcp.pop %v857
    %v876 = vrcp.pop %v860
    %v877 = vrcp.pop %v863
    %v878 = vrcp.pop %v866
    %v879 = vrcp.pop %v869
    %v880 = vrcp.pop %v872
    %v881 = vmul.f32 %v834, %v873
    %v882 = vmul.f32 %v836, %v874
    %v883 = vmul.f32 %v838, %v875
    %v884 = vmul.f32 %v840, %v876
    %v885 = vmul.f32 %v842, %v877
    %v886 = vmul.f32 %v844, %v878
    %v887 = vmul.f32 %v846, %v879
    %v888 = vmul.f32 %v848, %v880
    %889 = vrot.lane.b32.xlu0 %v202, 64
    %v890 = vpop.permute.xlu0 %889
    %v893 = vsel %vm226, %v881, 0
    %895 = vmatprep.subr.mxu0 0.0
    %896 = vmatpush1.msra.mxu0 0.0
    %897 = vmatprep.subr.mxu0 0.0
    %898 = vmatpush1.msra.mxu0 0.0
    %899 = vmatprep.subr.mxu0 0.0
    %900 = vmatpush1.msra.mxu0 0.0
    %901 = vmatprep.subr.mxu0 0.0
    %902 = vmatpush1.msra.mxu0 0.0
    %903 = vmatprep.subr.mxu0 0.0
    %904 = vmatpush1.msra.mxu0 0.0
    %905 = vmatprep.subr.mxu0 0.0
    %906 = vmatpush1.msra.mxu0 0.0
    %907 = vmatprep.subr.mxu0 0.0
    %908 = vmatpush1.msra.mxu0 0.0
    %909 = vmatprep.subr.mxu0 0.0
    %910 = vmatpush1.msra.mxu0 0.0
    %911 = vmatprep.subr.mxu0 0.0
    %912 = vmatpush1.msra.mxu0 0.0
    %913 = vmatprep.subr.mxu0 0.0
    %914 = vmatpush1.msra.mxu0 0.0
    %915 = vmatprep.subr.mxu0 0.0
    %916 = vmatpush1.msra.mxu0 0.0
    %917 = vmatprep.subr.mxu0 0.0
    %918 = vmatpush1.msra.mxu0 0.0
    %919 = vmatprep.subr.mxu0 0.0
    %920 = vmatpush1.msra.mxu0 0.0
    %921 = vmatprep.subr.mxu0 0.0
    %922 = vmatpush1.msra.mxu0 0.0
    %923 = vmatprep.subr.mxu0 0.0
    %924 = vmatpush1.msra.mxu0 0.0
    %925 = vmatprep.subr.mxu0 0.0
    %926 = vmatpush1.msra.mxu0 %v890
    %927 = vmatprep.subr.mxu0 0.0
    %928 = vmatpush2.msra.mxu0 0.0
    %929 = vmatprep.subr.mxu0 0.0
    %930 = vmatpush2.msra.mxu0 0.0
    %931 = vmatprep.subr.mxu0 0.0
    %932 = vmatpush2.msra.mxu0 0.0
    %933 = vmatprep.subr.mxu0 0.0
    %934 = vmatpush2.msra.mxu0 0.0
    %935 = vmatprep.subr.mxu0 0.0
    %936 = vmatpush2.msra.mxu0 0.0
    %937 = vmatprep.subr.mxu0 0.0
    %938 = vmatpush2.msra.mxu0 0.0
    %939 = vmatprep.subr.mxu0 0.0
    %940 = vmatpush2.msra.mxu0 0.0
    %941 = vmatprep.subr.mxu0 0.0
    %942 = vmatpush2.msra.mxu0 0.0
    %943 = vmatprep.subr.mxu0 0.0
    %944 = vmatpush2.msra.mxu0 0.0
    %945 = vmatprep.subr.mxu0 0.0
    %946 = vmatpush2.msra.mxu0 0.0
    %947 = vmatprep.subr.mxu0 0.0
    %948 = vmatpush2.msra.mxu0 0.0
    %949 = vmatprep.subr.mxu0 0.0
    %950 = vmatpush2.msra.mxu0 0.0
    %951 = vmatprep.subr.mxu0 0.0
    %952 = vmatpush2.msra.mxu0 0.0
    %953 = vmatprep.subr.mxu0 0.0
    %954 = vmatpush2.msra.mxu0 0.0
    %955 = vmatprep.subr.mxu0 0.0
    %956 = vmatpush2.msra.mxu0 0.0
    %957 = vmatprep.subr.mxu0 0.0
    %958 = vmatpush2.msra.mxu0 0.0
    %959 = vmatprep.mubr.f32.mxu0 0.0
    %960 = vmatmul.mubr.f32.gmra.mxu0 %v893
    %v961 = vpop.f32.mrf.mxu0
    %v962 = vadd.f32 0.0, %v961
    %v963 = vpop.f32.mrf.mxu0
    %964 = vdwg.mxu0
    %965 = vrot.lane.b32.xlu0 %v213, 64
    %v966 = vpop.permute.xlu0 %965
    %v969 = vsel %vm226, %v882, 0
    %971 = vmatprep.subr.mxu0 0.0
    %972 = vmatpush1.msra.mxu0 0.0
    %973 = vmatprep.subr.mxu0 0.0
    %974 = vmatpush1.msra.mxu0 0.0
    %975 = vmatprep.subr.mxu0 0.0
    %976 = vmatpush1.msra.mxu0 0.0
    %977 = vmatprep.subr.mxu0 0.0
    %978 = vmatpush1.msra.mxu0 0.0
    %979 = vmatprep.subr.mxu0 0.0
    %980 = vmatpush1.msra.mxu0 0.0
    %981 = vmatprep.subr.mxu0 0.0
    %982 = vmatpush1.msra.mxu0 0.0
    %983 = vmatprep.subr.mxu0 0.0
    %984 = vmatpush1.msra.mxu0 0.0
    %985 = vmatprep.subr.mxu0 0.0
    %986 = vmatpush1.msra.mxu0 0.0
    %987 = vmatprep.subr.mxu0 0.0
    %988 = vmatpush1.msra.mxu0 0.0
    %989 = vmatprep.subr.mxu0 0.0
    %990 = vmatpush1.msra.mxu0 0.0
    %991 = vmatprep.subr.mxu0 0.0
    %992 = vmatpush1.msra.mxu0 0.0
    %993 = vmatprep.subr.mxu0 0.0
    %994 = vmatpush1.msra.mxu0 0.0
    %995 = vmatprep.subr.mxu0 0.0
    %996 = vmatpush1.msra.mxu0 0.0
    %997 = vmatprep.subr.mxu0 0.0
    %998 = vmatpush1.msra.mxu0 0.0
    %999 = vmatprep.subr.mxu0 0.0
    %1000 = vmatpush1.msra.mxu0 0.0
    %1001 = vmatprep.subr.mxu0 0.0
    %1002 = vmatpush1.msra.mxu0 %v966
    %1003 = vmatprep.subr.mxu0 0.0
    %1004 = vmatpush2.msra.mxu0 0.0
    %1005 = vmatprep.subr.mxu0 0.0
    %1006 = vmatpush2.msra.mxu0 0.0
    %1007 = vmatprep.subr.mxu0 0.0
    %1008 = vmatpush2.msra.mxu0 0.0
    %1009 = vmatprep.subr.mxu0 0.0
    %1010 = vmatpush2.msra.mxu0 0.0
    %1011 = vmatprep.subr.mxu0 0.0
    %1012 = vmatpush2.msra.mxu0 0.0
    %1013 = vmatprep.subr.mxu0 0.0
    %1014 = vmatpush2.msra.mxu0 0.0
    %1015 = vmatprep.subr.mxu0 0.0
    %1016 = vmatpush2.msra.mxu0 0.0
    %1017 = vmatprep.subr.mxu0 0.0
    %1018 = vmatpush2.msra.mxu0 0.0
    %1019 = vmatprep.subr.mxu0 0.0
    %1020 = vmatpush2.msra.mxu0 0.0
    %1021 = vmatprep.subr.mxu0 0.0
    %1022 = vmatpush2.msra.mxu0 0.0
    %1023 = vmatprep.subr.mxu0 0.0
    %1024 = vmatpush2.msra.mxu0 0.0
    %1025 = vmatprep.subr.mxu0 0.0
    %1026 = vmatpush2.msra.mxu0 0.0
    %1027 = vmatprep.subr.mxu0 0.0
    %1028 = vmatpush2.msra.mxu0 0.0
    %1029 = vmatprep.subr.mxu0 0.0
    %1030 = vmatpush2.msra.mxu0 0.0
    %1031 = vmatprep.subr.mxu0 0.0
    %1032 = vmatpush2.msra.mxu0 0.0
    %1033 = vmatprep.subr.mxu0 0.0
    %1034 = vmatpush2.msra.mxu0 0.0
    %1035 = vmatprep.mubr.f32.mxu0 0.0
    %1036 = vmatmul.mubr.f32.gmra.mxu0 %v969
    %v1037 = vpop.f32.mrf.mxu0
    %v1038 = vadd.f32 0.0, %v1037
    %v1039 = vpop.f32.mrf.mxu0
    %1040 = vdwg.mxu0
    %1041 = vrot.lane.b32.xlu0 %v217, 64
    %v1042 = vpop.permute.xlu0 %1041
    %v1045 = vsel %vm226, %v883, 0
    %1047 = vmatprep.subr.mxu0 0.0
    %1048 = vmatpush1.msra.mxu0 0.0
    %1049 = vmatprep.subr.mxu0 0.0
    %1050 = vmatpush1.msra.mxu0 0.0
    %1051 = vmatprep.subr.mxu0 0.0
    %1052 = vmatpush1.msra.mxu0 0.0
    %1053 = vmatprep.subr.mxu0 0.0
    %1054 = vmatpush1.msra.mxu0 0.0
    %1055 = vmatprep.subr.mxu0 0.0
    %1056 = vmatpush1.msra.mxu0 0.0
    %1057 = vmatprep.subr.mxu0 0.0
    %1058 = vmatpush1.msra.mxu0 0.0
    %1059 = vmatprep.subr.mxu0 0.0
    %1060 = vmatpush1.msra.mxu0 0.0
    %1061 = vmatprep.subr.mxu0 0.0
    %1062 = vmatpush1.msra.mxu0 0.0
    %1063 = vmatprep.subr.mxu0 0.0
    %1064 = vmatpush1.msra.mxu0 0.0
    %1065 = vmatprep.subr.mxu0 0.0
    %1066 = vmatpush1.msra.mxu0 0.0
    %1067 = vmatprep.subr.mxu0 0.0
    %1068 = vmatpush1.msra.mxu0 0.0
    %1069 = vmatprep.subr.mxu0 0.0
    %1070 = vmatpush1.msra.mxu0 0.0
    %1071 = vmatprep.subr.mxu0 0.0
    %1072 = vmatpush1.msra.mxu0 0.0
    %1073 = vmatprep.subr.mxu0 0.0
    %1074 = vmatpush1.msra.mxu0 0.0
    %1075 = vmatprep.subr.mxu0 0.0
    %1076 = vmatpush1.msra.mxu0 0.0
    %1077 = vmatprep.subr.mxu0 0.0
    %1078 = vmatpush1.msra.mxu0 %v1042
    %1079 = vmatprep.subr.mxu0 0.0
    %1080 = vmatpush2.msra.mxu0 0.0
    %1081 = vmatprep.subr.mxu0 0.0
    %1082 = vmatpush2.msra.mxu0 0.0
    %1083 = vmatprep.subr.mxu0 0.0
    %1084 = vmatpush2.msra.mxu0 0.0
    %1085 = vmatprep.subr.mxu0 0.0
    %1086 = vmatpush2.msra.mxu0 0.0
    %1087 = vmatprep.subr.mxu0 0.0
    %1088 = vmatpush2.msra.mxu0 0.0
    %1089 = vmatprep.subr.mxu0 0.0
    %1090 = vmatpush2.msra.mxu0 0.0
    %1091 = vmatprep.subr.mxu0 0.0
    %1092 = vmatpush2.msra.mxu0 0.0
    %1093 = vmatprep.subr.mxu0 0.0
    %1094 = vmatpush2.msra.mxu0 0.0
    %1095 = vmatprep.subr.mxu0 0.0
    %1096 = vmatpush2.msra.mxu0 0.0
    %1097 = vmatprep.subr.mxu0 0.0
    %1098 = vmatpush2.msra.mxu0 0.0
    %1099 = vmatprep.subr.mxu0 0.0
    %1100 = vmatpush2.msra.mxu0 0.0
    %1101 = vmatprep.subr.mxu0 0.0
    %1102 = vmatpush2.msra.mxu0 0.0
    %1103 = vmatprep.subr.mxu0 0.0
    %1104 = vmatpush2.msra.mxu0 0.0
    %1105 = vmatprep.subr.mxu0 0.0
    %1106 = vmatpush2.msra.mxu0 0.0
    %1107 = vmatprep.subr.mxu0 0.0
    %1108 = vmatpush2.msra.mxu0 0.0
    %1109 = vmatprep.subr.mxu0 0.0
    %1110 = vmatpush2.msra.mxu0 0.0
    %1111 = vmatprep.mubr.f32.mxu0 0.0
    %1112 = vmatmul.mubr.f32.gmra.mxu0 %v1045
    %v1113 = vpop.f32.mrf.mxu0
    %v1114 = vadd.f32 0.0, %v1113
    %v1115 = vpop.f32.mrf.mxu0
    %1116 = vdwg.mxu0
    %1117 = vrot.lane.b32.xlu0 %v221, 64
    %v1118 = vpop.permute.xlu0 %1117
    %v1121 = vsel %vm226, %v884, 0
    %1123 = vmatprep.subr.mxu0 0.0
    %1124 = vmatpush1.msra.mxu0 0.0
    %1125 = vmatprep.subr.mxu0 0.0
    %1126 = vmatpush1.msra.mxu0 0.0
    %1127 = vmatprep.subr.mxu0 0.0
    %1128 = vmatpush1.msra.mxu0 0.0
    %1129 = vmatprep.subr.mxu0 0.0
    %1130 = vmatpush1.msra.mxu0 0.0
    %1131 = vmatprep.subr.mxu0 0.0
    %1132 = vmatpush1.msra.mxu0 0.0
    %1133 = vmatprep.subr.mxu0 0.0
    %1134 = vmatpush1.msra.mxu0 0.0
    %1135 = vmatprep.subr.mxu0 0.0
    %1136 = vmatpush1.msra.mxu0 0.0
    %1137 = vmatprep.subr.mxu0 0.0
    %1138 = vmatpush1.msra.mxu0 0.0
    %1139 = vmatprep.subr.mxu0 0.0
    %1140 = vmatpush1.msra.mxu0 0.0
    %1141 = vmatprep.subr.mxu0 0.0
    %1142 = vmatpush1.msra.mxu0 0.0
    %1143 = vmatprep.subr.mxu0 0.0
    %1144 = vmatpush1.msra.mxu0 0.0
    %1145 = vmatprep.subr.mxu0 0.0
    %1146 = vmatpush1.msra.mxu0 0.0
    %1147 = vmatprep.subr.mxu0 0.0
    %1148 = vmatpush1.msra.mxu0 0.0
    %1149 = vmatprep.subr.mxu0 0.0
    %1150 = vmatpush1.msra.mxu0 0.0
    %1151 = vmatprep.subr.mxu0 0.0
    %1152 = vmatpush1.msra.mxu0 0.0
    %1153 = vmatprep.subr.mxu0 0.0
    %1154 = vmatpush1.msra.mxu0 %v1118
    %1155 = vmatprep.subr.mxu0 0.0
    %1156 = vmatpush2.msra.mxu0 0.0
    %1157 = vmatprep.subr.mxu0 0.0
    %1158 = vmatpush2.msra.mxu0 0.0
    %1159 = vmatprep.subr.mxu0 0.0
    %1160 = vmatpush2.msra.mxu0 0.0
    %1161 = vmatprep.subr.mxu0 0.0
    %1162 = vmatpush2.msra.mxu0 0.0
    %1163 = vmatprep.subr.mxu0 0.0
    %1164 = vmatpush2.msra.mxu0 0.0
    %1165 = vmatprep.subr.mxu0 0.0
    %1166 = vmatpush2.msra.mxu0 0.0
    %1167 = vmatprep.subr.mxu0 0.0
    %1168 = vmatpush2.msra.mxu0 0.0
    %1169 = vmatprep.subr.mxu0 0.0
    %1170 = vmatpush2.msra.mxu0 0.0
    %1171 = vmatprep.subr.mxu0 0.0
    %1172 = vmatpush2.msra.mxu0 0.0
    %1173 = vmatprep.subr.mxu0 0.0
    %1174 = vmatpush2.msra.mxu0 0.0
    %1175 = vmatprep.subr.mxu0 0.0
    %1176 = vmatpush2.msra.mxu0 0.0
    %1177 = vmatprep.subr.mxu0 0.0
    %1178 = vmatpush2.msra.mxu0 0.0
    %1179 = vmatprep.subr.mxu0 0.0
    %1180 = vmatpush2.msra.mxu0 0.0
    %1181 = vmatprep.subr.mxu0 0.0
    %1182 = vmatpush2.msra.mxu0 0.0
    %1183 = vmatprep.subr.mxu0 0.0
    %1184 = vmatpush2.msra.mxu0 0.0
    %1185 = vmatprep.subr.mxu0 0.0
    %1186 = vmatpush2.msra.mxu0 0.0
    %1187 = vmatprep.mubr.f32.mxu0 0.0
    %1188 = vmatmul.mubr.f32.gmra.mxu0 %v1121
    %v1189 = vpop.f32.mrf.mxu0
    %v1190 = vadd.f32 0.0, %v1189
    %v1191 = vpop.f32.mrf.mxu0
    %1192 = vdwg.mxu0
    %1193 = vrot.lane.b32.xlu0 %v207, 64
    %v1194 = vpop.permute.xlu0 %1193
    %v1197 = vsel %vm226, %v885, 0
    %1199 = vmatprep.subr.mxu0 0.0
    %1200 = vmatpush1.msra.mxu0 0.0
    %1201 = vmatprep.subr.mxu0 0.0
    %1202 = vmatpush1.msra.mxu0 0.0
    %1203 = vmatprep.subr.mxu0 0.0
    %1204 = vmatpush1.msra.mxu0 0.0
    %1205 = vmatprep.subr.mxu0 0.0
    %1206 = vmatpush1.msra.mxu0 0.0
    %1207 = vmatprep.subr.mxu0 0.0
    %1208 = vmatpush1.msra.mxu0 0.0
    %1209 = vmatprep.subr.mxu0 0.0
    %1210 = vmatpush1.msra.mxu0 0.0
    %1211 = vmatprep.subr.mxu0 0.0
    %1212 = vmatpush1.msra.mxu0 0.0
    %1213 = vmatprep.subr.mxu0 0.0
    %1214 = vmatpush1.msra.mxu0 0.0
    %1215 = vmatprep.subr.mxu0 0.0
    %1216 = vmatpush1.msra.mxu0 0.0
    %1217 = vmatprep.subr.mxu0 0.0
    %1218 = vmatpush1.msra.mxu0 0.0
    %1219 = vmatprep.subr.mxu0 0.0
    %1220 = vmatpush1.msra.mxu0 0.0
    %1221 = vmatprep.subr.mxu0 0.0
    %1222 = vmatpush1.msra.mxu0 0.0
    %1223 = vmatprep.subr.mxu0 0.0
    %1224 = vmatpush1.msra.mxu0 0.0
    %1225 = vmatprep.subr.mxu0 0.0
    %1226 = vmatpush1.msra.mxu0 0.0
    %1227 = vmatprep.subr.mxu0 0.0
    %1228 = vmatpush1.msra.mxu0 0.0
    %1229 = vmatprep.subr.mxu0 0.0
    %1230 = vmatpush1.msra.mxu0 %v1194
    %1231 = vmatprep.subr.mxu0 0.0
    %1232 = vmatpush2.msra.mxu0 0.0
    %1233 = vmatprep.subr.mxu0 0.0
    %1234 = vmatpush2.msra.mxu0 0.0
    %1235 = vmatprep.subr.mxu0 0.0
    %1236 = vmatpush2.msra.mxu0 0.0
    %1237 = vmatprep.subr.mxu0 0.0
    %1238 = vmatpush2.msra.mxu0 0.0
    %1239 = vmatprep.subr.mxu0 0.0
    %1240 = vmatpush2.msra.mxu0 0.0
    %1241 = vmatprep.subr.mxu0 0.0
    %1242 = vmatpush2.msra.mxu0 0.0
    %1243 = vmatprep.subr.mxu0 0.0
    %1244 = vmatpush2.msra.mxu0 0.0
    %1245 = vmatprep.subr.mxu0 0.0
    %1246 = vmatpush2.msra.mxu0 0.0
    %1247 = vmatprep.subr.mxu0 0.0
    %1248 = vmatpush2.msra.mxu0 0.0
    %1249 = vmatprep.subr.mxu0 0.0
    %1250 = vmatpush2.msra.mxu0 0.0
    %1251 = vmatprep.subr.mxu0 0.0
    %1252 = vmatpush2.msra.mxu0 0.0
    %1253 = vmatprep.subr.mxu0 0.0
    %1254 = vmatpush2.msra.mxu0 0.0
    %1255 = vmatprep.subr.mxu0 0.0
    %1256 = vmatpush2.msra.mxu0 0.0
    %1257 = vmatprep.subr.mxu0 0.0
    %1258 = vmatpush2.msra.mxu0 0.0
    %1259 = vmatprep.subr.mxu0 0.0
    %1260 = vmatpush2.msra.mxu0 0.0
    %1261 = vmatprep.subr.mxu0 0.0
    %1262 = vmatpush2.msra.mxu0 0.0
    %1263 = vmatprep.mubr.f32.mxu0 0.0
    %1264 = vmatmul.mubr.f32.gmra.mxu0 %v1197
    %v1265 = vpop.f32.mrf.mxu0
    %v1266 = vadd.f32 0.0, %v1265
    %v1267 = vpop.f32.mrf.mxu0
    %1268 = vdwg.mxu0
    %1269 = vrot.lane.b32.xlu0 %v215, 64
    %v1270 = vpop.permute.xlu0 %1269
    %v1273 = vsel %vm226, %v886, 0
    %1275 = vmatprep.subr.mxu0 0.0
    %1276 = vmatpush1.msra.mxu0 0.0
    %1277 = vmatprep.subr.mxu0 0.0
    %1278 = vmatpush1.msra.mxu0 0.0
    %1279 = vmatprep.subr.mxu0 0.0
    %1280 = vmatpush1.msra.mxu0 0.0
    %1281 = vmatprep.subr.mxu0 0.0
    %1282 = vmatpush1.msra.mxu0 0.0
    %1283 = vmatprep.subr.mxu0 0.0
    %1284 = vmatpush1.msra.mxu0 0.0
    %1285 = vmatprep.subr.mxu0 0.0
    %1286 = vmatpush1.msra.mxu0 0.0
    %1287 = vmatprep.subr.mxu0 0.0
    %1288 = vmatpush1.msra.mxu0 0.0
    %1289 = vmatprep.subr.mxu0 0.0
    %1290 = vmatpush1.msra.mxu0 0.0
    %1291 = vmatprep.subr.mxu0 0.0
    %1292 = vmatpush1.msra.mxu0 0.0
    %1293 = vmatprep.subr.mxu0 0.0
    %1294 = vmatpush1.msra.mxu0 0.0
    %1295 = vmatprep.subr.mxu0 0.0
    %1296 = vmatpush1.msra.mxu0 0.0
    %1297 = vmatprep.subr.mxu0 0.0
    %1298 = vmatpush1.msra.mxu0 0.0
    %1299 = vmatprep.subr.mxu0 0.0
    %1300 = vmatpush1.msra.mxu0 0.0
    %1301 = vmatprep.subr.mxu0 0.0
    %1302 = vmatpush1.msra.mxu0 0.0
    %1303 = vmatprep.subr.mxu0 0.0
    %1304 = vmatpush1.msra.mxu0 0.0
    %1305 = vmatprep.subr.mxu0 0.0
    %1306 = vmatpush1.msra.mxu0 %v1270
    %1307 = vmatprep.subr.mxu0 0.0
    %1308 = vmatpush2.msra.mxu0 0.0
    %1309 = vmatprep.subr.mxu0 0.0
    %1310 = vmatpush2.msra.mxu0 0.0
    %1311 = vmatprep.subr.mxu0 0.0
    %1312 = vmatpush2.msra.mxu0 0.0
    %1313 = vmatprep.subr.mxu0 0.0
    %1314 = vmatpush2.msra.mxu0 0.0
    %1315 = vmatprep.subr.mxu0 0.0
    %1316 = vmatpush2.msra.mxu0 0.0
    %1317 = vmatprep.subr.mxu0 0.0
    %1318 = vmatpush2.msra.mxu0 0.0
    %1319 = vmatprep.subr.mxu0 0.0
    %1320 = vmatpush2.msra.mxu0 0.0
    %1321 = vmatprep.subr.mxu0 0.0
    %1322 = vmatpush2.msra.mxu0 0.0
    %1323 = vmatprep.subr.mxu0 0.0
    %1324 = vmatpush2.msra.mxu0 0.0
    %1325 = vmatprep.subr.mxu0 0.0
    %1326 = vmatpush2.msra.mxu0 0.0
    %1327 = vmatprep.subr.mxu0 0.0
    %1328 = vmatpush2.msra.mxu0 0.0
    %1329 = vmatprep.subr.mxu0 0.0
    %1330 = vmatpush2.msra.mxu0 0.0
    %1331 = vmatprep.subr.mxu0 0.0
    %1332 = vmatpush2.msra.mxu0 0.0
    %1333 = vmatprep.subr.mxu0 0.0
    %1334 = vmatpush2.msra.mxu0 0.0
    %1335 = vmatprep.subr.mxu0 0.0
    %1336 = vmatpush2.msra.mxu0 0.0
    %1337 = vmatprep.subr.mxu0 0.0
    %1338 = vmatpush2.msra.mxu0 0.0
    %1339 = vmatprep.mubr.f32.mxu0 0.0
    %1340 = vmatmul.mubr.f32.gmra.mxu0 %v1273
    %v1341 = vpop.f32.mrf.mxu0
    %v1342 = vadd.f32 0.0, %v1341
    %v1343 = vpop.f32.mrf.mxu0
    %1344 = vdwg.mxu0
    %1345 = vrot.lane.b32.xlu0 %v219, 64
    %v1346 = vpop.permute.xlu0 %1345
    %v1349 = vsel %vm226, %v887, 0
    %1351 = vmatprep.subr.mxu0 0.0
    %1352 = vmatpush1.msra.mxu0 0.0
    %1353 = vmatprep.subr.mxu0 0.0
    %1354 = vmatpush1.msra.mxu0 0.0
    %1355 = vmatprep.subr.mxu0 0.0
    %1356 = vmatpush1.msra.mxu0 0.0
    %1357 = vmatprep.subr.mxu0 0.0
    %1358 = vmatpush1.msra.mxu0 0.0
    %1359 = vmatprep.subr.mxu0 0.0
    %1360 = vmatpush1.msra.mxu0 0.0
    %1361 = vmatprep.subr.mxu0 0.0
    %1362 = vmatpush1.msra.mxu0 0.0
    %1363 = vmatprep.subr.mxu0 0.0
    %1364 = vmatpush1.msra.mxu0 0.0
    %1365 = vmatprep.subr.mxu0 0.0
    %1366 = vmatpush1.msra.mxu0 0.0
    %1367 = vmatprep.subr.mxu0 0.0
    %1368 = vmatpush1.msra.mxu0 0.0
    %1369 = vmatprep.subr.mxu0 0.0
    %1370 = vmatpush1.msra.mxu0 0.0
    %1371 = vmatprep.subr.mxu0 0.0
    %1372 = vmatpush1.msra.mxu0 0.0
    %1373 = vmatprep.subr.mxu0 0.0
    %1374 = vmatpush1.msra.mxu0 0.0
    %1375 = vmatprep.subr.mxu0 0.0
    %1376 = vmatpush1.msra.mxu0 0.0
    %1377 = vmatprep.subr.mxu0 0.0
    %1378 = vmatpush1.msra.mxu0 0.0
    %1379 = vmatprep.subr.mxu0 0.0
    %1380 = vmatpush1.msra.mxu0 0.0
    %1381 = vmatprep.subr.mxu0 0.0
    %1382 = vmatpush1.msra.mxu0 %v1346
    %1383 = vmatprep.subr.mxu0 0.0
    %1384 = vmatpush2.msra.mxu0 0.0
    %1385 = vmatprep.subr.mxu0 0.0
    %1386 = vmatpush2.msra.mxu0 0.0
    %1387 = vmatprep.subr.mxu0 0.0
    %1388 = vmatpush2.msra.mxu0 0.0
    %1389 = vmatprep.subr.mxu0 0.0
    %1390 = vmatpush2.msra.mxu0 0.0
    %1391 = vmatprep.subr.mxu0 0.0
    %1392 = vmatpush2.msra.mxu0 0.0
    %1393 = vmatprep.subr.mxu0 0.0
    %1394 = vmatpush2.msra.mxu0 0.0
    %1395 = vmatprep.subr.mxu0 0.0
    %1396 = vmatpush2.msra.mxu0 0.0
    %1397 = vmatprep.subr.mxu0 0.0
    %1398 = vmatpush2.msra.mxu0 0.0
    %1399 = vmatprep.subr.mxu0 0.0
    %1400 = vmatpush2.msra.mxu0 0.0
    %1401 = vmatprep.subr.mxu0 0.0
    %1402 = vmatpush2.msra.mxu0 0.0
    %1403 = vmatprep.subr.mxu0 0.0
    %1404 = vmatpush2.msra.mxu0 0.0
    %1405 = vmatprep.subr.mxu0 0.0
    %1406 = vmatpush2.msra.mxu0 0.0
    %1407 = vmatprep.subr.mxu0 0.0
    %1408 = vmatpush2.msra.mxu0 0.0
    %1409 = vmatprep.subr.mxu0 0.0
    %1410 = vmatpush2.msra.mxu0 0.0
    %1411 = vmatprep.subr.mxu0 0.0
    %1412 = vmatpush2.msra.mxu0 0.0
    %1413 = vmatprep.subr.mxu0 0.0
    %1414 = vmatpush2.msra.mxu0 0.0
    %1415 = vmatprep.mubr.f32.mxu0 0.0
    %1416 = vmatmul.mubr.f32.gmra.mxu0 %v1349
    %v1417 = vpop.f32.mrf.mxu0
    %v1418 = vadd.f32 0.0, %v1417
    %v1419 = vpop.f32.mrf.mxu0
    %1420 = vdwg.mxu0
    %1421 = vrot.lane.b32.xlu0 %v223, 64
    %v1422 = vpop.permute.xlu0 %1421
    %v1425 = vsel %vm226, %v888, 0
    %1427 = vmatprep.subr.mxu0 0.0
    %1428 = vmatpush1.msra.mxu0 0.0
    %1429 = vmatprep.subr.mxu0 0.0
    %1430 = vmatpush1.msra.mxu0 0.0
    %1431 = vmatprep.subr.mxu0 0.0
    %1432 = vmatpush1.msra.mxu0 0.0
    %1433 = vmatprep.subr.mxu0 0.0
    %1434 = vmatpush1.msra.mxu0 0.0
    %1435 = vmatprep.subr.mxu0 0.0
    %1436 = vmatpush1.msra.mxu0 0.0
    %1437 = vmatprep.subr.mxu0 0.0
    %1438 = vmatpush1.msra.mxu0 0.0
    %1439 = vmatprep.subr.mxu0 0.0
    %1440 = vmatpush1.msra.mxu0 0.0
    %1441 = vmatprep.subr.mxu0 0.0
    %1442 = vmatpush1.msra.mxu0 0.0
    %1443 = vmatprep.subr.mxu0 0.0
    %1444 = vmatpush1.msra.mxu0 0.0
    %1445 = vmatprep.subr.mxu0 0.0
    %1446 = vmatpush1.msra.mxu0 0.0
    %1447 = vmatprep.subr.mxu0 0.0
    %1448 = vmatpush1.msra.mxu0 0.0
    %1449 = vmatprep.subr.mxu0 0.0
    %1450 = vmatpush1.msra.mxu0 0.0
    %1451 = vmatprep.subr.mxu0 0.0
    %1452 = vmatpush1.msra.mxu0 0.0
    %1453 = vmatprep.subr.mxu0 0.0
    %1454 = vmatpush1.msra.mxu0 0.0
    %1455 = vmatprep.subr.mxu0 0.0
    %1456 = vmatpush1.msra.mxu0 0.0
    %1457 = vmatprep.subr.mxu0 0.0
    %1458 = vmatpush1.msra.mxu0 %v1422
    %1459 = vmatprep.subr.mxu0 0.0
    %1460 = vmatpush2.msra.mxu0 0.0
    %1461 = vmatprep.subr.mxu0 0.0
    %1462 = vmatpush2.msra.mxu0 0.0
    %1463 = vmatprep.subr.mxu0 0.0
    %1464 = vmatpush2.msra.mxu0 0.0
    %1465 = vmatprep.subr.mxu0 0.0
    %1466 = vmatpush2.msra.mxu0 0.0
    %1467 = vmatprep.subr.mxu0 0.0
    %1468 = vmatpush2.msra.mxu0 0.0
    %1469 = vmatprep.subr.mxu0 0.0
    %1470 = vmatpush2.msra.mxu0 0.0
    %1471 = vmatprep.subr.mxu0 0.0
    %1472 = vmatpush2.msra.mxu0 0.0
    %1473 = vmatprep.subr.mxu0 0.0
    %1474 = vmatpush2.msra.mxu0 0.0
    %1475 = vmatprep.subr.mxu0 0.0
    %1476 = vmatpush2.msra.mxu0 0.0
    %1477 = vmatprep.subr.mxu0 0.0
    %1478 = vmatpush2.msra.mxu0 0.0
    %1479 = vmatprep.subr.mxu0 0.0
    %1480 = vmatpush2.msra.mxu0 0.0
    %1481 = vmatprep.subr.mxu0 0.0
    %1482 = vmatpush2.msra.mxu0 0.0
    %1483 = vmatprep.subr.mxu0 0.0
    %1484 = vmatpush2.msra.mxu0 0.0
    %1485 = vmatprep.subr.mxu0 0.0
    %1486 = vmatpush2.msra.mxu0 0.0
    %1487 = vmatprep.subr.mxu0 0.0
    %1488 = vmatpush2.msra.mxu0 0.0
    %1489 = vmatprep.subr.mxu0 0.0
    %1490 = vmatpush2.msra.mxu0 0.0
    %1491 = vmatprep.mubr.f32.mxu0 0.0
    %1492 = vmatmul.mubr.f32.gmra.mxu0 %v1425
    %v1493 = vpop.f32.mrf.mxu0
    %v1494 = vadd.f32 0.0, %v1493
    %v1495 = vpop.f32.mrf.mxu0
    %1496 = vdwg.mxu0
    %1499 = vrot.lane.b32.xlu0 %v1038, 8
    %v1500 = vpop.permute.xlu0 %1499
    %1501 = vrot.lane.b32.xlu0 %v1342, 8
    %v1502 = vpop.permute.xlu0 %1501
    %1507 = vrot.lane.b32.xlu0 %v1114, 16
    %v1508 = vpop.permute.xlu0 %1507
    %1509 = vrot.lane.b32.xlu0 %v1418, 16
    %v1510 = vpop.permute.xlu0 %1509
    %1515 = vrot.lane.b32.xlu0 %v1190, 24
    %v1516 = vpop.permute.xlu0 %1515
    %1517 = vrot.lane.b32.xlu0 %v1494, 24
    %v1518 = vpop.permute.xlu0 %1517
    %v1521 = vsel %vm226, %v962, %v1500
    %v1522 = vsel %vm226, %v1266, %v1502
    %vm1523 = vcmask 130048
    %v1524 = vsel %vm1523, %v1521, %v1508
    %v1525 = vsel %vm1523, %v1522, %v1510
    %vm1526 = vcmask 195584
    %v1527 = vsel %vm1526, %v1524, %v1516
    %v1528 = vsel %vm1526, %v1525, %v1518
    %v1529 = vld [vmem:[%s5] sm:$0xff]
    %v1530 = vld [vmem:[%s5 + $0x8] sm:$0xff]
    %v1531 = vld [vmem:[%s5 + $0x10] sm:$0xff]
    %v1532 = vld [vmem:[%s5 + $0x18] sm:$0xff]
    %v1533 = vld [vmem:[%s6] sm:$0x1]
    %v1535 = vlaneseq
    %v1536 = vshrl.u32 %v1535, 7
    %v1537 = vsub.s32 0, %v1536
    %v1538 = vrot.slane %v1533, %v1537
    %v1541 = vsel %vm74, %v1527, 0
    %v1544 = vsel %vm74, %v1528, 0
    %1546 = vmatprep.subr.mxu0 0.0
    %1547 = vmatpush1.msra.mxu0 0.0
    %1548 = vmatprep.subr.mxu0 0.0
    %1549 = vmatpush1.msra.mxu0 0.0
    %1550 = vmatprep.subr.mxu0 0.0
    %1551 = vmatpush1.msra.mxu0 0.0
    %1552 = vmatprep.subr.mxu0 0.0
    %1553 = vmatpush1.msra.mxu0 0.0
    %1554 = vmatprep.subr.mxu0 0.0
    %1555 = vmatpush1.msra.mxu0 0.0
    %1556 = vmatprep.subr.mxu0 0.0
    %1557 = vmatpush1.msra.mxu0 0.0
    %1558 = vmatprep.subr.mxu0 0.0
    %1559 = vmatpush1.msra.mxu0 0.0
    %1560 = vmatprep.subr.mxu0 0.0
    %1561 = vmatpush1.msra.mxu0 0.0
    %1562 = vmatprep.subr.mxu0 0.0
    %1563 = vmatpush1.msra.mxu0 0.0
    %1564 = vmatprep.subr.mxu0 0.0
    %1565 = vmatpush1.msra.mxu0 0.0
    %1566 = vmatprep.subr.mxu0 0.0
    %1567 = vmatpush1.msra.mxu0 0.0
    %1568 = vmatprep.subr.mxu0 0.0
    %1569 = vmatpush1.msra.mxu0 0.0
    %1570 = vmatprep.subr.mxu0 0.0
    %1571 = vmatpush1.msra.mxu0 %v1532
    %1572 = vmatprep.subr.mxu0 0.0
    %1573 = vmatpush1.msra.mxu0 %v1531
    %1574 = vmatprep.subr.mxu0 0.0
    %1575 = vmatpush1.msra.mxu0 %v1530
    %1576 = vmatprep.subr.mxu0 0.0
    %1577 = vmatpush1.msra.mxu0 %v1529
    %1578 = vmatprep.subr.mxu0 0.0
    %1579 = vmatpush2.msra.mxu0 0.0
    %1580 = vmatprep.subr.mxu0 0.0
    %1581 = vmatpush2.msra.mxu0 0.0
    %1582 = vmatprep.subr.mxu0 0.0
    %1583 = vmatpush2.msra.mxu0 0.0
    %1584 = vmatprep.subr.mxu0 0.0
    %1585 = vmatpush2.msra.mxu0 0.0
    %1586 = vmatprep.subr.mxu0 0.0
    %1587 = vmatpush2.msra.mxu0 0.0
    %1588 = vmatprep.subr.mxu0 0.0
    %1589 = vmatpush2.msra.mxu0 0.0
    %1590 = vmatprep.subr.mxu0 0.0
    %1591 = vmatpush2.msra.mxu0 0.0
    %1592 = vmatprep.subr.mxu0 0.0
    %1593 = vmatpush2.msra.mxu0 0.0
    %1594 = vmatprep.subr.mxu0 0.0
    %1595 = vmatpush2.msra.mxu0 0.0
    %1596 = vmatprep.subr.mxu0 0.0
    %1597 = vmatpush2.msra.mxu0 0.0
    %1598 = vmatprep.subr.mxu0 0.0
    %1599 = vmatpush2.msra.mxu0 0.0
    %1600 = vmatprep.subr.mxu0 0.0
    %1601 = vmatpush2.msra.mxu0 0.0
    %1602 = vmatprep.subr.mxu0 0.0
    %1603 = vmatpush2.msra.mxu0 0.0
    %1604 = vmatprep.subr.mxu0 0.0
    %1605 = vmatpush2.msra.mxu0 0.0
    %1606 = vmatprep.subr.mxu0 0.0
    %1607 = vmatpush2.msra.mxu0 0.0
    %1608 = vmatprep.subr.mxu0 0.0
    %1609 = vmatpush2.msra.mxu0 0.0
    %1610 = vmatprep.mubr.f32.mxu0 0.0
    %1611 = vmatmul.mubr.f32.gmra.mxu0 %v1541
    %v1612 = vpop.f32.mrf.mxu0
    %v1613 = vadd.f32 %v1538, %v1612
    %v1614 = vpop.f32.mrf.mxu0
    %1615 = vmatprep.mubr.f32.mxu0 0.0
    %1616 = vmatmul.mubr.f32.gmra.mxu0 %v1544
    %v1617 = vpop.f32.mrf.mxu0
    %v1618 = vadd.f32 %v1538, %v1617
    %v1619 = vpop.f32.mrf.mxu0
    %1620 = vdwg.mxu0
    %v1621 = vadd.f32 %v116, %v1613
    %v1622 = vadd.f32 %v117, %v1618
    %v1623 = vld [vmem:[%s7] sm:$0x3]
    %v1624 = vsel %vm74, %v1621, 0.0
    %1625 = vadd.xlane.f32.xlu0 %v1624
    %v1626 = vpop.xlane.xlu0 %1625
    %v1627 = vsel %vm74, %v1622, 0.0
    %1628 = vadd.xlane.f32.xlu0 %v1627
    %v1629 = vpop.xlane.xlu0 %1628
    %v1630 = vmul.f32 %v1626, %v81
    %v1631 = vmul.f32 %v1629, %v81
    %v1632 = vmul.f32 %v1621, %v1621
    %v1633 = vmul.f32 %v1622, %v1622
    %v1634 = vsel %vm74, %v1632, 0.0
    %1635 = vadd.xlane.f32.xlu0 %v1634
    %v1636 = vpop.xlane.xlu0 %1635
    %v1637 = vsel %vm74, %v1633, 0.0
    %1638 = vadd.xlane.f32.xlu0 %v1637
    %v1639 = vpop.xlane.xlu0 %1638
    %v1640 = vmul.f32 %v1636, %v81
    %v1641 = vmul.f32 %v1639, %v81
    %v1642 = vmul.f32 %v1630, %v1630
    %v1643 = vmul.f32 %v1631, %v1631
    %v1644 = vsub.f32 %v1640, %v1642
    %v1645 = vsub.f32 %v1641, %v1643
    %v1646 = vsub.f32 %v1621, %v1630
    %v1647 = vsub.f32 %v1622, %v1631
    %v1648 = vadd.f32 %v1644, 1e-12
    %v1649 = vadd.f32 %v1645, 1e-12
    %v1650 = vrsqrt.pop %v1648
    %v1651 = vrsqrt.pop %v1649
    %v1652 = vmul.f32 %v1646, %v1650
    %v1653 = vmul.f32 %v1647, %v1651
    %v1654 = vlaneseq
    %v1655 = vshrl.u32 %v1654, 7
    %v1656 = vsub.s32 0, %v1655
    %v1657 = vrot.slane %v1623, %v1656
    %v1658 = vmul.f32 %v1652, %v1657
    %v1659 = vmul.f32 %v1653, %v1657
    %v1660 = vlaneseq
    %v1661 = vshrl.u32 %v1660, 7
    %v1662 = vsub.s32 1, %v1661
    %v1663 = vrot.slane %v1623, %v1662
    %v1664 = vadd.f32 %v1658, %v1663
    %v1665 = vadd.f32 %v1659, %v1663
    %v1666 = vld [vmem:[%s8] sm:$0xff]
    %v1667 = vld [vmem:[%s8 + $0x8] sm:$0xff]
    %v1668 = vld [vmem:[%s8 + $0x10] sm:$0xff]
    %v1669 = vld [vmem:[%s8 + $0x18] sm:$0xff]
    %v1670 = vld [vmem:[%s9] sm:$0x1]
    %v1672 = vlaneseq
    %v1673 = vshrl.u32 %v1672, 7
    %v1674 = vsub.s32 0, %v1673
    %v1675 = vrot.slane %v1670, %v1674
    %v1678 = vsel %vm74, %v1664, 0
    %v1681 = vsel %vm74, %v1665, 0
    %1683 = vmatprep.subr.mxu0 0.0
    %1684 = vmatpush1.msra.mxu0 0.0
    %1685 = vmatprep.subr.mxu0 0.0
    %1686 = vmatpush1.msra.mxu0 0.0
    %1687 = vmatprep.subr.mxu0 0.0
    %1688 = vmatpush1.msra.mxu0 0.0
    %1689 = vmatprep.subr.mxu0 0.0
    %1690 = vmatpush1.msra.mxu0 0.0
    %1691 = vmatprep.subr.mxu0 0.0
    %1692 = vmatpush1.msra.mxu0 0.0
    %1693 = vmatprep.subr.mxu0 0.0
    %1694 = vmatpush1.msra.mxu0 0.0
    %1695 = vmatprep.subr.mxu0 0.0
    %1696 = vmatpush1.msra.mxu0 0.0
    %1697 = vmatprep.subr.mxu0 0.0
    %1698 = vmatpush1.msra.mxu0 0.0
    %1699 = vmatprep.subr.mxu0 0.0
    %1700 = vmatpush1.msra.mxu0 0.0
    %1701 = vmatprep.subr.mxu0 0.0
    %1702 = vmatpush1.msra.mxu0 0.0
    %1703 = vmatprep.subr.mxu0 0.0
    %1704 = vmatpush1.msra.mxu0 0.0
    %1705 = vmatprep.subr.mxu0 0.0
    %1706 = vmatpush1.msra.mxu0 0.0
    %1707 = vmatprep.subr.mxu0 0.0
    %1708 = vmatpush1.msra.mxu0 %v1669
    %1709 = vmatprep.subr.mxu0 0.0
    %1710 = vmatpush1.msra.mxu0 %v1668
    %1711 = vmatprep.subr.mxu0 0.0
    %1712 = vmatpush1.msra.mxu0 %v1667
    %1713 = vmatprep.subr.mxu0 0.0
    %1714 = vmatpush1.msra.mxu0 %v1666
    %1715 = vmatprep.subr.mxu0 0.0
    %1716 = vmatpush2.msra.mxu0 0.0
    %1717 = vmatprep.subr.mxu0 0.0
    %1718 = vmatpush2.msra.mxu0 0.0
    %1719 = vmatprep.subr.mxu0 0.0
    %1720 = vmatpush2.msra.mxu0 0.0
    %1721 = vmatprep.subr.mxu0 0.0
    %1722 = vmatpush2.msra.mxu0 0.0
    %1723 = vmatprep.subr.mxu0 0.0
    %1724 = vmatpush2.msra.mxu0 0.0
    %1725 = vmatprep.subr.mxu0 0.0
    %1726 = vmatpush2.msra.mxu0 0.0
    %1727 = vmatprep.subr.mxu0 0.0
    %1728 = vmatpush2.msra.mxu0 0.0
    %1729 = vmatprep.subr.mxu0 0.0
    %1730 = vmatpush2.msra.mxu0 0.0
    %1731 = vmatprep.subr.mxu0 0.0
    %1732 = vmatpush2.msra.mxu0 0.0
    %1733 = vmatprep.subr.mxu0 0.0
    %1734 = vmatpush2.msra.mxu0 0.0
    %1735 = vmatprep.subr.mxu0 0.0
    %1736 = vmatpush2.msra.mxu0 0.0
    %1737 = vmatprep.subr.mxu0 0.0
    %1738 = vmatpush2.msra.mxu0 0.0
    %1739 = vmatprep.subr.mxu0 0.0
    %1740 = vmatpush2.msra.mxu0 0.0
    %1741 = vmatprep.subr.mxu0 0.0
    %1742 = vmatpush2.msra.mxu0 0.0
    %1743 = vmatprep.subr.mxu0 0.0
    %1744 = vmatpush2.msra.mxu0 0.0
    %1745 = vmatprep.subr.mxu0 0.0
    %1746 = vmatpush2.msra.mxu0 0.0
    %1747 = vmatprep.mubr.f32.mxu0 0.0
    %1748 = vmatmul.mubr.f32.gmra.mxu0 %v1678
    %v1749 = vpop.f32.mrf.mxu0
    %v1750 = vadd.f32 %v1675, %v1749
    %v1751 = vpop.f32.mrf.mxu0
    %1752 = vmatprep.mubr.f32.mxu0 0.0
    %1753 = vmatmul.mubr.f32.gmra.mxu0 %v1681
    %v1754 = vpop.f32.mrf.mxu0
    %v1755 = vadd.f32 %v1675, %v1754
    %v1756 = vpop.f32.mrf.mxu0
    %1757 = vdwg.mxu0
    %v1758 = vmul.f32 %v1750, 0.5
    %v1759 = vmul.f32 %v1755, 0.5
    %v1760 = vmul.f32 %v1750, 0.044715
    %v1761 = vmul.f32 %v1755, 0.044715
    %v1762 = vmul.f32 %v1760, %v1750
    %v1763 = vmul.f32 %v1761, %v1755
    %v1764 = vmul.f32 %v1762, %v1750
    %v1765 = vmul.f32 %v1763, %v1755
    %v1766 = vadd.f32 %v1750, %v1764
    %v1767 = vadd.f32 %v1755, %v1765
    %v1768 = vmul.f32 %v1766, 0.7978846
    %v1769 = vmul.f32 %v1767, 0.7978846
    %v1770 = vtanh.pop %v1768
    %v1771 = vtanh.pop %v1769
    %v1772 = vadd.f32 %v1770, 1.0
    %v1773 = vadd.f32 %v1771, 1.0
    %v1774 = vmul.f32 %v1758, %v1772
    %v1775 = vmul.f32 %v1759, %v1773
    %v1776 = vld [vmem:[%s10] sm:$0xff]
    %v1777 = vld [vmem:[%s10 + $0x8] sm:$0xff]
    %v1778 = vld [vmem:[%s10 + $0x10] sm:$0xff]
    %v1779 = vld [vmem:[%s10 + $0x18] sm:$0xff]
    %v1780 = vld [vmem:[%s10 + $0x20] sm:$0xff]
    %v1781 = vld [vmem:[%s10 + $0x28] sm:$0xff]
    %v1782 = vld [vmem:[%s10 + $0x30] sm:$0xff]
    %v1783 = vld [vmem:[%s10 + $0x38] sm:$0xff]
    %v1784 = vld [vmem:[%s11] sm:$0x1]
    %v1786 = vlaneseq
    %v1787 = vshrl.u32 %v1786, 7
    %v1788 = vsub.s32 0, %v1787
    %v1789 = vrot.slane %v1784, %v1788
    %vm1791 = vcmask 523264
    %v1793 = vsel %vm1791, %v1774, 0
    %v1796 = vsel %vm1791, %v1775, 0
    %1798 = vmatprep.subr.mxu0 0.0
    %1799 = vmatpush1.msra.mxu0 0.0
    %1800 = vmatprep.subr.mxu0 0.0
    %1801 = vmatpush1.msra.mxu0 0.0
    %1802 = vmatprep.subr.mxu0 0.0
    %1803 = vmatpush1.msra.mxu0 0.0
    %1804 = vmatprep.subr.mxu0 0.0
    %1805 = vmatpush1.msra.mxu0 0.0
    %1806 = vmatprep.subr.mxu0 0.0
    %1807 = vmatpush1.msra.mxu0 0.0
    %1808 = vmatprep.subr.mxu0 0.0
    %1809 = vmatpush1.msra.mxu0 0.0
    %1810 = vmatprep.subr.mxu0 0.0
    %1811 = vmatpush1.msra.mxu0 0.0
    %1812 = vmatprep.subr.mxu0 0.0
    %1813 = vmatpush1.msra.mxu0 0.0
    %1814 = vmatprep.subr.mxu0 0.0
    %1815 = vmatpush1.msra.mxu0 %v1783
    %1816 = vmatprep.subr.mxu0 0.0
    %1817 = vmatpush1.msra.mxu0 %v1782
    %1818 = vmatprep.subr.mxu0 0.0
    %1819 = vmatpush1.msra.mxu0 %v1781
    %1820 = vmatprep.subr.mxu0 0.0
    %1821 = vmatpush1.msra.mxu0 %v1780
    %1822 = vmatprep.subr.mxu0 0.0
    %1823 = vmatpush1.msra.mxu0 %v1779
    %1824 = vmatprep.subr.mxu0 0.0
    %1825 = vmatpush1.msra.mxu0 %v1778
    %1826 = vmatprep.subr.mxu0 0.0
    %1827 = vmatpush1.msra.mxu0 %v1777
    %1828 = vmatprep.subr.mxu0 0.0
    %1829 = vmatpush1.msra.mxu0 %v1776
    %1830 = vmatprep.subr.mxu0 0.0
    %1831 = vmatpush2.msra.mxu0 0.0
    %1832 = vmatprep.subr.mxu0 0.0
    %1833 = vmatpush2.msra.mxu0 0.0
    %1834 = vmatprep.subr.mxu0 0.0
    %1835 = vmatpush2.msra.mxu0 0.0
    %1836 = vmatprep.subr.mxu0 0.0
    %1837 = vmatpush2.msra.mxu0 0.0
    %1838 = vmatprep.subr.mxu0 0.0
    %1839 = vmatpush2.msra.mxu0 0.0
    %1840 = vmatprep.subr.mxu0 0.0
    %1841 = vmatpush2.msra.mxu0 0.0
    %1842 = vmatprep.subr.mxu0 0.0
    %1843 = vmatpush2.msra.mxu0 0.0
    %1844 = vmatprep.subr.mxu0 0.0
    %1845 = vmatpush2.msra.mxu0 0.0
    %1846 = vmatprep.subr.mxu0 0.0
    %1847 = vmatpush2.msra.mxu0 0.0
    %1848 = vmatprep.subr.mxu0 0.0
    %1849 = vmatpush2.msra.mxu0 0.0
    %1850 = vmatprep.subr.mxu0 0.0
    %1851 = vmatpush2.msra.mxu0 0.0
    %1852 = vmatprep.subr.mxu0 0.0
    %1853 = vmatpush2.msra.mxu0 0.0
    %1854 = vmatprep.subr.mxu0 0.0
    %1855 = vmatpush2.msra.mxu0 0.0
    %1856 = vmatprep.subr.mxu0 0.0
    %1857 = vmatpush2.msra.mxu0 0.0
    %1858 = vmatprep.subr.mxu0 0.0
    %1859 = vmatpush2.msra.mxu0 0.0
    %1860 = vmatprep.subr.mxu0 0.0
    %1861 = vmatpush2.msra.mxu0 0.0
    %1862 = vmatprep.mubr.f32.mxu0 0.0
    %1863 = vmatmul.mubr.f32.gmra.mxu0 %v1793
    %v1864 = vpop.f32.mrf.mxu0
    %v1865 = vadd.f32 %v1789, %v1864
    %v1866 = vpop.f32.mrf.mxu0
    %1867 = vmatprep.mubr.f32.mxu0 0.0
    %1868 = vmatmul.mubr.f32.gmra.mxu0 %v1796
    %v1869 = vpop.f32.mrf.mxu0
    %v1870 = vadd.f32 %v1789, %v1869
    %v1871 = vpop.f32.mrf.mxu0
    %1872 = vdwg.mxu0
    %v1873 = vadd.f32 %v1664, %v1865
    %v1874 = vadd.f32 %v1665, %v1870
    %v1875 = vld [vmem:[%s12] sm:$0x3]
    %v1876 = vsel %vm74, %v1873, 0.0
    %1877 = vadd.xlane.f32.xlu0 %v1876
    %v1878 = vpop.xlane.xlu0 %1877
    %v1879 = vsel %vm74, %v1874, 0.0
    %1880 = vadd.xlane.f32.xlu0 %v1879
    %v1881 = vpop.xlane.xlu0 %1880
    %v1882 = vmul.f32 %v1878, %v81
    %v1883 = vmul.f32 %v1881, %v81
    %v1884 = vmul.f32 %v1873, %v1873
    %v1885 = vmul.f32 %v1874, %v1874
    %v1886 = vsel %vm74, %v1884, 0.0
    %1887 = vadd.xlane.f32.xlu0 %v1886
    %v1888 = vpop.xlane.xlu0 %1887
    %v1889 = vsel %vm74, %v1885, 0.0
    %1890 = vadd.xlane.f32.xlu0 %v1889
    %v1891 = vpop.xlane.xlu0 %1890
    %v1892 = vmul.f32 %v1888, %v81
    %v1893 = vmul.f32 %v1891, %v81
    %v1894 = vmul.f32 %v1882, %v1882
    %v1895 = vmul.f32 %v1883, %v1883
    %v1896 = vsub.f32 %v1892, %v1894
    %v1897 = vsub.f32 %v1893, %v1895
    %v1898 = vsub.f32 %v1873, %v1882
    %v1899 = vsub.f32 %v1874, %v1883
    %v1900 = vadd.f32 %v1896, 1e-12
    %v1901 = vadd.f32 %v1897, 1e-12
    %v1902 = vrsqrt.pop %v1900
    %v1903 = vrsqrt.pop %v1901
    %v1904 = vmul.f32 %v1898, %v1902
    %v1905 = vmul.f32 %v1899, %v1903
    %v1906 = vlaneseq
    %v1907 = vshrl.u32 %v1906, 7
    %v1908 = vsub.s32 0, %v1907
    %v1909 = vrot.slane %v1875, %v1908
    %v1910 = vmul.f32 %v1904, %v1909
    %v1911 = vmul.f32 %v1905, %v1909
    %v1912 = vlaneseq
    %v1913 = vshrl.u32 %v1912, 7
    %v1914 = vsub.s32 1, %v1913
    %v1915 = vrot.slane %v1875, %v1914
    %v1916 = vadd.f32 %v1910, %v1915
    %v1917 = vadd.f32 %v1911, %v1915
    %s1918 = scalar_lea.vmem %s3, 32
    %v1919 = vld [vmem:[%s1918] sm:$0xff]
    %v1920 = vld [vmem:[%s1918 + $0x8] sm:$0xff]
    %v1921 = vld [vmem:[%s1918 + $0x10] sm:$0xff]
    %v1922 = vld [vmem:[%s1918 + $0x18] sm:$0xff]
    %s1923 = scalar_lea.vmem %s4, 1
    %v1924 = vld [vmem:[%s1923] sm:$0x1]
    %v1926 = vlaneseq
    %v1927 = vshrl.u32 %v1926, 7
    %v1928 = vsub.s32 0, %v1927
    %v1929 = vrot.slane %v1924, %v1928
    %v1932 = vsel %vm74, %v1916, 0
    %v1935 = vsel %vm74, %v1917, 0
    %1937 = vmatprep.subr.mxu0 0.0
    %1938 = vmatpush1.msra.mxu0 0.0
    %1939 = vmatprep.subr.mxu0 0.0
    %1940 = vmatpush1.msra.mxu0 0.0
    %1941 = vmatprep.subr.mxu0 0.0
    %1942 = vmatpush1.msra.mxu0 0.0
    %1943 = vmatprep.subr.mxu0 0.0
    %1944 = vmatpush1.msra.mxu0 0.0
    %1945 = vmatprep.subr.mxu0 0.0
    %1946 = vmatpush1.msra.mxu0 0.0
    %1947 = vmatprep.subr.mxu0 0.0
    %1948 = vmatpush1.msra.mxu0 0.0
    %1949 = vmatprep.subr.mxu0 0.0
    %1950 = vmatpush1.msra.mxu0 0.0
    %1951 = vmatprep.subr.mxu0 0.0
    %1952 = vmatpush1.msra.mxu0 0.0
    %1953 = vmatprep.subr.mxu0 0.0
    %1954 = vmatpush1.msra.mxu0 0.0
    %1955 = vmatprep.subr.mxu0 0.0
    %1956 = vmatpush1.msra.mxu0 0.0
    %1957 = vmatprep.subr.mxu0 0.0
    %1958 = vmatpush1.msra.mxu0 0.0
    %1959 = vmatprep.subr.mxu0 0.0
    %1960 = vmatpush1.msra.mxu0 0.0
    %1961 = vmatprep.subr.mxu0 0.0
    %1962 = vmatpush1.msra.mxu0 %v1922
    %1963 = vmatprep.subr.mxu0 0.0
    %1964 = vmatpush1.msra.mxu0 %v1921
    %1965 = vmatprep.subr.mxu0 0.0
    %1966 = vmatpush1.msra.mxu0 %v1920
    %1967 = vmatprep.subr.mxu0 0.0
    %1968 = vmatpush1.msra.mxu0 %v1919
    %1969 = vmatprep.subr.mxu0 0.0
    %1970 = vmatpush2.msra.mxu0 0.0
    %1971 = vmatprep.subr.mxu0 0.0
    %1972 = vmatpush2.msra.mxu0 0.0
    %1973 = vmatprep.subr.mxu0 0.0
    %1974 = vmatpush2.msra.mxu0 0.0
    %1975 = vmatprep.subr.mxu0 0.0
    %1976 = vmatpush2.msra.mxu0 0.0
    %1977 = vmatprep.subr.mxu0 0.0
    %1978 = vmatpush2.msra.mxu0 0.0
    %1979 = vmatprep.subr.mxu0 0.0
    %1980 = vmatpush2.msra.mxu0 0.0
    %1981 = vmatprep.subr.mxu0 0.0
    %1982 = vmatpush2.msra.mxu0 0.0
    %1983 = vmatprep.subr.mxu0 0.0
    %1984 = vmatpush2.msra.mxu0 0.0
    %1985 = vmatprep.subr.mxu0 0.0
    %1986 = vmatpush2.msra.mxu0 0.0
    %1987 = vmatprep.subr.mxu0 0.0
    %1988 = vmatpush2.msra.mxu0 0.0
    %1989 = vmatprep.subr.mxu0 0.0
    %1990 = vmatpush2.msra.mxu0 0.0
    %1991 = vmatprep.subr.mxu0 0.0
    %1992 = vmatpush2.msra.mxu0 0.0
    %1993 = vmatprep.subr.mxu0 0.0
    %1994 = vmatpush2.msra.mxu0 0.0
    %1995 = vmatprep.subr.mxu0 0.0
    %1996 = vmatpush2.msra.mxu0 0.0
    %1997 = vmatprep.subr.mxu0 0.0
    %1998 = vmatpush2.msra.mxu0 0.0
    %1999 = vmatprep.subr.mxu0 0.0
    %2000 = vmatpush2.msra.mxu0 0.0
    %2001 = vmatprep.mubr.f32.mxu0 0.0
    %2002 = vmatmul.mubr.f32.gmra.mxu0 %v1932
    %v2003 = vpop.f32.mrf.mxu0
    %v2004 = vadd.f32 %v1929, %v2003
    %v2005 = vpop.f32.mrf.mxu0
    %2006 = vmatprep.mubr.f32.mxu0 0.0
    %2007 = vmatmul.mubr.f32.gmra.mxu0 %v1935
    %v2008 = vpop.f32.mrf.mxu0
    %v2009 = vadd.f32 %v1929, %v2008
    %v2010 = vpop.f32.mrf.mxu0
    %2011 = vdwg.mxu0
    %2014 = vrot.lane.b32.xlu0 %v2004, 120
    %v2015 = vpop.permute.xlu0 %2014
    %2016 = vrot.lane.b32.xlu0 %v2009, 120
    %v2017 = vpop.permute.xlu0 %2016
    %2018 = vrot.lane.b32.xlu0 %v2004, 112
    %v2019 = vpop.permute.xlu0 %2018
    %2020 = vrot.lane.b32.xlu0 %v2009, 112
    %v2021 = vpop.permute.xlu0 %2020
    %2022 = vrot.lane.b32.xlu0 %v2004, 104
    %v2023 = vpop.permute.xlu0 %2022
    %2024 = vrot.lane.b32.xlu0 %v2009, 104
    %v2025 = vpop.permute.xlu0 %2024
    %2026 = vrot.lane.b32.xlu0 %v2004, 96
    %v2027 = vpop.permute.xlu0 %2026
    %v2028 = vsel %vm226, %v2004, 0
    %v2030 = vsel %vm226, %v2027, 0
    %2032 = vmatprep.subr.mxu0 0.0
    %2033 = vmatpush1.xpose.msra.mxu0 0.0
    %2034 = vmatprep.subr.mxu0 0.0
    %2035 = vmatpush1.xpose.msra.mxu0 0.0
    %2036 = vmatprep.subr.mxu0 0.0
    %2037 = vmatpush1.xpose.msra.mxu0 0.0
    %2038 = vmatprep.subr.mxu0 0.0
    %2039 = vmatpush1.xpose.msra.mxu0 0.0
    %2040 = vmatprep.subr.mxu0 0.0
    %2041 = vmatpush1.xpose.msra.mxu0 0.0
    %2042 = vmatprep.subr.mxu0 0.0
    %2043 = vmatpush1.xpose.msra.mxu0 0.0
    %2044 = vmatprep.subr.mxu0 0.0
    %2045 = vmatpush1.xpose.msra.mxu0 0.0
    %2046 = vmatprep.subr.mxu0 0.0
    %2047 = vmatpush1.xpose.msra.mxu0 0.0
    %2048 = vmatprep.subr.mxu0 0.0
    %2049 = vmatpush1.xpose.msra.mxu0 0.0
    %2050 = vmatprep.subr.mxu0 0.0
    %2051 = vmatpush1.xpose.msra.mxu0 0.0
    %2052 = vmatprep.subr.mxu0 0.0
    %2053 = vmatpush1.xpose.msra.mxu0 0.0
    %2054 = vmatprep.subr.mxu0 0.0
    %2055 = vmatpush1.xpose.msra.mxu0 0.0
    %2056 = vmatprep.subr.mxu0 0.0
    %2057 = vmatpush1.xpose.msra.mxu0 0.0
    %2058 = vmatprep.subr.mxu0 0.0
    %2059 = vmatpush1.xpose.msra.mxu0 0.0
    %2060 = vmatprep.subr.mxu0 0.0
    %2061 = vmatpush1.xpose.msra.mxu0 0.0
    %2062 = vmatprep.subr.mxu0 0.0
    %2063 = vmatpush1.xpose.msra.mxu0 %v2030
    %2064 = vmatprep.subr.mxu0 0.0
    %2065 = vmatpush2.xpose.msra.mxu0 0.0
    %2066 = vmatprep.subr.mxu0 0.0
    %2067 = vmatpush2.xpose.msra.mxu0 0.0
    %2068 = vmatprep.subr.mxu0 0.0
    %2069 = vmatpush2.xpose.msra.mxu0 0.0
    %2070 = vmatprep.subr.mxu0 0.0
    %2071 = vmatpush2.xpose.msra.mxu0 0.0
    %2072 = vmatprep.subr.mxu0 0.0
    %2073 = vmatpush2.xpose.msra.mxu0 0.0
    %2074 = vmatprep.subr.mxu0 0.0
    %2075 = vmatpush2.xpose.msra.mxu0 0.0
    %2076 = vmatprep.subr.mxu0 0.0
    %2077 = vmatpush2.xpose.msra.mxu0 0.0
    %2078 = vmatprep.subr.mxu0 0.0
    %2079 = vmatpush2.xpose.msra.mxu0 0.0
    %2080 = vmatprep.subr.mxu0 0.0
    %2081 = vmatpush2.xpose.msra.mxu0 0.0
    %2082 = vmatprep.subr.mxu0 0.0
    %2083 = vmatpush2.xpose.msra.mxu0 0.0
    %2084 = vmatprep.subr.mxu0 0.0
    %2085 = vmatpush2.xpose.msra.mxu0 0.0
    %2086 = vmatprep.subr.mxu0 0.0
    %2087 = vmatpush2.xpose.msra.mxu0 0.0
    %2088 = vmatprep.subr.mxu0 0.0
    %2089 = vmatpush2.xpose.msra.mxu0 0.0
    %2090 = vmatprep.subr.mxu0 0.0
    %2091 = vmatpush2.xpose.msra.mxu0 0.0
    %2092 = vmatprep.subr.mxu0 0.0
    %2093 = vmatpush2.xpose.msra.mxu0 0.0
    %2094 = vmatprep.subr.mxu0 0.0
    %2095 = vmatpush2.xpose.msra.mxu0 0.0
    %2096 = vmatprep.mubr.f32.mxu0 0.0
    %2097 = vmatmul.mubr.f32.gmra.mxu0 %v2028
    %v2098 = vpop.f32.mrf.mxu0
    %v2099 = vadd.f32 %v64, %v2098
    %v2100 = vpop.f32.mrf.mxu0
    %2101 = vdwg.mxu0
    %2102 = vrot.lane.b32.xlu0 %v2015, 96
    %v2103 = vpop.permute.xlu0 %2102
    %v2104 = vsel %vm226, %v2015, 0
    %v2106 = vsel %vm226, %v2103, 0
    %2108 = vmatprep.subr.mxu0 0.0
    %2109 = vmatpush1.xpose.msra.mxu0 0.0
    %2110 = vmatprep.subr.mxu0 0.0
    %2111 = vmatpush1.xpose.msra.mxu0 0.0
    %2112 = vmatprep.subr.mxu0 0.0
    %2113 = vmatpush1.xpose.msra.mxu0 0.0
    %2114 = vmatprep.subr.mxu0 0.0
    %2115 = vmatpush1.xpose.msra.mxu0 0.0
    %2116 = vmatprep.subr.mxu0 0.0
    %2117 = vmatpush1.xpose.msra.mxu0 0.0
    %2118 = vmatprep.subr.mxu0 0.0
    %2119 = vmatpush1.xpose.msra.mxu0 0.0
    %2120 = vmatprep.subr.mxu0 0.0
    %2121 = vmatpush1.xpose.msra.mxu0 0.0
    %2122 = vmatprep.subr.mxu0 0.0
    %2123 = vmatpush1.xpose.msra.mxu0 0.0
    %2124 = vmatprep.subr.mxu0 0.0
    %2125 = vmatpush1.xpose.msra.mxu0 0.0
    %2126 = vmatprep.subr.mxu0 0.0
    %2127 = vmatpush1.xpose.msra.mxu0 0.0
    %2128 = vmatprep.subr.mxu0 0.0
    %2129 = vmatpush1.xpose.msra.mxu0 0.0
    %2130 = vmatprep.subr.mxu0 0.0
    %2131 = vmatpush1.xpose.msra.mxu0 0.0
    %2132 = vmatprep.subr.mxu0 0.0
    %2133 = vmatpush1.xpose.msra.mxu0 0.0
    %2134 = vmatprep.subr.mxu0 0.0
    %2135 = vmatpush1.xpose.msra.mxu0 0.0
    %2136 = vmatprep.subr.mxu0 0.0
    %2137 = vmatpush1.xpose.msra.mxu0 0.0
    %2138 = vmatprep.subr.mxu0 0.0
    %2139 = vmatpush1.xpose.msra.mxu0 %v2106
    %2140 = vmatprep.subr.mxu0 0.0
    %2141 = vmatpush2.xpose.msra.mxu0 0.0
    %2142 = vmatprep.subr.mxu0 0.0
    %2143 = vmatpush2.xpose.msra.mxu0 0.0
    %2144 = vmatprep.subr.mxu0 0.0
    %2145 = vmatpush2.xpose.msra.mxu0 0.0
    %2146 = vmatprep.subr.mxu0 0.0
    %2147 = vmatpush2.xpose.msra.mxu0 0.0
    %2148 = vmatprep.subr.mxu0 0.0
    %2149 = vmatpush2.xpose.msra.mxu0 0.0
    %2150 = vmatprep.subr.mxu0 0.0
    %2151 = vmatpush2.xpose.msra.mxu0 0.0
    %2152 = vmatprep.subr.mxu0 0.0
    %2153 = vmatpush2.xpose.msra.mxu0 0.0
    %2154 = vmatprep.subr.mxu0 0.0
    %2155 = vmatpush2.xpose.msra.mxu0 0.0
    %2156 = vmatprep.subr.mxu0 0.0
    %2157 = vmatpush2.xpose.msra.mxu0 0.0
    %2158 = vmatprep.subr.mxu0 0.0
    %2159 = vmatpush2.xpose.msra.mxu0 0.0
    %2160 = vmatprep.subr.mxu0 0.0
    %2161 = vmatpush2.xpose.msra.mxu0 0.0
    %2162 = vmatprep.subr.mxu0 0.0
    %2163 = vmatpush2.xpose.msra.mxu0 0.0
    %2164 = vmatprep.subr.mxu0 0.0
    %2165 = vmatpush2.xpose.msra.mxu0 0.0
    %2166 = vmatprep.subr.mxu0 0.0
    %2167 = vmatpush2.xpose.msra.mxu0 0.0
    %2168 = vmatprep.subr.mxu0 0.0
    %2169 = vmatpush2.xpose.msra.mxu0 0.0
    %2170 = vmatprep.subr.mxu0 0.0
    %2171 = vmatpush2.xpose.msra.mxu0 0.0
    %2172 = vmatprep.mubr.f32.mxu0 0.0
    %2173 = vmatmul.mubr.f32.gmra.mxu0 %v2104
    %v2174 = vpop.f32.mrf.mxu0
    %v2175 = vadd.f32 %v64, %v2174
    %v2176 = vpop.f32.mrf.mxu0
    %2177 = vdwg.mxu0
    %2178 = vrot.lane.b32.xlu0 %v2019, 96
    %v2179 = vpop.permute.xlu0 %2178
    %v2180 = vsel %vm226, %v2019, 0
    %v2182 = vsel %vm226, %v2179, 0
    %2184 = vmatprep.subr.mxu0 0.0
    %2185 = vmatpush1.xpose.msra.mxu0 0.0
    %2186 = vmatprep.subr.mxu0 0.0
    %2187 = vmatpush1.xpose.msra.mxu0 0.0
    %2188 = vmatprep.subr.mxu0 0.0
    %2189 = vmatpush1.xpose.msra.mxu0 0.0
    %2190 = vmatprep.subr.mxu0 0.0
    %2191 = vmatpush1.xpose.msra.mxu0 0.0
    %2192 = vmatprep.subr.mxu0 0.0
    %2193 = vmatpush1.xpose.msra.mxu0 0.0
    %2194 = vmatprep.subr.mxu0 0.0
    %2195 = vmatpush1.xpose.msra.mxu0 0.0
    %2196 = vmatprep.subr.mxu0 0.0
    %2197 = vmatpush1.xpose.msra.mxu0 0.0
    %2198 = vmatprep.subr.mxu0 0.0
    %2199 = vmatpush1.xpose.msra.mxu0 0.0
    %2200 = vmatprep.subr.mxu0 0.0
    %2201 = vmatpush1.xpose.msra.mxu0 0.0
    %2202 = vmatprep.subr.mxu0 0.0
    %2203 = vmatpush1.xpose.msra.mxu0 0.0
    %2204 = vmatprep.subr.mxu0 0.0
    %2205 = vmatpush1.xpose.msra.mxu0 0.0
    %2206 = vmatprep.subr.mxu0 0.0
    %2207 = vmatpush1.xpose.msra.mxu0 0.0
    %2208 = vmatprep.subr.mxu0 0.0
    %2209 = vmatpush1.xpose.msra.mxu0 0.0
    %2210 = vmatprep.subr.mxu0 0.0
    %2211 = vmatpush1.xpose.msra.mxu0 0.0
    %2212 = vmatprep.subr.mxu0 0.0
    %2213 = vmatpush1.xpose.msra.mxu0 0.0
    %2214 = vmatprep.subr.mxu0 0.0
    %2215 = vmatpush1.xpose.msra.mxu0 %v2182
    %2216 = vmatprep.subr.mxu0 0.0
    %2217 = vmatpush2.xpose.msra.mxu0 0.0
    %2218 = vmatprep.subr.mxu0 0.0
    %2219 = vmatpush2.xpose.msra.mxu0 0.0
    %2220 = vmatprep.subr.mxu0 0.0
    %2221 = vmatpush2.xpose.msra.mxu0 0.0
    %2222 = vmatprep.subr.mxu0 0.0
    %2223 = vmatpush2.xpose.msra.mxu0 0.0
    %2224 = vmatprep.subr.mxu0 0.0
    %2225 = vmatpush2.xpose.msra.mxu0 0.0
    %2226 = vmatprep.subr.mxu0 0.0
    %2227 = vmatpush2.xpose.msra.mxu0 0.0
    %2228 = vmatprep.subr.mxu0 0.0
    %2229 = vmatpush2.xpose.msra.mxu0 0.0
    %2230 = vmatprep.subr.mxu0 0.0
    %2231 = vmatpush2.xpose.msra.mxu0 0.0
    %2232 = vmatprep.subr.mxu0 0.0
    %2233 = vmatpush2.xpose.msra.mxu0 0.0
    %2234 = vmatprep.subr.mxu0 0.0
    %2235 = vmatpush2.xpose.msra.mxu0 0.0
    %2236 = vmatprep.subr.mxu0 0.0
    %2237 = vmatpush2.xpose.msra.mxu0 0.0
    %2238 = vmatprep.subr.mxu0 0.0
    %2239 = vmatpush2.xpose.msra.mxu0 0.0
    %2240 = vmatprep.subr.mxu0 0.0
    %2241 = vmatpush2.xpose.msra.mxu0 0.0
    %2242 = vmatprep.subr.mxu0 0.0
    %2243 = vmatpush2.xpose.msra.mxu0 0.0
    %2244 = vmatprep.subr.mxu0 0.0
    %2245 = vmatpush2.xpose.msra.mxu0 0.0
    %2246 = vmatprep.subr.mxu0 0.0
    %2247 = vmatpush2.xpose.msra.mxu0 0.0
    %2248 = vmatprep.mubr.f32.mxu0 0.0
    %2249 = vmatmul.mubr.f32.gmra.mxu0 %v2180
    %v2250 = vpop.f32.mrf.mxu0
    %v2251 = vadd.f32 %v64, %v2250
    %v2252 = vpop.f32.mrf.mxu0
    %2253 = vdwg.mxu0
    %2254 = vrot.lane.b32.xlu0 %v2023, 96
    %v2255 = vpop.permute.xlu0 %2254
    %v2256 = vsel %vm226, %v2023, 0
    %v2258 = vsel %vm226, %v2255, 0
    %2260 = vmatprep.subr.mxu0 0.0
    %2261 = vmatpush1.xpose.msra.mxu0 0.0
    %2262 = vmatprep.subr.mxu0 0.0
    %2263 = vmatpush1.xpose.msra.mxu0 0.0
    %2264 = vmatprep.subr.mxu0 0.0
    %2265 = vmatpush1.xpose.msra.mxu0 0.0
    %2266 = vmatprep.subr.mxu0 0.0
    %2267 = vmatpush1.xpose.msra.mxu0 0.0
    %2268 = vmatprep.subr.mxu0 0.0
    %2269 = vmatpush1.xpose.msra.mxu0 0.0
    %2270 = vmatprep.subr.mxu0 0.0
    %2271 = vmatpush1.xpose.msra.mxu0 0.0
    %2272 = vmatprep.subr.mxu0 0.0
    %2273 = vmatpush1.xpose.msra.mxu0 0.0
    %2274 = vmatprep.subr.mxu0 0.0
    %2275 = vmatpush1.xpose.msra.mxu0 0.0
    %2276 = vmatprep.subr.mxu0 0.0
    %2277 = vmatpush1.xpose.msra.mxu0 0.0
    %2278 = vmatprep.subr.mxu0 0.0
    %2279 = vmatpush1.xpose.msra.mxu0 0.0
    %2280 = vmatprep.subr.mxu0 0.0
    %2281 = vmatpush1.xpose.msra.mxu0 0.0
    %2282 = vmatprep.subr.mxu0 0.0
    %2283 = vmatpush1.xpose.msra.mxu0 0.0
    %2284 = vmatprep.subr.mxu0 0.0
    %2285 = vmatpush1.xpose.msra.mxu0 0.0
    %2286 = vmatprep.subr.mxu0 0.0
    %2287 = vmatpush1.xpose.msra.mxu0 0.0
    %2288 = vmatprep.subr.mxu0 0.0
    %2289 = vmatpush1.xpose.msra.mxu0 0.0
    %2290 = vmatprep.subr.mxu0 0.0
    %2291 = vmatpush1.xpose.msra.mxu0 %v2258
    %2292 = vmatprep.subr.mxu0 0.0
    %2293 = vmatpush2.xpose.msra.mxu0 0.0
    %2294 = vmatprep.subr.mxu0 0.0
    %2295 = vmatpush2.xpose.msra.mxu0 0.0
    %2296 = vmatprep.subr.mxu0 0.0
    %2297 = vmatpush2.xpose.msra.mxu0 0.0
    %2298 = vmatprep.subr.mxu0 0.0
    %2299 = vmatpush2.xpose.msra.mxu0 0.0
    %2300 = vmatprep.subr.mxu0 0.0
    %2301 = vmatpush2.xpose.msra.mxu0 0.0
    %2302 = vmatprep.subr.mxu0 0.0
    %2303 = vmatpush2.xpose.msra.mxu0 0.0
    %2304 = vmatprep.subr.mxu0 0.0
    %2305 = vmatpush2.xpose.msra.mxu0 0.0
    %2306 = vmatprep.subr.mxu0 0.0
    %2307 = vmatpush2.xpose.msra.mxu0 0.0
    %2308 = vmatprep.subr.mxu0 0.0
    %2309 = vmatpush2.xpose.msra.mxu0 0.0
    %2310 = vmatprep.subr.mxu0 0.0
    %2311 = vmatpush2.xpose.msra.mxu0 0.0
    %2312 = vmatprep.subr.mxu0 0.0
    %2313 = vmatpush2.xpose.msra.mxu0 0.0
    %2314 = vmatprep.subr.mxu0 0.0
    %2315 = vmatpush2.xpose.msra.mxu0 0.0
    %2316 = vmatprep.subr.mxu0 0.0
    %2317 = vmatpush2.xpose.msra.mxu0 0.0
    %2318 = vmatprep.subr.mxu0 0.0
    %2319 = vmatpush2.xpose.msra.mxu0 0.0
    %2320 = vmatprep.subr.mxu0 0.0
    %2321 = vmatpush2.xpose.msra.mxu0 0.0
    %2322 = vmatprep.subr.mxu0 0.0
    %2323 = vmatpush2.xpose.msra.mxu0 0.0
    %2324 = vmatprep.mubr.f32.mxu0 0.0
    %2325 = vmatmul.mubr.f32.gmra.mxu0 %v2256
    %v2326 = vpop.f32.mrf.mxu0
    %v2327 = vadd.f32 %v64, %v2326
    %v2328 = vpop.f32.mrf.mxu0
    %2329 = vdwg.mxu0
    %2330 = vrot.lane.b32.xlu0 %v2009, 96
    %v2331 = vpop.permute.xlu0 %2330
    %v2332 = vsel %vm226, %v2009, 0
    %v2334 = vsel %vm226, %v2331, 0
    %2336 = vmatprep.subr.mxu0 0.0
    %2337 = vmatpush1.xpose.msra.mxu0 0.0
    %2338 = vmatprep.subr.mxu0 0.0
    %2339 = vmatpush1.xpose.msra.mxu0 0.0
    %2340 = vmatprep.subr.mxu0 0.0
    %2341 = vmatpush1.xpose.msra.mxu0 0.0
    %2342 = vmatprep.subr.mxu0 0.0
    %2343 = vmatpush1.xpose.msra.mxu0 0.0
    %2344 = vmatprep.subr.mxu0 0.0
    %2345 = vmatpush1.xpose.msra.mxu0 0.0
    %2346 = vmatprep.subr.mxu0 0.0
    %2347 = vmatpush1.xpose.msra.mxu0 0.0
    %2348 = vmatprep.subr.mxu0 0.0
    %2349 = vmatpush1.xpose.msra.mxu0 0.0
    %2350 = vmatprep.subr.mxu0 0.0
    %2351 = vmatpush1.xpose.msra.mxu0 0.0
    %2352 = vmatprep.subr.mxu0 0.0
    %2353 = vmatpush1.xpose.msra.mxu0 0.0
    %2354 = vmatprep.subr.mxu0 0.0
    %2355 = vmatpush1.xpose.msra.mxu0 0.0
    %2356 = vmatprep.subr.mxu0 0.0
    %2357 = vmatpush1.xpose.msra.mxu0 0.0
    %2358 = vmatprep.subr.mxu0 0.0
    %2359 = vmatpush1.xpose.msra.mxu0 0.0
    %2360 = vmatprep.subr.mxu0 0.0
    %2361 = vmatpush1.xpose.msra.mxu0 0.0
    %2362 = vmatprep.subr.mxu0 0.0
    %2363 = vmatpush1.xpose.msra.mxu0 0.0
    %2364 = vmatprep.subr.mxu0 0.0
    %2365 = vmatpush1.xpose.msra.mxu0 0.0
    %2366 = vmatprep.subr.mxu0 0.0
    %2367 = vmatpush1.xpose.msra.mxu0 %v2334
    %2368 = vmatprep.subr.mxu0 0.0
    %2369 = vmatpush2.xpose.msra.mxu0 0.0
    %2370 = vmatprep.subr.mxu0 0.0
    %2371 = vmatpush2.xpose.msra.mxu0 0.0
    %2372 = vmatprep.subr.mxu0 0.0
    %2373 = vmatpush2.xpose.msra.mxu0 0.0
    %2374 = vmatprep.subr.mxu0 0.0
    %2375 = vmatpush2.xpose.msra.mxu0 0.0
    %2376 = vmatprep.subr.mxu0 0.0
    %2377 = vmatpush2.xpose.msra.mxu0 0.0
    %2378 = vmatprep.subr.mxu0 0.0
    %2379 = vmatpush2.xpose.msra.mxu0 0.0
    %2380 = vmatprep.subr.mxu0 0.0
    %2381 = vmatpush2.xpose.msra.mxu0 0.0
    %2382 = vmatprep.subr.mxu0 0.0
    %2383 = vmatpush2.xpose.msra.mxu0 0.0
    %2384 = vmatprep.subr.mxu0 0.0
    %2385 = vmatpush2.xpose.msra.mxu0 0.0
    %2386 = vmatprep.subr.mxu0 0.0
    %2387 = vmatpush2.xpose.msra.mxu0 0.0
    %2388 = vmatprep.subr.mxu0 0.0
    %2389 = vmatpush2.xpose.msra.mxu0 0.0
    %2390 = vmatprep.subr.mxu0 0.0
    %2391 = vmatpush2.xpose.msra.mxu0 0.0
    %2392 = vmatprep.subr.mxu0 0.0
    %2393 = vmatpush2.xpose.msra.mxu0 0.0
    %2394 = vmatprep.subr.mxu0 0.0
    %2395 = vmatpush2.xpose.msra.mxu0 0.0
    %2396 = vmatprep.subr.mxu0 0.0
    %2397 = vmatpush2.xpose.msra.mxu0 0.0
    %2398 = vmatprep.subr.mxu0 0.0
    %2399 = vmatpush2.xpose.msra.mxu0 0.0
    %2400 = vmatprep.mubr.f32.mxu0 0.0
    %2401 = vmatmul.mubr.f32.gmra.mxu0 %v2332
    %v2402 = vpop.f32.mrf.mxu0
    %v2403 = vadd.f32 %v68, %v2402
    %v2404 = vpop.f32.mrf.mxu0
    %2405 = vdwg.mxu0
    %2406 = vrot.lane.b32.xlu0 %v2017, 96
    %v2407 = vpop.permute.xlu0 %2406
    %v2408 = vsel %vm226, %v2017, 0
    %v2410 = vsel %vm226, %v2407, 0
    %2412 = vmatprep.subr.mxu0 0.0
    %2413 = vmatpush1.xpose.msra.mxu0 0.0
    %2414 = vmatprep.subr.mxu0 0.0
    %2415 = vmatpush1.xpose.msra.mxu0 0.0
    %2416 = vmatprep.subr.mxu0 0.0
    %2417 = vmatpush1.xpose.msra.mxu0 0.0
    %2418 = vmatprep.subr.mxu0 0.0
    %2419 = vmatpush1.xpose.msra.mxu0 0.0
    %2420 = vmatprep.subr.mxu0 0.0
    %2421 = vmatpush1.xpose.msra.mxu0 0.0
    %2422 = vmatprep.subr.mxu0 0.0
    %2423 = vmatpush1.xpose.msra.mxu0 0.0
    %2424 = vmatprep.subr.mxu0 0.0
    %2425 = vmatpush1.xpose.msra.mxu0 0.0
    %2426 = vmatprep.subr.mxu0 0.0
    %2427 = vmatpush1.xpose.msra.mxu0 0.0
    %2428 = vmatprep.subr.mxu0 0.0
    %2429 = vmatpush1.xpose.msra.mxu0 0.0
    %2430 = vmatprep.subr.mxu0 0.0
    %2431 = vmatpush1.xpose.msra.mxu0 0.0
    %2432 = vmatprep.subr.mxu0 0.0
    %2433 = vmatpush1.xpose.msra.mxu0 0.0
    %2434 = vmatprep.subr.mxu0 0.0
    %2435 = vmatpush1.xpose.msra.mxu0 0.0
    %2436 = vmatprep.subr.mxu0 0.0
    %2437 = vmatpush1.xpose.msra.mxu0 0.0
    %2438 = vmatprep.subr.mxu0 0.0
    %2439 = vmatpush1.xpose.msra.mxu0 0.0
    %2440 = vmatprep.subr.mxu0 0.0
    %2441 = vmatpush1.xpose.msra.mxu0 0.0
    %2442 = vmatprep.subr.mxu0 0.0
    %2443 = vmatpush1.xpose.msra.mxu0 %v2410
    %2444 = vmatprep.subr.mxu0 0.0
    %2445 = vmatpush2.xpose.msra.mxu0 0.0
    %2446 = vmatprep.subr.mxu0 0.0
    %2447 = vmatpush2.xpose.msra.mxu0 0.0
    %2448 = vmatprep.subr.mxu0 0.0
    %2449 = vmatpush2.xpose.msra.mxu0 0.0
    %2450 = vmatprep.subr.mxu0 0.0
    %2451 = vmatpush2.xpose.msra.mxu0 0.0
    %2452 = vmatprep.subr.mxu0 0.0
    %2453 = vmatpush2.xpose.msra.mxu0 0.0
    %2454 = vmatprep.subr.mxu0 0.0
    %2455 = vmatpush2.xpose.msra.mxu0 0.0
    %2456 = vmatprep.subr.mxu0 0.0
    %2457 = vmatpush2.xpose.msra.mxu0 0.0
    %2458 = vmatprep.subr.mxu0 0.0
    %2459 = vmatpush2.xpose.msra.mxu0 0.0
    %2460 = vmatprep.subr.mxu0 0.0
    %2461 = vmatpush2.xpose.msra.mxu0 0.0
    %2462 = vmatprep.subr.mxu0 0.0
    %2463 = vmatpush2.xpose.msra.mxu0 0.0
    %2464 = vmatprep.subr.mxu0 0.0
    %2465 = vmatpush2.xpose.msra.mxu0 0.0
    %2466 = vmatprep.subr.mxu0 0.0
    %2467 = vmatpush2.xpose.msra.mxu0 0.0
    %2468 = vmatprep.subr.mxu0 0.0
    %2469 = vmatpush2.xpose.msra.mxu0 0.0
    %2470 = vmatprep.subr.mxu0 0.0
    %2471 = vmatpush2.xpose.msra.mxu0 0.0
    %2472 = vmatprep.subr.mxu0 0.0
    %2473 = vmatpush2.xpose.msra.mxu0 0.0
    %2474 = vmatprep.subr.mxu0 0.0
    %2475 = vmatpush2.xpose.msra.mxu0 0.0
    %2476 = vmatprep.mubr.f32.mxu0 0.0
    %2477 = vmatmul.mubr.f32.gmra.mxu0 %v2408
    %v2478 = vpop.f32.mrf.mxu0
    %v2479 = vadd.f32 %v68, %v2478
    %v2480 = vpop.f32.mrf.mxu0
    %2481 = vdwg.mxu0
    %2482 = vrot.lane.b32.xlu0 %v2021, 96
    %v2483 = vpop.permute.xlu0 %2482
    %v2484 = vsel %vm226, %v2021, 0
    %v2486 = vsel %vm226, %v2483, 0
    %2488 = vmatprep.subr.mxu0 0.0
    %2489 = vmatpush1.xpose.msra.mxu0 0.0
    %2490 = vmatprep.subr.mxu0 0.0
    %2491 = vmatpush1.xpose.msra.mxu0 0.0
    %2492 = vmatprep.subr.mxu0 0.0
    %2493 = vmatpush1.xpose.msra.mxu0 0.0
    %2494 = vmatprep.subr.mxu0 0.0
    %2495 = vmatpush1.xpose.msra.mxu0 0.0
    %2496 = vmatprep.subr.mxu0 0.0
    %2497 = vmatpush1.xpose.msra.mxu0 0.0
    %2498 = vmatprep.subr.mxu0 0.0
    %2499 = vmatpush1.xpose.msra.mxu0 0.0
    %2500 = vmatprep.subr.mxu0 0.0
    %2501 = vmatpush1.xpose.msra.mxu0 0.0
    %2502 = vmatprep.subr.mxu0 0.0
    %2503 = vmatpush1.xpose.msra.mxu0 0.0
    %2504 = vmatprep.subr.mxu0 0.0
    %2505 = vmatpush1.xpose.msra.mxu0 0.0
    %2506 = vmatprep.subr.mxu0 0.0
    %2507 = vmatpush1.xpose.msra.mxu0 0.0
    %2508 = vmatprep.subr.mxu0 0.0
    %2509 = vmatpush1.xpose.msra.mxu0 0.0
    %2510 = vmatprep.subr.mxu0 0.0
    %2511 = vmatpush1.xpose.msra.mxu0 0.0
    %2512 = vmatprep.subr.mxu0 0.0
    %2513 = vmatpush1.xpose.msra.mxu0 0.0
    %2514 = vmatprep.subr.mxu0 0.0
    %2515 = vmatpush1.xpose.msra.mxu0 0.0
    %2516 = vmatprep.subr.mxu0 0.0
    %2517 = vmatpush1.xpose.msra.mxu0 0.0
    %2518 = vmatprep.subr.mxu0 0.0
    %2519 = vmatpush1.xpose.msra.mxu0 %v2486
    %2520 = vmatprep.subr.mxu0 0.0
    %2521 = vmatpush2.xpose.msra.mxu0 0.0
    %2522 = vmatprep.subr.mxu0 0.0
    %2523 = vmatpush2.xpose.msra.mxu0 0.0
    %2524 = vmatprep.subr.mxu0 0.0
    %2525 = vmatpush2.xpose.msra.mxu0 0.0
    %2526 = vmatprep.subr.mxu0 0.0
    %2527 = vmatpush2.xpose.msra.mxu0 0.0
    %2528 = vmatprep.subr.mxu0 0.0
    %2529 = vmatpush2.xpose.msra.mxu0 0.0
    %2530 = vmatprep.subr.mxu0 0.0
    %2531 = vmatpush2.xpose.msra.mxu0 0.0
    %2532 = vmatprep.subr.mxu0 0.0
    %2533 = vmatpush2.xpose.msra.mxu0 0.0
    %2534 = vmatprep.subr.mxu0 0.0
    %2535 = vmatpush2.xpose.msra.mxu0 0.0
    %2536 = vmatprep.subr.mxu0 0.0
    %2537 = vmatpush2.xpose.msra.mxu0 0.0
    %2538 = vmatprep.subr.mxu0 0.0
    %2539 = vmatpush2.xpose.msra.mxu0 0.0
    %2540 = vmatprep.subr.mxu0 0.0
    %2541 = vmatpush2.xpose.msra.mxu0 0.0
    %2542 = vmatprep.subr.mxu0 0.0
    %2543 = vmatpush2.xpose.msra.mxu0 0.0
    %2544 = vmatprep.subr.mxu0 0.0
    %2545 = vmatpush2.xpose.msra.mxu0 0.0
    %2546 = vmatprep.subr.mxu0 0.0
    %2547 = vmatpush2.xpose.msra.mxu0 0.0
    %2548 = vmatprep.subr.mxu0 0.0
    %2549 = vmatpush2.xpose.msra.mxu0 0.0
    %2550 = vmatprep.subr.mxu0 0.0
    %2551 = vmatpush2.xpose.msra.mxu0 0.0
    %2552 = vmatprep.mubr.f32.mxu0 0.0
    %2553 = vmatmul.mubr.f32.gmra.mxu0 %v2484
    %v2554 = vpop.f32.mrf.mxu0
    %v2555 = vadd.f32 %v68, %v2554
    %v2556 = vpop.f32.mrf.mxu0
    %2557 = vdwg.mxu0
    %2558 = vrot.lane.b32.xlu0 %v2025, 96
    %v2559 = vpop.permute.xlu0 %2558
    %v2560 = vsel %vm226, %v2025, 0
    %v2562 = vsel %vm226, %v2559, 0
    %2564 = vmatprep.subr.mxu0 0.0
    %2565 = vmatpush1.xpose.msra.mxu0 0.0
    %2566 = vmatprep.subr.mxu0 0.0
    %2567 = vmatpush1.xpose.msra.mxu0 0.0
    %2568 = vmatprep.subr.mxu0 0.0
    %2569 = vmatpush1.xpose.msra.mxu0 0.0
    %2570 = vmatprep.subr.mxu0 0.0
    %2571 = vmatpush1.xpose.msra.mxu0 0.0
    %2572 = vmatprep.subr.mxu0 0.0
    %2573 = vmatpush1.xpose.msra.mxu0 0.0
    %2574 = vmatprep.subr.mxu0 0.0
    %2575 = vmatpush1.xpose.msra.mxu0 0.0
    %2576 = vmatprep.subr.mxu0 0.0
    %2577 = vmatpush1.xpose.msra.mxu0 0.0
    %2578 = vmatprep.subr.mxu0 0.0
    %2579 = vmatpush1.xpose.msra.mxu0 0.0
    %2580 = vmatprep.subr.mxu0 0.0
    %2581 = vmatpush1.xpose.msra.mxu0 0.0
    %2582 = vmatprep.subr.mxu0 0.0
    %2583 = vmatpush1.xpose.msra.mxu0 0.0
    %2584 = vmatprep.subr.mxu0 0.0
    %2585 = vmatpush1.xpose.msra.mxu0 0.0
    %2586 = vmatprep.subr.mxu0 0.0
    %2587 = vmatpush1.xpose.msra.mxu0 0.0
    %2588 = vmatprep.subr.mxu0 0.0
    %2589 = vmatpush1.xpose.msra.mxu0 0.0
    %2590 = vmatprep.subr.mxu0 0.0
    %2591 = vmatpush1.xpose.msra.mxu0 0.0
    %2592 = vmatprep.subr.mxu0 0.0
    %2593 = vmatpush1.xpose.msra.mxu0 0.0
    %2594 = vmatprep.subr.mxu0 0.0
    %2595 = vmatpush1.xpose.msra.mxu0 %v2562
    %2596 = vmatprep.subr.mxu0 0.0
    %2597 = vmatpush2.xpose.msra.mxu0 0.0
    %2598 = vmatprep.subr.mxu0 0.0
    %2599 = vmatpush2.xpose.msra.mxu0 0.0
    %2600 = vmatprep.subr.mxu0 0.0
    %2601 = vmatpush2.xpose.msra.mxu0 0.0
    %2602 = vmatprep.subr.mxu0 0.0
    %2603 = vmatpush2.xpose.msra.mxu0 0.0
    %2604 = vmatprep.subr.mxu0 0.0
    %2605 = vmatpush2.xpose.msra.mxu0 0.0
    %2606 = vmatprep.subr.mxu0 0.0
    %2607 = vmatpush2.xpose.msra.mxu0 0.0
    %2608 = vmatprep.subr.mxu0 0.0
    %2609 = vmatpush2.xpose.msra.mxu0 0.0
    %2610 = vmatprep.subr.mxu0 0.0
    %2611 = vmatpush2.xpose.msra.mxu0 0.0
    %2612 = vmatprep.subr.mxu0 0.0
    %2613 = vmatpush2.xpose.msra.mxu0 0.0
    %2614 = vmatprep.subr.mxu0 0.0
    %2615 = vmatpush2.xpose.msra.mxu0 0.0
    %2616 = vmatprep.subr.mxu0 0.0
    %2617 = vmatpush2.xpose.msra.mxu0 0.0
    %2618 = vmatprep.subr.mxu0 0.0
    %2619 = vmatpush2.xpose.msra.mxu0 0.0
    %2620 = vmatprep.subr.mxu0 0.0
    %2621 = vmatpush2.xpose.msra.mxu0 0.0
    %2622 = vmatprep.subr.mxu0 0.0
    %2623 = vmatpush2.xpose.msra.mxu0 0.0
    %2624 = vmatprep.subr.mxu0 0.0
    %2625 = vmatpush2.xpose.msra.mxu0 0.0
    %2626 = vmatprep.subr.mxu0 0.0
    %2627 = vmatpush2.xpose.msra.mxu0 0.0
    %2628 = vmatprep.mubr.f32.mxu0 0.0
    %2629 = vmatmul.mubr.f32.gmra.mxu0 %v2560
    %v2630 = vpop.f32.mrf.mxu0
    %v2631 = vadd.f32 %v68, %v2630
    %v2632 = vpop.f32.mrf.mxu0
    %2633 = vdwg.mxu0
    %v2634 = vmul.f32 %v2099, 1.442695
    %v2635 = vpow.pop %v2634
    %v2636 = vmul.f32 %v2175, 1.442695
    %v2637 = vpow.pop %v2636
    %v2638 = vmul.f32 %v2251, 1.442695
    %v2639 = vpow.pop %v2638
    %v2640 = vmul.f32 %v2327, 1.442695
    %v2641 = vpow.pop %v2640
    %v2642 = vmul.f32 %v2403, 1.442695
    %v2643 = vpow.pop %v2642
    %v2644 = vmul.f32 %v2479, 1.442695
    %v2645 = vpow.pop %v2644
    %v2646 = vmul.f32 %v2555, 1.442695
    %v2647 = vpow.pop %v2646
    %v2648 = vmul.f32 %v2631, 1.442695
    %v2649 = vpow.pop %v2648
    %v2650 = vsel %vm226, %v2635, 0.0
    %2651 = vadd.xlane.f32.xlu0 %v2650
    %v2652 = vpop.xlane.xlu0 %2651
    %v2653 = vsel %vm226, %v2637, 0.0
    %2654 = vadd.xlane.f32.xlu0 %v2653
    %v2655 = vpop.xlane.xlu0 %2654
    %v2656 = vsel %vm226, %v2639, 0.0
    %2657 = vadd.xlane.f32.xlu0 %v2656
    %v2658 = vpop.xlane.xlu0 %2657
    %v2659 = vsel %vm226, %v2641, 0.0
    %2660 = vadd.xlane.f32.xlu0 %v2659
    %v2661 = vpop.xlane.xlu0 %2660
    %v2662 = vsel %vm226, %v2643, 0.0
    %2663 = vadd.xlane.f32.xlu0 %v2662
    %v2664 = vpop.xlane.xlu0 %2663
    %v2665 = vsel %vm226, %v2645, 0.0
    %2666 = vadd.xlane.f32.xlu0 %v2665
    %v2667 = vpop.xlane.xlu0 %2666
    %v2668 = vsel %vm226, %v2647, 0.0
    %2669 = vadd.xlane.f32.xlu0 %v2668
    %v2670 = vpop.xlane.xlu0 %2669
    %v2671 = vsel %vm226, %v2649, 0.0
    %2672 = vadd.xlane.f32.xlu0 %v2671
    %v2673 = vpop.xlane.xlu0 %2672
    %v2674 = vrcp.pop %v2652
    %v2675 = vrcp.pop %v2655
    %v2676 = vrcp.pop %v2658
    %v2677 = vrcp.pop %v2661
    %v2678 = vrcp.pop %v2664
    %v2679 = vrcp.pop %v2667
    %v2680 = vrcp.pop %v2670
    %v2681 = vrcp.pop %v2673
    %v2682 = vmul.f32 %v2635, %v2674
    %v2683 = vmul.f32 %v2637, %v2675
    %v2684 = vmul.f32 %v2639, %v2676
    %v2685 = vmul.f32 %v2641, %v2677
    %v2686 = vmul.f32 %v2643, %v2678
    %v2687 = vmul.f32 %v2645, %v2679
    %v2688 = vmul.f32 %v2647, %v2680
    %v2689 = vmul.f32 %v2649, %v2681
    %2690 = vrot.lane.b32.xlu0 %v2004, 64
    %v2691 = vpop.permute.xlu0 %2690
    %v2694 = vsel %vm226, %v2682, 0
    %2696 = vmatprep.subr.mxu0 0.0
    %2697 = vmatpush1.msra.mxu0 0.0
    %2698 = vmatprep.subr.mxu0 0.0
    %2699 = vmatpush1.msra.mxu0 0.0
    %2700 = vmatprep.subr.mxu0 0.0
    %2701 = vmatpush1.msra.mxu0 0.0
    %2702 = vmatprep.subr.mxu0 0.0
    %2703 = vmatpush1.msra.mxu0 0.0
    %2704 = vmatprep.subr.mxu0 0.0
    %2705 = vmatpush1.msra.mxu0 0.0
    %2706 = vmatprep.subr.mxu0 0.0
    %2707 = vmatpush1.msra.mxu0 0.0
    %2708 = vmatprep.subr.mxu0 0.0
    %2709 = vmatpush1.msra.mxu0 0.0
    %2710 = vmatprep.subr.mxu0 0.0
    %2711 = vmatpush1.msra.mxu0 0.0
    %2712 = vmatprep.subr.mxu0 0.0
    %2713 = vmatpush1.msra.mxu0 0.0
    %2714 = vmatprep.subr.mxu0 0.0
    %2715 = vmatpush1.msra.mxu0 0.0
    %2716 = vmatprep.subr.mxu0 0.0
    %2717 = vmatpush1.msra.mxu0 0.0
    %2718 = vmatprep.subr.mxu0 0.0
    %2719 = vmatpush1.msra.mxu0 0.0
    %2720 = vmatprep.subr.mxu0 0.0
    %2721 = vmatpush1.msra.mxu0 0.0
    %2722 = vmatprep.subr.mxu0 0.0
    %2723 = vmatpush1.msra.mxu0 0.0
    %2724 = vmatprep.subr.mxu0 0.0
    %2725 = vmatpush1.msra.mxu0 0.0
    %2726 = vmatprep.subr.mxu0 0.0
    %2727 = vmatpush1.msra.mxu0 %v2691
    %2728 = vmatprep.subr.mxu0 0.0
    %2729 = vmatpush2.msra.mxu0 0.0
    %2730 = vmatprep.subr.mxu0 0.0
    %2731 = vmatpush2.msra.mxu0 0.0
    %2732 = vmatprep.subr.mxu0 0.0
    %2733 = vmatpush2.msra.mxu0 0.0
    %2734 = vmatprep.subr.mxu0 0.0
    %2735 = vmatpush2.msra.mxu0 0.0
    %2736 = vmatprep.subr.mxu0 0.0
    %2737 = vmatpush2.msra.mxu0 0.0
    %2738 = vmatprep.subr.mxu0 0.0
    %2739 = vmatpush2.msra.mxu0 0.0
    %2740 = vmatprep.subr.mxu0 0.0
    %2741 = vmatpush2.msra.mxu0 0.0
    %2742 = vmatprep.subr.mxu0 0.0
    %2743 = vmatpush2.msra.mxu0 0.0
    %2744 = vmatprep.subr.mxu0 0.0
    %2745 = vmatpush2.msra.mxu0 0.0
    %2746 = vmatprep.subr.mxu0 0.0
    %2747 = vmatpush2.msra.mxu0 0.0
    %2748 = vmatprep.subr.mxu0 0.0
    %2749 = vmatpush2.msra.mxu0 0.0
    %2750 = vmatprep.subr.mxu0 0.0
    %2751 = vmatpush2.msra.mxu0 0.0
    %2752 = vmatprep.subr.mxu0 0.0
    %2753 = vmatpush2.msra.mxu0 0.0
    %2754 = vmatprep.subr.mxu0 0.0
    %2755 = vmatpush2.msra.mxu0 0.0
    %2756 = vmatprep.subr.mxu0 0.0
    %2757 = vmatpush2.msra.mxu0 0.0
    %2758 = vmatprep.subr.mxu0 0.0
    %2759 = vmatpush2.msra.mxu0 0.0
    %2760 = vmatprep.mubr.f32.mxu0 0.0
    %2761 = vmatmul.mubr.f32.gmra.mxu0 %v2694
    %v2762 = vpop.f32.mrf.mxu0
    %v2763 = vadd.f32 0.0, %v2762
    %v2764 = vpop.f32.mrf.mxu0
    %2765 = vdwg.mxu0
    %2766 = vrot.lane.b32.xlu0 %v2015, 64
    %v2767 = vpop.permute.xlu0 %2766
    %v2770 = vsel %vm226, %v2683, 0
    %2772 = vmatprep.subr.mxu0 0.0
    %2773 = vmatpush1.msra.mxu0 0.0
    %2774 = vmatprep.subr.mxu0 0.0
    %2775 = vmatpush1.msra.mxu0 0.0
    %2776 = vmatprep.subr.mxu0 0.0
    %2777 = vmatpush1.msra.mxu0 0.0
    %2778 = vmatprep.subr.mxu0 0.0
    %2779 = vmatpush1.msra.mxu0 0.0
    %2780 = vmatprep.subr.mxu0 0.0
    %2781 = vmatpush1.msra.mxu0 0.0
    %2782 = vmatprep.subr.mxu0 0.0
    %2783 = vmatpush1.msra.mxu0 0.0
    %2784 = vmatprep.subr.mxu0 0.0
    %2785 = vmatpush1.msra.mxu0 0.0
    %2786 = vmatprep.subr.mxu0 0.0
    %2787 = vmatpush1.msra.mxu0 0.0
    %2788 = vmatprep.subr.mxu0 0.0
    %2789 = vmatpush1.msra.mxu0 0.0
    %2790 = vmatprep.subr.mxu0 0.0
    %2791 = vmatpush1.msra.mxu0 0.0
    %2792 = vmatprep.subr.mxu0 0.0
    %2793 = vmatpush1.msra.mxu0 0.0
    %2794 = vmatprep.subr.mxu0 0.0
    %2795 = vmatpush1.msra.mxu0 0.0
    %2796 = vmatprep.subr.mxu0 0.0
    %2797 = vmatpush1.msra.mxu0 0.0
    %2798 = vmatprep.subr.mxu0 0.0
    %2799 = vmatpush1.msra.mxu0 0.0
    %2800 = vmatprep.subr.mxu0 0.0
    %2801 = vmatpush1.msra.mxu0 0.0
    %2802 = vmatprep.subr.mxu0 0.0
    %2803 = vmatpush1.msra.mxu0 %v2767
    %2804 = vmatprep.subr.mxu0 0.0
    %2805 = vmatpush2.msra.mxu0 0.0
    %2806 = vmatprep.subr.mxu0 0.0
    %2807 = vmatpush2.msra.mxu0 0.0
    %2808 = vmatprep.subr.mxu0 0.0
    %2809 = vmatpush2.msra.mxu0 0.0
    %2810 = vmatprep.subr.mxu0 0.0
    %2811 = vmatpush2.msra.mxu0 0.0
    %2812 = vmatprep.subr.mxu0 0.0
    %2813 = vmatpush2.msra.mxu0 0.0
    %2814 = vmatprep.subr.mxu0 0.0
    %2815 = vmatpush2.msra.mxu0 0.0
    %2816 = vmatprep.subr.mxu0 0.0
    %2817 = vmatpush2.msra.mxu0 0.0
    %2818 = vmatprep.subr.mxu0 0.0
    %2819 = vmatpush2.msra.mxu0 0.0
    %2820 = vmatprep.subr.mxu0 0.0
    %2821 = vmatpush2.msra.mxu0 0.0
    %2822 = vmatprep.subr.mxu0 0.0
    %2823 = vmatpush2.msra.mxu0 0.0
    %2824 = vmatprep.subr.mxu0 0.0
    %2825 = vmatpush2.msra.mxu0 0.0
    %2826 = vmatprep.subr.mxu0 0.0
    %2827 = vmatpush2.msra.mxu0 0.0
    %2828 = vmatprep.subr.mxu0 0.0
    %2829 = vmatpush2.msra.mxu0 0.0
    %2830 = vmatprep.subr.mxu0 0.0
    %2831 = vmatpush2.msra.mxu0 0.0
    %2832 = vmatprep.subr.mxu0 0.0
    %2833 = vmatpush2.msra.mxu0 0.0
    %2834 = vmatprep.subr.mxu0 0.0
    %2835 = vmatpush2.msra.mxu0 0.0
    %2836 = vmatprep.mubr.f32.mxu0 0.0
    %2837 = vmatmul.mubr.f32.gmra.mxu0 %v2770
    %v2838 = vpop.f32.mrf.mxu0
    %v2839 = vadd.f32 0.0, %v2838
    %v2840 = vpop.f32.mrf.mxu0
    %2841 = vdwg.mxu0
    %2842 = vrot.lane.b32.xlu0 %v2019, 64
    %v2843 = vpop.permute.xlu0 %2842
    %v2846 = vsel %vm226, %v2684, 0
    %2848 = vmatprep.subr.mxu0 0.0
    %2849 = vmatpush1.msra.mxu0 0.0
    %2850 = vmatprep.subr.mxu0 0.0
    %2851 = vmatpush1.msra.mxu0 0.0
    %2852 = vmatprep.subr.mxu0 0.0
    %2853 = vmatpush1.msra.mxu0 0.0
    %2854 = vmatprep.subr.mxu0 0.0
    %2855 = vmatpush1.msra.mxu0 0.0
    %2856 = vmatprep.subr.mxu0 0.0
    %2857 = vmatpush1.msra.mxu0 0.0
    %2858 = vmatprep.subr.mxu0 0.0
    %2859 = vmatpush1.msra.mxu0 0.0
    %2860 = vmatprep.subr.mxu0 0.0
    %2861 = vmatpush1.msra.mxu0 0.0
    %2862 = vmatprep.subr.mxu0 0.0
    %2863 = vmatpush1.msra.mxu0 0.0
    %2864 = vmatprep.subr.mxu0 0.0
    %2865 = vmatpush1.msra.mxu0 0.0
    %2866 = vmatprep.subr.mxu0 0.0
    %2867 = vmatpush1.msra.mxu0 0.0
    %2868 = vmatprep.subr.mxu0 0.0
    %2869 = vmatpush1.msra.mxu0 0.0
    %2870 = vmatprep.subr.mxu0 0.0
    %2871 = vmatpush1.msra.mxu0 0.0
    %2872 = vmatprep.subr.mxu0 0.0
    %2873 = vmatpush1.msra.mxu0 0.0
    %2874 = vmatprep.subr.mxu0 0.0
    %2875 = vmatpush1.msra.mxu0 0.0
    %2876 = vmatprep.subr.mxu0 0.0
    %2877 = vmatpush1.msra.mxu0 0.0
    %2878 = vmatprep.subr.mxu0 0.0
    %2879 = vmatpush1.msra.mxu0 %v2843
    %2880 = vmatprep.subr.mxu0 0.0
    %2881 = vmatpush2.msra.mxu0 0.0
    %2882 = vmatprep.subr.mxu0 0.0
    %2883 = vmatpush2.msra.mxu0 0.0
    %2884 = vmatprep.subr.mxu0 0.0
    %2885 = vmatpush2.msra.mxu0 0.0
    %2886 = vmatprep.subr.mxu0 0.0
    %2887 = vmatpush2.msra.mxu0 0.0
    %2888 = vmatprep.subr.mxu0 0.0
    %2889 = vmatpush2.msra.mxu0 0.0
    %2890 = vmatprep.subr.mxu0 0.0
    %2891 = vmatpush2.msra.mxu0 0.0
    %2892 = vmatprep.subr.mxu0 0.0
    %2893 = vmatpush2.msra.mxu0 0.0
    %2894 = vmatprep.subr.mxu0 0.0
    %2895 = vmatpush2.msra.mxu0 0.0
    %2896 = vmatprep.subr.mxu0 0.0
    %2897 = vmatpush2.msra.mxu0 0.0
    %2898 = vmatprep.subr.mxu0 0.0
    %2899 = vmatpush2.msra.mxu0 0.0
    %2900 = vmatprep.subr.mxu0 0.0
    %2901 = vmatpush2.msra.mxu0 0.0
    %2902 = vmatprep.subr.mxu0 0.0
    %2903 = vmatpush2.msra.mxu0 0.0
    %2904 = vmatprep.subr.mxu0 0.0
    %2905 = vmatpush2.msra.mxu0 0.0
    %2906 = vmatprep.subr.mxu0 0.0
    %2907 = vmatpush2.msra.mxu0 0.0
    %2908 = vmatprep.subr.mxu0 0.0
    %2909 = vmatpush2.msra.mxu0 0.0
    %2910 = vmatprep.subr.mxu0 0.0
    %2911 = vmatpush2.msra.mxu0 0.0
    %2912 = vmatprep.mubr.f32.mxu0 0.0
    %2913 = vmatmul.mubr.f32.gmra.mxu0 %v2846
    %v2914 = vpop.f32.mrf.mxu0
    %v2915 = vadd.f32 0.0, %v2914
    %v2916 = vpop.f32.mrf.mxu0
    %2917 = vdwg.mxu0
    %2918 = vrot.lane.b32.xlu0 %v2023, 64
    %v2919 = vpop.permute.xlu0 %2918
    %v2922 = vsel %vm226, %v2685, 0
    %2924 = vmatprep.subr.mxu0 0.0
    %2925 = vmatpush1.msra.mxu0 0.0
    %2926 = vmatprep.subr.mxu0 0.0
    %2927 = vmatpush1.msra.mxu0 0.0
    %2928 = vmatprep.subr.mxu0 0.0
    %2929 = vmatpush1.msra.mxu0 0.0
    %2930 = vmatprep.subr.mxu0 0.0
    %2931 = vmatpush1.msra.mxu0 0.0
    %2932 = vmatprep.subr.mxu0 0.0
    %2933 = vmatpush1.msra.mxu0 0.0
    %2934 = vmatprep.subr.mxu0 0.0
    %2935 = vmatpush1.msra.mxu0 0.0
    %2936 = vmatprep.subr.mxu0 0.0
    %2937 = vmatpush1.msra.mxu0 0.0
    %2938 = vmatprep.subr.mxu0 0.0
    %2939 = vmatpush1.msra.mxu0 0.0
    %2940 = vmatprep.subr.mxu0 0.0
    %2941 = vmatpush1.msra.mxu0 0.0
    %2942 = vmatprep.subr.mxu0 0.0
    %2943 = vmatpush1.msra.mxu0 0.0
    %2944 = vmatprep.subr.mxu0 0.0
    %2945 = vmatpush1.msra.mxu0 0.0
    %2946 = vmatprep.subr.mxu0 0.0
    %2947 = vmatpush1.msra.mxu0 0.0
    %2948 = vmatprep.subr.mxu0 0.0
    %2949 = vmatpush1.msra.mxu0 0.0
    %2950 = vmatprep.subr.mxu0 0.0
    %2951 = vmatpush1.msra.mxu0 0.0
    %2952 = vmatprep.subr.mxu0 0.0
    %2953 = vmatpush1.msra.mxu0 0.0
    %2954 = vmatprep.subr.mxu0 0.0
    %2955 = vmatpush1.msra.mxu0 %v2919
    %2956 = vmatprep.subr.mxu0 0.0
    %2957 = vmatpush2.msra.mxu0 0.0
    %2958 = vmatprep.subr.mxu0 0.0
    %2959 = vmatpush2.msra.mxu0 0.0
    %2960 = vmatprep.subr.mxu0 0.0
    %2961 = vmatpush2.msra.mxu0 0.0
    %2962 = vmatprep.subr.mxu0 0.0
    %2963 = vmatpush2.msra.mxu0 0.0
    %2964 = vmatprep.subr.mxu0 0.0
    %2965 = vmatpush2.msra.mxu0 0.0
    %2966 = vmatprep.subr.mxu0 0.0
    %2967 = vmatpush2.msra.mxu0 0.0
    %2968 = vmatprep.subr.mxu0 0.0
    %2969 = vmatpush2.msra.mxu0 0.0
    %2970 = vmatprep.subr.mxu0 0.0
    %2971 = vmatpush2.msra.mxu0 0.0
    %2972 = vmatprep.subr.mxu0 0.0
    %2973 = vmatpush2.msra.mxu0 0.0
    %2974 = vmatprep.subr.mxu0 0.0
    %2975 = vmatpush2.msra.mxu0 0.0
    %2976 = vmatprep.subr.mxu0 0.0
    %2977 = vmatpush2.msra.mxu0 0.0
    %2978 = vmatprep.subr.mxu0 0.0
    %2979 = vmatpush2.msra.mxu0 0.0
    %2980 = vmatprep.subr.mxu0 0.0
    %2981 = vmatpush2.msra.mxu0 0.0
    %2982 = vmatprep.subr.mxu0 0.0
    %2983 = vmatpush2.msra.mxu0 0.0
    %2984 = vmatprep.subr.mxu0 0.0
    %2985 = vmatpush2.msra.mxu0 0.0
    %2986 = vmatprep.subr.mxu0 0.0
    %2987 = vmatpush2.msra.mxu0 0.0
    %2988 = vmatprep.mubr.f32.mxu0 0.0
    %2989 = vmatmul.mubr.f32.gmra.mxu0 %v2922
    %v2990 = vpop.f32.mrf.mxu0
    %v2991 = vadd.f32 0.0, %v2990
    %v2992 = vpop.f32.mrf.mxu0
    %2993 = vdwg.mxu0
    %2994 = vrot.lane.b32.xlu0 %v2009, 64
    %v2995 = vpop.permute.xlu0 %2994
    %v2998 = vsel %vm226, %v2686, 0
    %3000 = vmatprep.subr.mxu0 0.0
    %3001 = vmatpush1.msra.mxu0 0.0
    %3002 = vmatprep.subr.mxu0 0.0
    %3003 = vmatpush1.msra.mxu0 0.0
    %3004 = vmatprep.subr.mxu0 0.0
    %3005 = vmatpush1.msra.mxu0 0.0
    %3006 = vmatprep.subr.mxu0 0.0
    %3007 = vmatpush1.msra.mxu0 0.0
    %3008 = vmatprep.subr.mxu0 0.0
    %3009 = vmatpush1.msra.mxu0 0.0
    %3010 = vmatprep.subr.mxu0 0.0
    %3011 = vmatpush1.msra.mxu0 0.0
    %3012 = vmatprep.subr.mxu0 0.0
    %3013 = vmatpush1.msra.mxu0 0.0
    %3014 = vmatprep.subr.mxu0 0.0
    %3015 = vmatpush1.msra.mxu0 0.0
    %3016 = vmatprep.subr.mxu0 0.0
    %3017 = vmatpush1.msra.mxu0 0.0
    %3018 = vmatprep.subr.mxu0 0.0
    %3019 = vmatpush1.msra.mxu0 0.0
    %3020 = vmatprep.subr.mxu0 0.0
    %3021 = vmatpush1.msra.mxu0 0.0
    %3022 = vmatprep.subr.mxu0 0.0
    %3023 = vmatpush1.msra.mxu0 0.0
    %3024 = vmatprep.subr.mxu0 0.0
    %3025 = vmatpush1.msra.mxu0 0.0
    %3026 = vmatprep.subr.mxu0 0.0
    %3027 = vmatpush1.msra.mxu0 0.0
    %3028 = vmatprep.subr.mxu0 0.0
    %3029 = vmatpush1.msra.mxu0 0.0
    %3030 = vmatprep.subr.mxu0 0.0
    %3031 = vmatpush1.msra.mxu0 %v2995
    %3032 = vmatprep.subr.mxu0 0.0
    %3033 = vmatpush2.msra.mxu0 0.0
    %3034 = vmatprep.subr.mxu0 0.0
    %3035 = vmatpush2.msra.mxu0 0.0
    %3036 = vmatprep.subr.mxu0 0.0
    %3037 = vmatpush2.msra.mxu0 0.0
    %3038 = vmatprep.subr.mxu0 0.0
    %3039 = vmatpush2.msra.mxu0 0.0
    %3040 = vmatprep.subr.mxu0 0.0
    %3041 = vmatpush2.msra.mxu0 0.0
    %3042 = vmatprep.subr.mxu0 0.0
    %3043 = vmatpush2.msra.mxu0 0.0
    %3044 = vmatprep.subr.mxu0 0.0
    %3045 = vmatpush2.msra.mxu0 0.0
    %3046 = vmatprep.subr.mxu0 0.0
    %3047 = vmatpush2.msra.mxu0 0.0
    %3048 = vmatprep.subr.mxu0 0.0
    %3049 = vmatpush2.msra.mxu0 0.0
    %3050 = vmatprep.subr.mxu0 0.0
    %3051 = vmatpush2.msra.mxu0 0.0
    %3052 = vmatprep.subr.mxu0 0.0
    %3053 = vmatpush2.msra.mxu0 0.0
    %3054 = vmatprep.subr.mxu0 0.0
    %3055 = vmatpush2.msra.mxu0 0.0
    %3056 = vmatprep.subr.mxu0 0.0
    %3057 = vmatpush2.msra.mxu0 0.0
    %3058 = vmatprep.subr.mxu0 0.0
    %3059 = vmatpush2.msra.mxu0 0.0
    %3060 = vmatprep.subr.mxu0 0.0
    %3061 = vmatpush2.msra.mxu0 0.0
    %3062 = vmatprep.subr.mxu0 0.0
    %3063 = vmatpush2.msra.mxu0 0.0
    %3064 = vmatprep.mubr.f32.mxu0 0.0
    %3065 = vmatmul.mubr.f32.gmra.mxu0 %v2998
    %v3066 = vpop.f32.mrf.mxu0
    %v3067 = vadd.f32 0.0, %v3066
    %v3068 = vpop.f32.mrf.mxu0
    %3069 = vdwg.mxu0
    %3070 = vrot.lane.b32.xlu0 %v2017, 64
    %v3071 = vpop.permute.xlu0 %3070
    %v3074 = vsel %vm226, %v2687, 0
    %3076 = vmatprep.subr.mxu0 0.0
    %3077 = vmatpush1.msra.mxu0 0.0
    %3078 = vmatprep.subr.mxu0 0.0
    %3079 = vmatpush1.msra.mxu0 0.0
    %3080 = vmatprep.subr.mxu0 0.0
    %3081 = vmatpush1.msra.mxu0 0.0
    %3082 = vmatprep.subr.mxu0 0.0
    %3083 = vmatpush1.msra.mxu0 0.0
    %3084 = vmatprep.subr.mxu0 0.0
    %3085 = vmatpush1.msra.mxu0 0.0
    %3086 = vmatprep.subr.mxu0 0.0
    %3087 = vmatpush1.msra.mxu0 0.0
    %3088 = vmatprep.subr.mxu0 0.0
    %3089 = vmatpush1.msra.mxu0 0.0
    %3090 = vmatprep.subr.mxu0 0.0
    %3091 = vmatpush1.msra.mxu0 0.0
    %3092 = vmatprep.subr.mxu0 0.0
    %3093 = vmatpush1.msra.mxu0 0.0
    %3094 = vmatprep.subr.mxu0 0.0
    %3095 = vmatpush1.msra.mxu0 0.0
    %3096 = vmatprep.subr.mxu0 0.0
    %3097 = vmatpush1.msra.mxu0 0.0
    %3098 = vmatprep.subr.mxu0 0.0
    %3099 = vmatpush1.msra.mxu0 0.0
    %3100 = vmatprep.subr.mxu0 0.0
    %3101 = vmatpush1.msra.mxu0 0.0
    %3102 = vmatprep.subr.mxu0 0.0
    %3103 = vmatpush1.msra.mxu0 0.0
    %3104 = vmatprep.subr.mxu0 0.0
    %3105 = vmatpush1.msra.mxu0 0.0
    %3106 = vmatprep.subr.mxu0 0.0
    %3107 = vmatpush1.msra.mxu0 %v3071
    %3108 = vmatprep.subr.mxu0 0.0
    %3109 = vmatpush2.msra.mxu0 0.0
    %3110 = vmatprep.subr.mxu0 0.0
    %3111 = vmatpush2.msra.mxu0 0.0
    %3112 = vmatprep.subr.mxu0 0.0
    %3113 = vmatpush2.msra.mxu0 0.0
    %3114 = vmatprep.subr.mxu0 0.0
    %3115 = vmatpush2.msra.mxu0 0.0
    %3116 = vmatprep.subr.mxu0 0.0
    %3117 = vmatpush2.msra.mxu0 0.0
    %3118 = vmatprep.subr.mxu0 0.0
    %3119 = vmatpush2.msra.mxu0 0.0
    %3120 = vmatprep.subr.mxu0 0.0
    %3121 = vmatpush2.msra.mxu0 0.0
    %3122 = vmatprep.subr.mxu0 0.0
    %3123 = vmatpush2.msra.mxu0 0.0
    %3124 = vmatprep.subr.mxu0 0.0
    %3125 = vmatpush2.msra.mxu0 0.0
    %3126 = vmatprep.subr.mxu0 0.0
    %3127 = vmatpush2.msra.mxu0 0.0
    %3128 = vmatprep.subr.mxu0 0.0
    %3129 = vmatpush2.msra.mxu0 0.0
    %3130 = vmatprep.subr.mxu0 0.0
    %3131 = vmatpush2.msra.mxu0 0.0
    %3132 = vmatprep.subr.mxu0 0.0
    %3133 = vmatpush2.msra.mxu0 0.0
    %3134 = vmatprep.subr.mxu0 0.0
    %3135 = vmatpush2.msra.mxu0 0.0
    %3136 = vmatprep.subr.mxu0 0.0
    %3137 = vmatpush2.msra.mxu0 0.0
    %3138 = vmatprep.subr.mxu0 0.0
    %3139 = vmatpush2.msra.mxu0 0.0
    %3140 = vmatprep.mubr.f32.mxu0 0.0
    %3141 = vmatmul.mubr.f32.gmra.mxu0 %v3074
    %v3142 = vpop.f32.mrf.mxu0
    %v3143 = vadd.f32 0.0, %v3142
    %v3144 = vpop.f32.mrf.mxu0
    %3145 = vdwg.mxu0
    %3146 = vrot.lane.b32.xlu0 %v2021, 64
    %v3147 = vpop.permute.xlu0 %3146
    %v3150 = vsel %vm226, %v2688, 0
    %3152 = vmatprep.subr.mxu0 0.0
    %3153 = vmatpush1.msra.mxu0 0.0
    %3154 = vmatprep.subr.mxu0 0.0
    %3155 = vmatpush1.msra.mxu0 0.0
    %3156 = vmatprep.subr.mxu0 0.0
    %3157 = vmatpush1.msra.mxu0 0.0
    %3158 = vmatprep.subr.mxu0 0.0
    %3159 = vmatpush1.msra.mxu0 0.0
    %3160 = vmatprep.subr.mxu0 0.0
    %3161 = vmatpush1.msra.mxu0 0.0
    %3162 = vmatprep.subr.mxu0 0.0
    %3163 = vmatpush1.msra.mxu0 0.0
    %3164 = vmatprep.subr.mxu0 0.0
    %3165 = vmatpush1.msra.mxu0 0.0
    %3166 = vmatprep.subr.mxu0 0.0
    %3167 = vmatpush1.msra.mxu0 0.0
    %3168 = vmatprep.subr.mxu0 0.0
    %3169 = vmatpush1.msra.mxu0 0.0
    %3170 = vmatprep.subr.mxu0 0.0
    %3171 = vmatpush1.msra.mxu0 0.0
    %3172 = vmatprep.subr.mxu0 0.0
    %3173 = vmatpush1.msra.mxu0 0.0
    %3174 = vmatprep.subr.mxu0 0.0
    %3175 = vmatpush1.msra.mxu0 0.0
    %3176 = vmatprep.subr.mxu0 0.0
    %3177 = vmatpush1.msra.mxu0 0.0
    %3178 = vmatprep.subr.mxu0 0.0
    %3179 = vmatpush1.msra.mxu0 0.0
    %3180 = vmatprep.subr.mxu0 0.0
    %3181 = vmatpush1.msra.mxu0 0.0
    %3182 = vmatprep.subr.mxu0 0.0
    %3183 = vmatpush1.msra.mxu0 %v3147
    %3184 = vmatprep.subr.mxu0 0.0
    %3185 = vmatpush2.msra.mxu0 0.0
    %3186 = vmatprep.subr.mxu0 0.0
    %3187 = vmatpush2.msra.mxu0 0.0
    %3188 = vmatprep.subr.mxu0 0.0
    %3189 = vmatpush2.msra.mxu0 0.0
    %3190 = vmatprep.subr.mxu0 0.0
    %3191 = vmatpush2.msra.mxu0 0.0
    %3192 = vmatprep.subr.mxu0 0.0
    %3193 = vmatpush2.msra.mxu0 0.0
    %3194 = vmatprep.subr.mxu0 0.0
    %3195 = vmatpush2.msra.mxu0 0.0
    %3196 = vmatprep.subr.mxu0 0.0
    %3197 = vmatpush2.msra.mxu0 0.0
    %3198 = vmatprep.subr.mxu0 0.0
    %3199 = vmatpush2.msra.mxu0 0.0
    %3200 = vmatprep.subr.mxu0 0.0
    %3201 = vmatpush2.msra.mxu0 0.0
    %3202 = vmatprep.subr.mxu0 0.0
    %3203 = vmatpush2.msra.mxu0 0.0
    %3204 = vmatprep.subr.mxu0 0.0
    %3205 = vmatpush2.msra.mxu0 0.0
    %3206 = vmatprep.subr.mxu0 0.0
    %3207 = vmatpush2.msra.mxu0 0.0
    %3208 = vmatprep.subr.mxu0 0.0
    %3209 = vmatpush2.msra.mxu0 0.0
    %3210 = vmatprep.subr.mxu0 0.0
    %3211 = vmatpush2.msra.mxu0 0.0
    %3212 = vmatprep.subr.mxu0 0.0
    %3213 = vmatpush2.msra.mxu0 0.0
    %3214 = vmatprep.subr.mxu0 0.0
    %3215 = vmatpush2.msra.mxu0 0.0
    %3216 = vmatprep.mubr.f32.mxu0 0.0
    %3217 = vmatmul.mubr.f32.gmra.mxu0 %v3150
    %v3218 = vpop.f32.mrf.mxu0
    %v3219 = vadd.f32 0.0, %v3218
    %v3220 = vpop.f32.mrf.mxu0
    %3221 = vdwg.mxu0
    %3222 = vrot.lane.b32.xlu0 %v2025, 64
    %v3223 = vpop.permute.xlu0 %3222
    %v3226 = vsel %vm226, %v2689, 0
    %3228 = vmatprep.subr.mxu0 0.0
    %3229 = vmatpush1.msra.mxu0 0.0
    %3230 = vmatprep.subr.mxu0 0.0
    %3231 = vmatpush1.msra.mxu0 0.0
    %3232 = vmatprep.subr.mxu0 0.0
    %3233 = vmatpush1.msra.mxu0 0.0
    %3234 = vmatprep.subr.mxu0 0.0
    %3235 = vmatpush1.msra.mxu0 0.0
    %3236 = vmatprep.subr.mxu0 0.0
    %3237 = vmatpush1.msra.mxu0 0.0
    %3238 = vmatprep.subr.mxu0 0.0
    %3239 = vmatpush1.msra.mxu0 0.0
    %3240 = vmatprep.subr.mxu0 0.0
    %3241 = vmatpush1.msra.mxu0 0.0
    %3242 = vmatprep.subr.mxu0 0.0
    %3243 = vmatpush1.msra.mxu0 0.0
    %3244 = vmatprep.subr.mxu0 0.0
    %3245 = vmatpush1.msra.mxu0 0.0
    %3246 = vmatprep.subr.mxu0 0.0
    %3247 = vmatpush1.msra.mxu0 0.0
    %3248 = vmatprep.subr.mxu0 0.0
    %3249 = vmatpush1.msra.mxu0 0.0
    %3250 = vmatprep.subr.mxu0 0.0
    %3251 = vmatpush1.msra.mxu0 0.0
    %3252 = vmatprep.subr.mxu0 0.0
    %3253 = vmatpush1.msra.mxu0 0.0
    %3254 = vmatprep.subr.mxu0 0.0
    %3255 = vmatpush1.msra.mxu0 0.0
    %3256 = vmatprep.subr.mxu0 0.0
    %3257 = vmatpush1.msra.mxu0 0.0
    %3258 = vmatprep.subr.mxu0 0.0
    %3259 = vmatpush1.msra.mxu0 %v3223
    %3260 = vmatprep.subr.mxu0 0.0
    %3261 = vmatpush2.msra.mxu0 0.0
    %3262 = vmatprep.subr.mxu0 0.0
    %3263 = vmatpush2.msra.mxu0 0.0
    %3264 = vmatprep.subr.mxu0 0.0
    %3265 = vmatpush2.msra.mxu0 0.0
    %3266 = vmatprep.subr.mxu0 0.0
    %3267 = vmatpush2.msra.mxu0 0.0
    %3268 = vmatprep.subr.mxu0 0.0
    %3269 = vmatpush2.msra.mxu0 0.0
    %3270 = vmatprep.subr.mxu0 0.0
    %3271 = vmatpush2.msra.mxu0 0.0
    %3272 = vmatprep.subr.mxu0 0.0
    %3273 = vmatpush2.msra.mxu0 0.0
    %3274 = vmatprep.subr.mxu0 0.0
    %3275 = vmatpush2.msra.mxu0 0.0
    %3276 = vmatprep.subr.mxu0 0.0
    %3277 = vmatpush2.msra.mxu0 0.0
    %3278 = vmatprep.subr.mxu0 0.0
    %3279 = vmatpush2.msra.mxu0 0.0
    %3280 = vmatprep.subr.mxu0 0.0
    %3281 = vmatpush2.msra.mxu0 0.0
    %3282 = vmatprep.subr.mxu0 0.0
    %3283 = vmatpush2.msra.mxu0 0.0
    %3284 = vmatprep.subr.mxu0 0.0
    %3285 = vmatpush2.msra.mxu0 0.0
    %3286 = vmatprep.subr.mxu0 0.0
    %3287 = vmatpush2.msra.mxu0 0.0
    %3288 = vmatprep.subr.mxu0 0.0
    %3289 = vmatpush2.msra.mxu0 0.0
    %3290 = vmatprep.subr.mxu0 0.0
    %3291 = vmatpush2.msra.mxu0 0.0
    %3292 = vmatprep.mubr.f32.mxu0 0.0
    %3293 = vmatmul.mubr.f32.gmra.mxu0 %v3226
    %v3294 = vpop.f32.mrf.mxu0
    %v3295 = vadd.f32 0.0, %v3294
    %v3296 = vpop.f32.mrf.mxu0
    %3297 = vdwg.mxu0
    %3300 = vrot.lane.b32.xlu0 %v2839, 8
    %v3301 = vpop.permute.xlu0 %3300
    %3302 = vrot.lane.b32.xlu0 %v3143, 8
    %v3303 = vpop.permute.xlu0 %3302
    %3308 = vrot.lane.b32.xlu0 %v2915, 16
    %v3309 = vpop.permute.xlu0 %3308
    %3310 = vrot.lane.b32.xlu0 %v3219, 16
    %v3311 = vpop.permute.xlu0 %3310
    %3316 = vrot.lane.b32.xlu0 %v2991, 24
    %v3317 = vpop.permute.xlu0 %3316
    %3318 = vrot.lane.b32.xlu0 %v3295, 24
    %v3319 = vpop.permute.xlu0 %3318
    %v3322 = vsel %vm226, %v2763, %v3301
    %v3323 = vsel %vm226, %v3067, %v3303
    %v3324 = vsel %vm1523, %v3322, %v3309
    %v3325 = vsel %vm1523, %v3323, %v3311
    %v3326 = vsel %vm1526, %v3324, %v3317
    %v3327 = vsel %vm1526, %v3325, %v3319
    %s3328 = scalar_lea.vmem %s5, 32
    %v3329 = vld [vmem:[%s3328] sm:$0xff]
    %v3330 = vld [vmem:[%s3328 + $0x8] sm:$0xff]
    %v3331 = vld [vmem:[%s3328 + $0x10] sm:$0xff]
    %v3332 = vld [vmem:[%s3328 + $0x18] sm:$0xff]
    %s3333 = scalar_lea.vmem %s6, 1
    %v3334 = vld [vmem:[%s3333] sm:$0x1]
    %v3336 = vlaneseq
    %v3337 = vshrl.u32 %v3336, 7
    %v3338 = vsub.s32 0, %v3337
    %v3339 = vrot.slane %v3334, %v3338
    %v3342 = vsel %vm74, %v3326, 0
    %v3345 = vsel %vm74, %v3327, 0
    %3347 = vmatprep.subr.mxu0 0.0
    %3348 = vmatpush1.msra.mxu0 0.0
    %3349 = vmatprep.subr.mxu0 0.0
    %3350 = vmatpush1.msra.mxu0 0.0
    %3351 = vmatprep.subr.mxu0 0.0
    %3352 = vmatpush1.msra.mxu0 0.0
    %3353 = vmatprep.subr.mxu0 0.0
    %3354 = vmatpush1.msra.mxu0 0.0
    %3355 = vmatprep.subr.mxu0 0.0
    %3356 = vmatpush1.msra.mxu0 0.0
    %3357 = vmatprep.subr.mxu0 0.0
    %3358 = vmatpush1.msra.mxu0 0.0
    %3359 = vmatprep.subr.mxu0 0.0
    %3360 = vmatpush1.msra.mxu0 0.0
    %3361 = vmatprep.subr.mxu0 0.0
    %3362 = vmatpush1.msra.mxu0 0.0
    %3363 = vmatprep.subr.mxu0 0.0
    %3364 = vmatpush1.msra.mxu0 0.0
    %3365 = vmatprep.subr.mxu0 0.0
    %3366 = vmatpush1.msra.mxu0 0.0
    %3367 = vmatprep.subr.mxu0 0.0
    %3368 = vmatpush1.msra.mxu0 0.0
    %3369 = vmatprep.subr.mxu0 0.0
    %3370 = vmatpush1.msra.mxu0 0.0
    %3371 = vmatprep.subr.mxu0 0.0
    %3372 = vmatpush1.msra.mxu0 %v3332
    %3373 = vmatprep.subr.mxu0 0.0
    %3374 = vmatpush1.msra.mxu0 %v3331
    %3375 = vmatprep.subr.mxu0 0.0
    %3376 = vmatpush1.msra.mxu0 %v3330
    %3377 = vmatprep.subr.mxu0 0.0
    %3378 = vmatpush1.msra.mxu0 %v3329
    %3379 = vmatprep.subr.mxu0 0.0
    %3380 = vmatpush2.msra.mxu0 0.0
    %3381 = vmatprep.subr.mxu0 0.0
    %3382 = vmatpush2.msra.mxu0 0.0
    %3383 = vmatprep.subr.mxu0 0.0
    %3384 = vmatpush2.msra.mxu0 0.0
    %3385 = vmatprep.subr.mxu0 0.0
    %3386 = vmatpush2.msra.mxu0 0.0
    %3387 = vmatprep.subr.mxu0 0.0
    %3388 = vmatpush2.msra.mxu0 0.0
    %3389 = vmatprep.subr.mxu0 0.0
    %3390 = vmatpush2.msra.mxu0 0.0
    %3391 = vmatprep.subr.mxu0 0.0
    %3392 = vmatpush2.msra.mxu0 0.0
    %3393 = vmatprep.subr.mxu0 0.0
    %3394 = vmatpush2.msra.mxu0 0.0
    %3395 = vmatprep.subr.mxu0 0.0
    %3396 = vmatpush2.msra.mxu0 0.0
    %3397 = vmatprep.subr.mxu0 0.0
    %3398 = vmatpush2.msra.mxu0 0.0
    %3399 = vmatprep.subr.mxu0 0.0
    %3400 = vmatpush2.msra.mxu0 0.0
    %3401 = vmatprep.subr.mxu0 0.0
    %3402 = vmatpush2.msra.mxu0 0.0
    %3403 = vmatprep.subr.mxu0 0.0
    %3404 = vmatpush2.msra.mxu0 0.0
    %3405 = vmatprep.subr.mxu0 0.0
    %3406 = vmatpush2.msra.mxu0 0.0
    %3407 = vmatprep.subr.mxu0 0.0
    %3408 = vmatpush2.msra.mxu0 0.0
    %3409 = vmatprep.subr.mxu0 0.0
    %3410 = vmatpush2.msra.mxu0 0.0
    %3411 = vmatprep.mubr.f32.mxu0 0.0
    %3412 = vmatmul.mubr.f32.gmra.mxu0 %v3342
    %v3413 = vpop.f32.mrf.mxu0
    %v3414 = vadd.f32 %v3339, %v3413
    %v3415 = vpop.f32.mrf.mxu0
    %3416 = vmatprep.mubr.f32.mxu0 0.0
    %3417 = vmatmul.mubr.f32.gmra.mxu0 %v3345
    %v3418 = vpop.f32.mrf.mxu0
    %v3419 = vadd.f32 %v3339, %v3418
    %v3420 = vpop.f32.mrf.mxu0
    %3421 = vdwg.mxu0
    %v3422 = vadd.f32 %v1916, %v3414
    %v3423 = vadd.f32 %v1917, %v3419
    %s3424 = scalar_lea.vmem %s7, 2
    %v3425 = vld [vmem:[%s3424] sm:$0x3]
    %v3426 = vsel %vm74, %v3422, 0.0
    %3427 = vadd.xlane.f32.xlu0 %v3426
    %v3428 = vpop.xlane.xlu0 %3427
    %v3429 = vsel %vm74, %v3423, 0.0
    %3430 = vadd.xlane.f32.xlu0 %v3429
    %v3431 = vpop.xlane.xlu0 %3430
    %v3432 = vmul.f32 %v3428, %v81
    %v3433 = vmul.f32 %v3431, %v81
    %v3434 = vmul.f32 %v3422, %v3422
    %v3435 = vmul.f32 %v3423, %v3423
    %v3436 = vsel %vm74, %v3434, 0.0
    %3437 = vadd.xlane.f32.xlu0 %v3436
    %v3438 = vpop.xlane.xlu0 %3437
    %v3439 = vsel %vm74, %v3435, 0.0
    %3440 = vadd.xlane.f32.xlu0 %v3439
    %v3441 = vpop.xlane.xlu0 %3440
    %v3442 = vmul.f32 %v3438, %v81
    %v3443 = vmul.f32 %v3441, %v81
    %v3444 = vmul.f32 %v3432, %v3432
    %v3445 = vmul.f32 %v3433, %v3433
    %v3446 = vsub.f32 %v3442, %v3444
    %v3447 = vsub.f32 %v3443, %v3445
    %v3448 = vsub.f32 %v3422, %v3432
    %v3449 = vsub.f32 %v3423, %v3433
    %v3450 = vadd.f32 %v3446, 1e-12
    %v3451 = vadd.f32 %v3447, 1e-12
    %v3452 = vrsqrt.pop %v3450
    %v3453 = vrsqrt.pop %v3451
    %v3454 = vmul.f32 %v3448, %v3452
    %v3455 = vmul.f32 %v3449, %v3453
    %v3456 = vlaneseq
    %v3457 = vshrl.u32 %v3456, 7
    %v3458 = vsub.s32 0, %v3457
    %v3459 = vrot.slane %v3425, %v3458
    %v3460 = vmul.f32 %v3454, %v3459
    %v3461 = vmul.f32 %v3455, %v3459
    %v3462 = vlaneseq
    %v3463 = vshrl.u32 %v3462, 7
    %v3464 = vsub.s32 1, %v3463
    %v3465 = vrot.slane %v3425, %v3464
    %v3466 = vadd.f32 %v3460, %v3465
    %v3467 = vadd.f32 %v3461, %v3465
    %s3468 = scalar_lea.vmem %s8, 32
    %v3469 = vld [vmem:[%s3468] sm:$0xff]
    %v3470 = vld [vmem:[%s3468 + $0x8] sm:$0xff]
    %v3471 = vld [vmem:[%s3468 + $0x10] sm:$0xff]
    %v3472 = vld [vmem:[%s3468 + $0x18] sm:$0xff]
    %s3473 = scalar_lea.vmem %s9, 1
    %v3474 = vld [vmem:[%s3473] sm:$0x1]
    %v3476 = vlaneseq
    %v3477 = vshrl.u32 %v3476, 7
    %v3478 = vsub.s32 0, %v3477
    %v3479 = vrot.slane %v3474, %v3478
    %v3482 = vsel %vm74, %v3466, 0
    %v3485 = vsel %vm74, %v3467, 0
    %3487 = vmatprep.subr.mxu0 0.0
    %3488 = vmatpush1.msra.mxu0 0.0
    %3489 = vmatprep.subr.mxu0 0.0
    %3490 = vmatpush1.msra.mxu0 0.0
    %3491 = vmatprep.subr.mxu0 0.0
    %3492 = vmatpush1.msra.mxu0 0.0
    %3493 = vmatprep.subr.mxu0 0.0
    %3494 = vmatpush1.msra.mxu0 0.0
    %3495 = vmatprep.subr.mxu0 0.0
    %3496 = vmatpush1.msra.mxu0 0.0
    %3497 = vmatprep.subr.mxu0 0.0
    %3498 = vmatpush1.msra.mxu0 0.0
    %3499 = vmatprep.subr.mxu0 0.0
    %3500 = vmatpush1.msra.mxu0 0.0
    %3501 = vmatprep.subr.mxu0 0.0
    %3502 = vmatpush1.msra.mxu0 0.0
    %3503 = vmatprep.subr.mxu0 0.0
    %3504 = vmatpush1.msra.mxu0 0.0
    %3505 = vmatprep.subr.mxu0 0.0
    %3506 = vmatpush1.msra.mxu0 0.0
    %3507 = vmatprep.subr.mxu0 0.0
    %3508 = vmatpush1.msra.mxu0 0.0
    %3509 = vmatprep.subr.mxu0 0.0
    %3510 = vmatpush1.msra.mxu0 0.0
    %3511 = vmatprep.subr.mxu0 0.0
    %3512 = vmatpush1.msra.mxu0 %v3472
    %3513 = vmatprep.subr.mxu0 0.0
    %3514 = vmatpush1.msra.mxu0 %v3471
    %3515 = vmatprep.subr.mxu0 0.0
    %3516 = vmatpush1.msra.mxu0 %v3470
    %3517 = vmatprep.subr.mxu0 0.0
    %3518 = vmatpush1.msra.mxu0 %v3469
    %3519 = vmatprep.subr.mxu0 0.0
    %3520 = vmatpush2.msra.mxu0 0.0
    %3521 = vmatprep.subr.mxu0 0.0
    %3522 = vmatpush2.msra.mxu0 0.0
    %3523 = vmatprep.subr.mxu0 0.0
    %3524 = vmatpush2.msra.mxu0 0.0
    %3525 = vmatprep.subr.mxu0 0.0
    %3526 = vmatpush2.msra.mxu0 0.0
    %3527 = vmatprep.subr.mxu0 0.0
    %3528 = vmatpush2.msra.mxu0 0.0
    %3529 = vmatprep.subr.mxu0 0.0
    %3530 = vmatpush2.msra.mxu0 0.0
    %3531 = vmatprep.subr.mxu0 0.0
    %3532 = vmatpush2.msra.mxu0 0.0
    %3533 = vmatprep.subr.mxu0 0.0
    %3534 = vmatpush2.msra.mxu0 0.0
    %3535 = vmatprep.subr.mxu0 0.0
    %3536 = vmatpush2.msra.mxu0 0.0
    %3537 = vmatprep.subr.mxu0 0.0
    %3538 = vmatpush2.msra.mxu0 0.0
    %3539 = vmatprep.subr.mxu0 0.0
    %3540 = vmatpush2.msra.mxu0 0.0
    %3541 = vmatprep.subr.mxu0 0.0
    %3542 = vmatpush2.msra.mxu0 0.0
    %3543 = vmatprep.subr.mxu0 0.0
    %3544 = vmatpush2.msra.mxu0 0.0
    %3545 = vmatprep.subr.mxu0 0.0
    %3546 = vmatpush2.msra.mxu0 0.0
    %3547 = vmatprep.subr.mxu0 0.0
    %3548 = vmatpush2.msra.mxu0 0.0
    %3549 = vmatprep.subr.mxu0 0.0
    %3550 = vmatpush2.msra.mxu0 0.0
    %3551 = vmatprep.mubr.f32.mxu0 0.0
    %3552 = vmatmul.mubr.f32.gmra.mxu0 %v3482
    %v3553 = vpop.f32.mrf.mxu0
    %v3554 = vadd.f32 %v3479, %v3553
    %v3555 = vpop.f32.mrf.mxu0
    %3556 = vmatprep.mubr.f32.mxu0 0.0
    %3557 = vmatmul.mubr.f32.gmra.mxu0 %v3485
    %v3558 = vpop.f32.mrf.mxu0
    %v3559 = vadd.f32 %v3479, %v3558
    %v3560 = vpop.f32.mrf.mxu0
    %3561 = vdwg.mxu0
    %v3562 = vmul.f32 %v3554, 0.5
    %v3563 = vmul.f32 %v3559, 0.5
    %v3564 = vmul.f32 %v3554, 0.044715
    %v3565 = vmul.f32 %v3559, 0.044715
    %v3566 = vmul.f32 %v3564, %v3554
    %v3567 = vmul.f32 %v3565, %v3559
    %v3568 = vmul.f32 %v3566, %v3554
    %v3569 = vmul.f32 %v3567, %v3559
    %v3570 = vadd.f32 %v3554, %v3568
    %v3571 = vadd.f32 %v3559, %v3569
    %v3572 = vmul.f32 %v3570, 0.7978846
    %v3573 = vmul.f32 %v3571, 0.7978846
    %v3574 = vtanh.pop %v3572
    %v3575 = vtanh.pop %v3573
    %v3576 = vadd.f32 %v3574, 1.0
    %v3577 = vadd.f32 %v3575, 1.0
    %v3578 = vmul.f32 %v3562, %v3576
    %v3579 = vmul.f32 %v3563, %v3577
    %s3580 = scalar_lea.vmem %s10, 64
    %v3581 = vld [vmem:[%s3580] sm:$0xff]
    %v3582 = vld [vmem:[%s3580 + $0x8] sm:$0xff]
    %v3583 = vld [vmem:[%s3580 + $0x10] sm:$0xff]
    %v3584 = vld [vmem:[%s3580 + $0x18] sm:$0xff]
    %v3585 = vld [vmem:[%s3580 + $0x20] sm:$0xff]
    %v3586 = vld [vmem:[%s3580 + $0x28] sm:$0xff]
    %v3587 = vld [vmem:[%s3580 + $0x30] sm:$0xff]
    %v3588 = vld [vmem:[%s3580 + $0x38] sm:$0xff]
    %s3589 = scalar_lea.vmem %s11, 1
    %v3590 = vld [vmem:[%s3589] sm:$0x1]
    %v3592 = vlaneseq
    %v3593 = vshrl.u32 %v3592, 7
    %v3594 = vsub.s32 0, %v3593
    %v3595 = vrot.slane %v3590, %v3594
    %v3598 = vsel %vm1791, %v3578, 0
    %v3601 = vsel %vm1791, %v3579, 0
    %3603 = vmatprep.subr.mxu0 0.0
    %3604 = vmatpush1.msra.mxu0 0.0
    %3605 = vmatprep.subr.mxu0 0.0
    %3606 = vmatpush1.msra.mxu0 0.0
    %3607 = vmatprep.subr.mxu0 0.0
    %3608 = vmatpush1.msra.mxu0 0.0
    %3609 = vmatprep.subr.mxu0 0.0
    %3610 = vmatpush1.msra.mxu0 0.0
    %3611 = vmatprep.subr.mxu0 0.0
    %3612 = vmatpush1.msra.mxu0 0.0
    %3613 = vmatprep.subr.mxu0 0.0
    %3614 = vmatpush1.msra.mxu0 0.0
    %3615 = vmatprep.subr.mxu0 0.0
    %3616 = vmatpush1.msra.mxu0 0.0
    %3617 = vmatprep.subr.mxu0 0.0
    %3618 = vmatpush1.msra.mxu0 0.0
    %3619 = vmatprep.subr.mxu0 0.0
    %3620 = vmatpush1.msra.mxu0 %v3588
    %3621 = vmatprep.subr.mxu0 0.0
    %3622 = vmatpush1.msra.mxu0 %v3587
    %3623 = vmatprep.subr.mxu0 0.0
    %3624 = vmatpush1.msra.mxu0 %v3586
    %3625 = vmatprep.subr.mxu0 0.0
    %3626 = vmatpush1.msra.mxu0 %v3585
    %3627 = vmatprep.subr.mxu0 0.0
    %3628 = vmatpush1.msra.mxu0 %v3584
    %3629 = vmatprep.subr.mxu0 0.0
    %3630 = vmatpush1.msra.mxu0 %v3583
    %3631 = vmatprep.subr.mxu0 0.0
    %3632 = vmatpush1.msra.mxu0 %v3582
    %3633 = vmatprep.subr.mxu0 0.0
    %3634 = vmatpush1.msra.mxu0 %v3581
    %3635 = vmatprep.subr.mxu0 0.0
    %3636 = vmatpush2.msra.mxu0 0.0
    %3637 = vmatprep.subr.mxu0 0.0
    %3638 = vmatpush2.msra.mxu0 0.0
    %3639 = vmatprep.subr.mxu0 0.0
    %3640 = vmatpush2.msra.mxu0 0.0
    %3641 = vmatprep.subr.mxu0 0.0
    %3642 = vmatpush2.msra.mxu0 0.0
    %3643 = vmatprep.subr.mxu0 0.0
    %3644 = vmatpush2.msra.mxu0 0.0
    %3645 = vmatprep.subr.mxu0 0.0
    %3646 = vmatpush2.msra.mxu0 0.0
    %3647 = vmatprep.subr.mxu0 0.0
    %3648 = vmatpush2.msra.mxu0 0.0
    %3649 = vmatprep.subr.mxu0 0.0
    %3650 = vmatpush2.msra.mxu0 0.0
    %3651 = vmatprep.subr.mxu0 0.0
    %3652 = vmatpush2.msra.mxu0 0.0
    %3653 = vmatprep.subr.mxu0 0.0
    %3654 = vmatpush2.msra.mxu0 0.0
    %3655 = vmatprep.subr.mxu0 0.0
    %3656 = vmatpush2.msra.mxu0 0.0
    %3657 = vmatprep.subr.mxu0 0.0
    %3658 = vmatpush2.msra.mxu0 0.0
    %3659 = vmatprep.subr.mxu0 0.0
    %3660 = vmatpush2.msra.mxu0 0.0
    %3661 = vmatprep.subr.mxu0 0.0
    %3662 = vmatpush2.msra.mxu0 0.0
    %3663 = vmatprep.subr.mxu0 0.0
    %3664 = vmatpush2.msra.mxu0 0.0
    %3665 = vmatprep.subr.mxu0 0.0
    %3666 = vmatpush2.msra.mxu0 0.0
    %3667 = vmatprep.mubr.f32.mxu0 0.0
    %3668 = vmatmul.mubr.f32.gmra.mxu0 %v3598
    %v3669 = vpop.f32.mrf.mxu0
    %v3670 = vadd.f32 %v3595, %v3669
    %v3671 = vpop.f32.mrf.mxu0
    %3672 = vmatprep.mubr.f32.mxu0 0.0
    %3673 = vmatmul.mubr.f32.gmra.mxu0 %v3601
    %v3674 = vpop.f32.mrf.mxu0
    %v3675 = vadd.f32 %v3595, %v3674
    %v3676 = vpop.f32.mrf.mxu0
    %3677 = vdwg.mxu0
    %v3678 = vadd.f32 %v3466, %v3670
    %v3679 = vadd.f32 %v3467, %v3675
    %s3680 = scalar_lea.vmem %s12, 2
    %v3681 = vld [vmem:[%s3680] sm:$0x3]
    %v3682 = vsel %vm74, %v3678, 0.0
    %3683 = vadd.xlane.f32.xlu0 %v3682
    %v3684 = vpop.xlane.xlu0 %3683
    %v3685 = vsel %vm74, %v3679, 0.0
    %3686 = vadd.xlane.f32.xlu0 %v3685
    %v3687 = vpop.xlane.xlu0 %3686
    %v3688 = vmul.f32 %v3684, %v81
    %v3689 = vmul.f32 %v3687, %v81
    %v3690 = vmul.f32 %v3678, %v3678
    %v3691 = vmul.f32 %v3679, %v3679
    %v3692 = vsel %vm74, %v3690, 0.0
    %3693 = vadd.xlane.f32.xlu0 %v3692
    %v3694 = vpop.xlane.xlu0 %3693
    %v3695 = vsel %vm74, %v3691, 0.0
    %3696 = vadd.xlane.f32.xlu0 %v3695
    %v3697 = vpop.xlane.xlu0 %3696
    %v3698 = vmul.f32 %v3694, %v81
    %v3699 = vmul.f32 %v3697, %v81
    %v3700 = vmul.f32 %v3688, %v3688
    %v3701 = vmul.f32 %v3689, %v3689
    %v3702 = vsub.f32 %v3698, %v3700
    %v3703 = vsub.f32 %v3699, %v3701
    %v3704 = vsub.f32 %v3678, %v3688
    %v3705 = vsub.f32 %v3679, %v3689
    %v3706 = vadd.f32 %v3702, 1e-12
    %v3707 = vadd.f32 %v3703, 1e-12
    %v3708 = vrsqrt.pop %v3706
    %v3709 = vrsqrt.pop %v3707
    %v3710 = vmul.f32 %v3704, %v3708
    %v3711 = vmul.f32 %v3705, %v3709
    %v3712 = vlaneseq
    %v3713 = vshrl.u32 %v3712, 7
    %v3714 = vsub.s32 0, %v3713
    %v3715 = vrot.slane %v3681, %v3714
    %v3716 = vmul.f32 %v3710, %v3715
    %v3717 = vmul.f32 %v3711, %v3715
    %v3718 = vlaneseq
    %v3719 = vshrl.u32 %v3718, 7
    %v3720 = vsub.s32 1, %v3719
    %v3721 = vrot.slane %v3681, %v3720
    %v3722 = vadd.f32 %v3716, %v3721
    %v3723 = vadd.f32 %v3717, %v3721
    %v3724 = vld [vmem:[%s13] sm:$0xff]
    %v3725 = vld [vmem:[%s13 + $0x8] sm:$0xff]
    %v3726 = vld [vmem:[%s13 + $0x10] sm:$0xff]
    %v3727 = vld [vmem:[%s13 + $0x18] sm:$0xff]
    %v3728 = vld [vmem:[%s14] sm:$0x1]
    %v3730 = vlaneseq
    %v3731 = vshrl.u32 %v3730, 7
    %v3732 = vsub.s32 0, %v3731
    %v3733 = vrot.slane %v3728, %v3732
    %v3736 = vsel %vm74, %v3722, 0
    %v3739 = vsel %vm74, %v3723, 0
    %3741 = vmatprep.subr.mxu0 0.0
    %3742 = vmatpush1.msra.mxu0 0.0
    %3743 = vmatprep.subr.mxu0 0.0
    %3744 = vmatpush1.msra.mxu0 0.0
    %3745 = vmatprep.subr.mxu0 0.0
    %3746 = vmatpush1.msra.mxu0 0.0
    %3747 = vmatprep.subr.mxu0 0.0
    %3748 = vmatpush1.msra.mxu0 0.0
    %3749 = vmatprep.subr.mxu0 0.0
    %3750 = vmatpush1.msra.mxu0 0.0
    %3751 = vmatprep.subr.mxu0 0.0
    %3752 = vmatpush1.msra.mxu0 0.0
    %3753 = vmatprep.subr.mxu0 0.0
    %3754 = vmatpush1.msra.mxu0 0.0
    %3755 = vmatprep.subr.mxu0 0.0
    %3756 = vmatpush1.msra.mxu0 0.0
    %3757 = vmatprep.subr.mxu0 0.0
    %3758 = vmatpush1.msra.mxu0 0.0
    %3759 = vmatprep.subr.mxu0 0.0
    %3760 = vmatpush1.msra.mxu0 0.0
    %3761 = vmatprep.subr.mxu0 0.0
    %3762 = vmatpush1.msra.mxu0 0.0
    %3763 = vmatprep.subr.mxu0 0.0
    %3764 = vmatpush1.msra.mxu0 0.0
    %3765 = vmatprep.subr.mxu0 0.0
    %3766 = vmatpush1.msra.mxu0 %v3727
    %3767 = vmatprep.subr.mxu0 0.0
    %3768 = vmatpush1.msra.mxu0 %v3726
    %3769 = vmatprep.subr.mxu0 0.0
    %3770 = vmatpush1.msra.mxu0 %v3725
    %3771 = vmatprep.subr.mxu0 0.0
    %3772 = vmatpush1.msra.mxu0 %v3724
    %3773 = vmatprep.subr.mxu0 0.0
    %3774 = vmatpush2.msra.mxu0 0.0
    %3775 = vmatprep.subr.mxu0 0.0
    %3776 = vmatpush2.msra.mxu0 0.0
    %3777 = vmatprep.subr.mxu0 0.0
    %3778 = vmatpush2.msra.mxu0 0.0
    %3779 = vmatprep.subr.mxu0 0.0
    %3780 = vmatpush2.msra.mxu0 0.0
    %3781 = vmatprep.subr.mxu0 0.0
    %3782 = vmatpush2.msra.mxu0 0.0
    %3783 = vmatprep.subr.mxu0 0.0
    %3784 = vmatpush2.msra.mxu0 0.0
    %3785 = vmatprep.subr.mxu0 0.0
    %3786 = vmatpush2.msra.mxu0 0.0
    %3787 = vmatprep.subr.mxu0 0.0
    %3788 = vmatpush2.msra.mxu0 0.0
    %3789 = vmatprep.subr.mxu0 0.0
    %3790 = vmatpush2.msra.mxu0 0.0
    %3791 = vmatprep.subr.mxu0 0.0
    %3792 = vmatpush2.msra.mxu0 0.0
    %3793 = vmatprep.subr.mxu0 0.0
    %3794 = vmatpush2.msra.mxu0 0.0
    %3795 = vmatprep.subr.mxu0 0.0
    %3796 = vmatpush2.msra.mxu0 0.0
    %3797 = vmatprep.subr.mxu0 0.0
    %3798 = vmatpush2.msra.mxu0 0.0
    %3799 = vmatprep.subr.mxu0 0.0
    %3800 = vmatpush2.msra.mxu0 0.0
    %3801 = vmatprep.subr.mxu0 0.0
    %3802 = vmatpush2.msra.mxu0 0.0
    %3803 = vmatprep.subr.mxu0 0.0
    %3804 = vmatpush2.msra.mxu0 0.0
    %3805 = vmatprep.mubr.f32.mxu0 0.0
    %3806 = vmatmul.mubr.f32.gmra.mxu0 %v3736
    %v3807 = vpop.f32.mrf.mxu0
    %v3808 = vadd.f32 %v3733, %v3807
    %v3809 = vpop.f32.mrf.mxu0
    %3810 = vmatprep.mubr.f32.mxu0 0.0
    %3811 = vmatmul.mubr.f32.gmra.mxu0 %v3739
    %v3812 = vpop.f32.mrf.mxu0
    %v3813 = vadd.f32 %v3733, %v3812
    %v3814 = vpop.f32.mrf.mxu0
    %3815 = vdwg.mxu0
    %v3816 = vmax.f32 %v3808, 0.0
    %v3817 = vmax.f32 %v3813, 0.0
    %v3818 = vld [vmem:[%s15] sm:$0xff]
    %v3819 = vld [vmem:[%s15 + $0x8] sm:$0xff]
    %v3820 = vld [vmem:[%s15 + $0x10] sm:$0xff]
    %v3821 = vld [vmem:[%s15 + $0x18] sm:$0xff]
    %v3822 = vld [vmem:[%s16] sm:$0x1]
    %v3824 = vlaneseq
    %v3825 = vshrl.u32 %v3824, 7
    %v3826 = vsub.s32 0, %v3825
    %v3827 = vrot.slane %v3822, %v3826
    %v3830 = vsel %vm74, %v3816, 0
    %v3833 = vsel %vm74, %v3817, 0
    %3835 = vmatprep.subr.mxu0 0.0
    %3836 = vmatpush1.msra.mxu0 0.0
    %3837 = vmatprep.subr.mxu0 0.0
    %3838 = vmatpush1.msra.mxu0 0.0
    %3839 = vmatprep.subr.mxu0 0.0
    %3840 = vmatpush1.msra.mxu0 0.0
    %3841 = vmatprep.subr.mxu0 0.0
    %3842 = vmatpush1.msra.mxu0 0.0
    %3843 = vmatprep.subr.mxu0 0.0
    %3844 = vmatpush1.msra.mxu0 0.0
    %3845 = vmatprep.subr.mxu0 0.0
    %3846 = vmatpush1.msra.mxu0 0.0
    %3847 = vmatprep.subr.mxu0 0.0
    %3848 = vmatpush1.msra.mxu0 0.0
    %3849 = vmatprep.subr.mxu0 0.0
    %3850 = vmatpush1.msra.mxu0 0.0
    %3851 = vmatprep.subr.mxu0 0.0
    %3852 = vmatpush1.msra.mxu0 0.0
    %3853 = vmatprep.subr.mxu0 0.0
    %3854 = vmatpush1.msra.mxu0 0.0
    %3855 = vmatprep.subr.mxu0 0.0
    %3856 = vmatpush1.msra.mxu0 0.0
    %3857 = vmatprep.subr.mxu0 0.0
    %3858 = vmatpush1.msra.mxu0 0.0
    %3859 = vmatprep.subr.mxu0 0.0
    %3860 = vmatpush1.msra.mxu0 %v3821
    %3861 = vmatprep.subr.mxu0 0.0
    %3862 = vmatpush1.msra.mxu0 %v3820
    %3863 = vmatprep.subr.mxu0 0.0
    %3864 = vmatpush1.msra.mxu0 %v3819
    %3865 = vmatprep.subr.mxu0 0.0
    %3866 = vmatpush1.msra.mxu0 %v3818
    %3867 = vmatprep.subr.mxu0 0.0
    %3868 = vmatpush2.msra.mxu0 0.0
    %3869 = vmatprep.subr.mxu0 0.0
    %3870 = vmatpush2.msra.mxu0 0.0
    %3871 = vmatprep.subr.mxu0 0.0
    %3872 = vmatpush2.msra.mxu0 0.0
    %3873 = vmatprep.subr.mxu0 0.0
    %3874 = vmatpush2.msra.mxu0 0.0
    %3875 = vmatprep.subr.mxu0 0.0
    %3876 = vmatpush2.msra.mxu0 0.0
    %3877 = vmatprep.subr.mxu0 0.0
    %3878 = vmatpush2.msra.mxu0 0.0
    %3879 = vmatprep.subr.mxu0 0.0
    %3880 = vmatpush2.msra.mxu0 0.0
    %3881 = vmatprep.subr.mxu0 0.0
    %3882 = vmatpush2.msra.mxu0 0.0
    %3883 = vmatprep.subr.mxu0 0.0
    %3884 = vmatpush2.msra.mxu0 0.0
    %3885 = vmatprep.subr.mxu0 0.0
    %3886 = vmatpush2.msra.mxu0 0.0
    %3887 = vmatprep.subr.mxu0 0.0
    %3888 = vmatpush2.msra.mxu0 0.0
    %3889 = vmatprep.subr.mxu0 0.0
    %3890 = vmatpush2.msra.mxu0 0.0
    %3891 = vmatprep.subr.mxu0 0.0
    %3892 = vmatpush2.msra.mxu0 0.0
    %3893 = vmatprep.subr.mxu0 0.0
    %3894 = vmatpush2.msra.mxu0 0.0
    %3895 = vmatprep.subr.mxu0 0.0
    %3896 = vmatpush2.msra.mxu0 0.0
    %3897 = vmatprep.subr.mxu0 0.0
    %3898 = vmatpush2.msra.mxu0 0.0
    %3899 = vmatprep.mubr.f32.mxu0 0.0
    %3900 = vmatmul.mubr.f32.gmra.mxu0 %v3830
    %v3901 = vpop.f32.mrf.mxu0
    %v3902 = vadd.f32 %v3827, %v3901
    %v3903 = vpop.f32.mrf.mxu0
    %3904 = vmatprep.mubr.f32.mxu0 0.0
    %3905 = vmatmul.mubr.f32.gmra.mxu0 %v3833
    %v3906 = vpop.f32.mrf.mxu0
    %v3907 = vadd.f32 %v3827, %v3906
    %v3908 = vpop.f32.mrf.mxu0
    %3909 = vdwg.mxu0
    %3910 = vst [vmem:[#allocation2] sm:$0xff] %v3902
    %3911 = vst [vmem:[#allocation2 + $0x8] sm:$0xff] %v3907
    // Predicated region
    $region70: #{transformer_chatbot_forward.1} parent=1 // pred_check
      _
    $region71: #{transformer_chatbot_forward.1} parent=1 // pred_check_branch
      %3913 = sbr.rel (0) target = $region73
    $region72: #{transformer_chatbot_forward.1} parent=1 // pred_region
      %s3915 = ssub.s32 256, 256
      %3916 = vsyncadd [#allocation3], %s3915
      %s3917 = sshll.u32 [#allocation2], 4
      %s3918 = int_to_ptr.vmem [resolvable:$true] %s3917
      %3923 = dma.vmem_to_hbm [thread:$0]  %s3918, 256, %s17, [#allocation3], 128, 128, 8
    $region73: #{transformer_chatbot_forward.1} parent=1 // pred_fallthru
      _
    // Predicated region
    $region74: #{transformer_chatbot_forward.1} parent=1 // pred_check
      _
    $region75: #{transformer_chatbot_forward.1} parent=1 // pred_check_branch
      %3925 = sbr.rel (0) target = $region77
    $region76: #{transformer_chatbot_forward.1} parent=1 // pred_region
      %3926 = dma.done [#allocation3], 256
    $region77: #{transformer_chatbot_forward.1} parent=1 // pred_fallthru
      _
    %3927 = vsyncpa [#allocation3], 1

</llo_original>
